<compile_context>
chip_gen: v7x
topology: tpu7x:2x2x1
jax: 0.10.0
libtpu: 0.0.40
codegen_flags: <defaults>
</compile_context>

<pallas_src>
import jax
import jax.numpy as jnp
from jax.experimental import pallas as pl
from jax.experimental.pallas import tpu as pltpu

_HP = jax.lax.Precision.HIGHEST

D_IN = 768


# --------------------------------------------------------------------------
# helpers
# --------------------------------------------------------------------------
def _round_up(x, m):
    return (x + m - 1) // m * m


def _select_tile(B, tm):
    """Pick the batch tile.

    - B <= 8: single full-extent block (block dim == array dim is legal).
    - otherwise: clamp tm to a multiple of 8 covering B, then cap it so the
      grid has at least 2 steps (lets "parallel" shard the batch axis across
      both v7x TensorCores; costs <1 us of extra per-step overhead on the
      single-TC v5e/v6e).
    """
    if B <= 8:
        return B
    tm = max(8, min(_round_up(tm, 8), _round_up(B, 8)))
    half = max(8, _round_up(pl.cdiv(B, 2), 8))
    return min(tm, half)


def _full_spec(shape):
    # Whole-array block with a constant block index: stays VMEM-resident.
    return pl.BlockSpec(shape, lambda i: (0,) * len(shape))


_COMPILER_PARAMS = pltpu.CompilerParams(
    dimension_semantics=("parallel",),   # batch tiles are independent (megacore)
    vmem_limit_bytes=32 << 20,           # safe headroom on v7x's 64 MiB physical VMEM
)


# --------------------------------------------------------------------------
# Kernel 1 (primary): fully folded affine map 768 -> 1.
# One N=1 MXU pass per tile; ~3 KB of weights; HBM-bound on the embed stream.
# --------------------------------------------------------------------------
def _folded_kernel(x_ref, w_ref, b_ref, o_ref):
    # x: (tm, 768) f32, w: (768, 1) f32, b: (1, 1) f32
    o = jnp.dot(x_ref[...], w_ref[...],
                preferred_element_type=jnp.float32, precision=_HP) + b_ref[...]
    o_ref[...] = o.astype(o_ref.dtype)


def fold_params(params):
    """Fold the 5 Linear layers into one affine map (done once, off the hot path)."""
    (w1, b1), (w2, b2), (w3, b3), (w4, b4), (w5, b5) = params
    dot = lambda a, b: jnp.dot(a, b, precision=_HP)
    W = dot(dot(dot(dot(w1, w2), w3), w4), w5)                         # (768, 1)
    b = dot(dot(dot(dot(b1, w2) + b2, w3) + b3, w4) + b4, w5) + b5     # (1, 1)
    return W, b                                                        # column, scalar


def mlp_forward_folded(embed, w_col, b_fold, *, tm=1024):
    # TODO(synk): if the upstream producer can emit embed in bf16, pass it
    # through unchanged (halves HBM traffic); do NOT add a wrapper-side cast.
    B = embed.shape[0]
    tm = _select_tile(B, tm)
    return pl.pallas_call(
        _folded_kernel,
        out_shape=jax.ShapeDtypeStruct((B, 1), jnp.float32),
        grid_spec=pltpu.PrefetchScalarGridSpec(
            num_scalar_prefetch=0,
            grid=(pl.cdiv(B, tm),),
            in_specs=[
                pl.BlockSpec((tm, D_IN), lambda i: (i, 0)),  # embed tile (ragged tail masked)
                _full_spec((D_IN, 1)),                       # folded weight column
                _full_spec((1, 1)),                          # folded bias
            ],
            out_specs=pl.BlockSpec((tm, 1), lambda i: (i, 0)),
        ),
        compiler_params=_COMPILER_PARAMS,
    )(embed, w_col, b_fold)


# --------------------------------------------------------------------------
# Kernel 2 (layer-faithful reference): bf16 MXU for the two big layers
# (768->1024, 1024->128) with f32 accumulation; layers 3+4+5 (128->64->16->1,
# all affine) pre-fused offline to a single 128->1 column evaluated on the
# VPU/XLU.  Prefer mlp_forward_folded in production (it is strictly cheaper;
# on v5e this path is MXU-bound).
# --------------------------------------------------------------------------
def _layers_kernel(x_ref, w1_ref, b1_ref, w2_ref, b2_ref, w345_ref, b345_ref, o_ref):
    x = x_ref[...]                                                   # (tm, 768) f32

    h = jnp.dot(x.astype(jnp.bfloat16), w1_ref[...],
                preferred_element_type=jnp.float32) + b1_ref[...]    # (tm, 1024)
    # Dropout(0.2) -> identity at inference.
    h = jnp.dot(h.astype(jnp.bfloat16), w2_ref[...],
                preferred_element_type=jnp.float32) + b2_ref[...]    # (tm, 128)
    # Dropout(0.2)/(0.1) -> identity at inference.

    # Layers 3+4+5 fused offline to one 128->1 column; VPU multiply +
    # XLU row-reduce instead of three near-empty MXU passes (N=64/16/1).
    o = jnp.sum(h * w345_ref[...], axis=-1, keepdims=True) + b345_ref[...]
    o_ref[...] = o.astype(o_ref.dtype)


def prep_layer_params(params):
    """bf16 weights for the two MXU layers; fuse W3@W4@W5 and its bias chain (f32)."""
    (w1, b1), (w2, b2), (w3, b3), (w4, b4), (w5, b5) = params
    dot = lambda a, b: jnp.dot(a, b, precision=_HP)
    w345 = dot(dot(w3, w4), w5)                       # (128, 1)
    b345 = dot(dot(b3, w4) + b4, w5) + b5             # (1, 1)
    return (w1.astype(jnp.bfloat16), b1,
            w2.astype(jnp.bfloat16), b2,
            w345.T,                                    # (1, 128) f32, lane-dense row
            b345)


def mlp_forward_layers(embed, layer_params, *, tm=512):
    w1, b1, w2, b2, w345_row, b345 = layer_params
    B = embed.shape[0]
    tm = _select_tile(B, tm)
    return pl.pallas_call(
        _layers_kernel,
        out_shape=jax.ShapeDtypeStruct((B, 1), jnp.float32),
        grid_spec=pltpu.PrefetchScalarGridSpec(
            num_scalar_prefetch=0,
            grid=(pl.cdiv(B, tm),),
            in_specs=[
                pl.BlockSpec((tm, D_IN), lambda i: (i, 0)),   # embed tile
                _full_spec(w1.shape), _full_spec(b1.shape),
                _full_spec(w2.shape), _full_spec(b2.shape),
                _full_spec(w345_row.shape), _full_spec(b345.shape),
            ],
            out_specs=pl.BlockSpec((tm, 1), lambda i: (i, 0)),
        ),
        compiler_params=_COMPILER_PARAMS,
    )(embed, w1, b1, w2, b2, w345_row, b345)


# --------------------------------------------------------------------------
# Parameter init (PyTorch Linear-style uniform +-1/sqrt(fan_in)), stored as
# [in, out] with 2-D biases [1, out], and pure-JAX references.
# --------------------------------------------------------------------------
def init_params(key):
    dims = [768, 1024, 128, 64, 16, 1]
    params = []
    for fan_in, fan_out in zip(dims[:-1], dims[1:]):
        key, kw, kb = jax.random.split(key, 3)
        bound = 1.0 / jnp.sqrt(float(fan_in))
        w = jax.random.uniform(kw, (fan_in, fan_out), jnp.float32, -bound, bound)
        b = jax.random.uniform(kb, (1, fan_out), jnp.float32, -bound, bound)
        params.append((w, b))
    return params


def mlp_reference(embed, params):
    """Exact f32 layer-by-layer forward (dropout = identity at eval)."""
    h = embed
    for w, b in params:
        h = jnp.dot(h, w, precision=_HP) + b
    return h


def mlp_reference_bf16(embed, params):
    """Mirrors the layered kernel's numerics: bf16 MXU operands, f32 accumulate,
    f32 bias adds, fused f32 tail for layers 3+4+5."""
    (w1, b1), (w2, b2), (w3, b3), (w4, b4), (w5, b5) = params

    def qdot(x, w):
        return jnp.dot(x.astype(jnp.bfloat16).astype(jnp.float32),
                       w.astype(jnp.bfloat16).astype(jnp.float32),
                       precision=_HP)

    h = qdot(embed, w1) + b1
    h = qdot(h, w2) + b2
    dot = lambda a, b: jnp.dot(a, b, precision=_HP)
    w345 = dot(dot(w3, w4), w5)
    b345 = dot(dot(b3, w4) + b4, w5) + b5
    return dot(h, w345) + b345


# --------------------------------------------------------------------------
if __name__ == "__main__":
    key = jax.random.PRNGKey(0)
    kparam, kx = jax.random.split(key)

    params = init_params(kparam)
    w_col, b_fold = fold_params(params)
    layer_params = prep_layer_params(params)

    # Batch sizes: 300 exercises the ragged last tile (no wrapper-side pad copy)
    # with grid=(2,); 8 exercises the tiny single-block path.
    for B in (300, 8):
        embed = jax.random.normal(kx, (B, D_IN), jnp.float32)
        ref = mlp_reference(embed, params)

        # --- primary path: folded single-affine kernel ---------------------
        out_folded = jax.block_until_ready(mlp_forward_folded(embed, w_col, b_fold))
        assert out_folded.shape == (B, 1)
        assert jnp.allclose(out_folded, ref, atol=1e-3, rtol=1e-3), \
            f"folded kernel mismatch vs f32 reference (B={B})"

        # --- layer-faithful path: bf16 MXU chain ----------------------------
        out_layers = jax.block_until_ready(mlp_forward_layers(embed, layer_params))
        assert out_layers.shape == (B, 1)
        ref_q = mlp_reference_bf16(embed, params)
        assert jnp.allclose(out_layers, ref_q, atol=1e-3, rtol=1e-3), \
            f"layered kernel mismatch vs bf16-mirrored reference (B={B})"
        # sanity: bf16 weight quantization stays close to the exact f32 forward
        assert jnp.allclose(out_layers, ref, atol=1e-1, rtol=1e-1), \
            f"layered kernel drifted too far from f32 reference (B={B})"

    print("KERNEL_OK")
</pallas_src>

<mosaic_0001>
module attributes {stable_mosaic.version = 11 : i64} {
  func.func @_folded_kernel(%arg0: i32, %arg1: memref<152x768xf32, #tpu.memory_space<vmem>>, %arg2: memref<768x1xf32, #tpu.memory_space<vmem>>, %arg3: memref<1x1xf32, #tpu.memory_space<vmem>>, %arg4: memref<152x1xf32, #tpu.memory_space<vmem>>) attributes {dimension_semantics = [#tpu.dimension_semantics<parallel>], iteration_bounds = array<i64: 2>, scalar_prefetch = 0 : i64, scratch_operands = 0 : i64, tpu.core_type = #tpu.core_type<tc>, window_params = [{transform_indices = @transform_0, window_bounds = array<i64: 152, 768>}, {pipeline_mode = #tpu.pipeline_mode<synchronous>, transform_indices = @transform_1, window_bounds = array<i64: 768, 1>}, {pipeline_mode = #tpu.pipeline_mode<synchronous>, transform_indices = @transform_2, window_bounds = array<i64: 1, 1>}, {transform_indices = @transform_3, window_bounds = array<i64: 152, 1>}]} {
    %c0 = arith.constant 0 : index
    %c0_0 = arith.constant 0 : index
    %0 = vector.load %arg1[%c0, %c0_0] : memref<152x768xf32, #tpu.memory_space<vmem>>, vector<152x768xf32>
    %c0_1 = arith.constant 0 : index
    %c0_2 = arith.constant 0 : index
    %1 = vector.load %arg2[%c0_1, %c0_2] : memref<768x1xf32, #tpu.memory_space<vmem>>, vector<768x1xf32>
    %cst = arith.constant dense<0.000000e+00> : vector<152x1xf32>
    %2 = tpu.matmul %0, %1, %cst {dimension_numbers = #tpu.dot_dimension_numbers<[1], [0], [0], [1], [0, 0, 1, 1], [], []>, precision = #tpu.contract_precision<fp32>} : vector<152x768xf32>, vector<768x1xf32>, vector<152x1xf32> -> vector<152x1xf32>
    %c0_3 = arith.constant 0 : index
    %c0_4 = arith.constant 0 : index
    %3 = vector.load %arg3[%c0_3, %c0_4] : memref<1x1xf32, #tpu.memory_space<vmem>>, vector<1x1xf32>
    %4 = vector.broadcast %3 : vector<1x1xf32> to vector<152x1xf32>
    %5 = arith.addf %2, %4 : vector<152x1xf32>
    %c0_5 = arith.constant 0 : index
    %c0_6 = arith.constant 0 : index
    %6 = vector.load %arg4[%c0_5, %c0_6] : memref<152x1xf32, #tpu.memory_space<vmem>>, vector<152x1xf32>
    tpu.vector_store %arg4[%c0_5, %c0_6], %5 {strides = array<i32>} : memref<152x1xf32, #tpu.memory_space<vmem>>, vector<152x1xf32>,
    return
  }
  func.func @transform_0(%arg0: i32) -> (i32, i32) {
    %c0_i32 = arith.constant 0 : i32
    %c0_i32_0 = arith.constant 0 : i32
    return %arg0, %c0_i32 : i32, i32
  }
  func.func @transform_1(%arg0: i32) -> (i32, i32) {
    %c0_i32 = arith.constant 0 : i32
    %c0_i32_0 = arith.constant 0 : i32
    %c0_i32_1 = arith.constant 0 : i32
    return %c0_i32, %c0_i32_0 : i32, i32
  }
  func.func @transform_2(%arg0: i32) -> (i32, i32) {
    %c0_i32 = arith.constant 0 : i32
    %c0_i32_0 = arith.constant 0 : i32
    %c0_i32_1 = arith.constant 0 : i32
    return %c0_i32, %c0_i32_0 : i32, i32
  }
  func.func @transform_3(%arg0: i32) -> (i32, i32) {
    %c0_i32 = arith.constant 0 : i32
    %c0_i32_0 = arith.constant 0 : i32
    return %arg0, %c0_i32 : i32, i32
  }
}

</mosaic_0001>

<llo_original>
// kernel: tpu_custom_call.1
$region0: #{tpu_custom_call.1}
  #allocation0 [shape = 'u32[]', space=smem, size = 0x4, offset = 0x4, fixed_abs, tag = 'smem constant byte address 0x4 - core index']
  #allocation1 [shape = 'u32[144,128]{1,0:T(1,128)}', space=vmem, size = 0x12000, scoped, tag = 'internal scratch']
  #allocation2 [shape = 'f32[1,1]{1,0:T(1,128)S(1)}', space=vmem, size = 0x200, scoped, tag = 'scoped memory for tpu_custom_call.1']
  %s0 = inlined_call_operand.hbm [shape: f32[300,768], index: 0, kind: input, shape index: {}]
  %s1 = inlined_call_operand.vmem [shape: f32[768,1], index: 1, kind: input, shape index: {}]
  %s2 = inlined_call_operand.<no memory space> [shape: f32[1,1], index: 2, kind: input, shape index: {}]
  %s3 = inlined_call_operand.vmem [shape: f32[300,1], index: 3, kind: output, shape index: {}]
  %s4 = sld [smem:[#allocation0]]
  $region49: #{tpu_custom_call.1} parent=0
    _
  %s6 = ssub.s32 1, %s4
  %s7 = scalar_select 0, %s6, %s4
  %v8 = vstv %s2
  %9 = vst [vmem:[#allocation2] sm:$0x1] %v8
  $region1: #{tpu_custom_call.1} parent=0
    #allocation3 [shape = 'u8[933888]{0}', space=vmem, size = 0xe4000, scoped, tag = 'input window, operand 0']
    #allocation4 [shape = 's32[2]{0}', space=sflag, size = 0x8, scoped, tag = 'scoped memory for tpu_custom_call.1']
    %10 = vsyncpa [#allocation4], 0
    %s11 = scalar_lea.sflag [#allocation4], 1
    %12 = vsyncpa %s11, 0
    loop: start=0, step=1, limit=4
    $region2: #{tpu_custom_call.1} parent=1 // loop_pre_header
      _
    $region3: #{tpu_custom_call.1} parent=1 // loop_header
      %s14 = sphi 0, %s18
      %p15 = scmp.ge.s32.totalorder %s14, 4
      %s24 = sphi 0, %s26
      %s27 = sphi 0, %s24
      %s28 = sphi 0, %s27
      %s44 = sphi 0, %s28
      %s48 = sphi 0, %s48
      %s50 = sphi 0, %s48
      %s51 = sphi 0, %s50
      %s65 = sphi 0, %s51
      %s69 = sphi 0, %s69
      %s71 = sphi 0, %s69
      %s72 = sphi 0, %s71
      %s86 = sphi 0, %s72
      %s92 = sphi 0, %s94
      %s95 = sphi 0, %s92
      %s96 = sphi 0, %s95
      %s112 = sphi 0, %s96
    $region4: #{tpu_custom_call.1} parent=1 // loop_header_branch
      %17 = sbr.rel (%p15) target = $region8
    $region5: #{tpu_custom_call.1} parent=1 // loop_body
      %s19 = ssub.s32 %s14, 1
      %s20 = ssub.s32 %s14, 2
      %s21 = sadd.s32 %s14, 1
      %s22 = ssub.s32 %s14, %s21
      %p23 = scmp.eq.s32.totalorder %s22, 0
      %s25 = sadd.s32 %s24, 1
      %s26 = scalar_select %p23, %s24, %s25
      %p29 = pneg %p23
      %p30 = scmp.eq.s32.totalorder %s14, 1
      %p31 = por %p29, %p30
      %p32 = scmp.ne.s32.totalorder %s24, %s27
      %p33 = scmp.eq.s32.totalorder %s14, 0
      %p34 = por %p32, %p33
      %p35 = scmp.ne.s32.totalorder %s24, %s27
      %p36 = scmp.eq.s32.totalorder %s19, 1
      %p37 = por %p35, %p36
      %p38 = scmp.ne.s32.totalorder %s27, %s28
      %p39 = scmp.eq.s32.totalorder %s19, 0
      %p40 = por %p38, %p39
      %p41 = scmp.ne.s32.totalorder %s27, %s28
      %p42 = scmp.eq.s32.totalorder %s20, 1
      %p43 = por %p41, %p42
      %p45 = scmp.ne.s32.totalorder %s28, %s44
      %p46 = scmp.eq.s32.totalorder %s20, 0
      %p47 = por %p45, %p46
      %s49 = sadd.s32 %s48, 1
      %p52 = scmp.eq.s32.totalorder %s14, 1
      %p53 = scmp.ne.s32.totalorder %s48, %s50
      %p54 = scmp.eq.s32.totalorder %s14, 0
      %p55 = por %p53, %p54
      %p56 = scmp.ne.s32.totalorder %s48, %s50
      %p57 = scmp.eq.s32.totalorder %s19, 1
      %p58 = por %p56, %p57
      %p59 = scmp.ne.s32.totalorder %s50, %s51
      %p60 = scmp.eq.s32.totalorder %s19, 0
      %p61 = por %p59, %p60
      %p62 = scmp.ne.s32.totalorder %s50, %s51
      %p63 = scmp.eq.s32.totalorder %s20, 1
      %p64 = por %p62, %p63
      %p66 = scmp.ne.s32.totalorder %s51, %s65
      %p67 = scmp.eq.s32.totalorder %s20, 0
      %p68 = por %p66, %p67
      %s70 = sadd.s32 %s69, 1
      %p73 = scmp.eq.s32.totalorder %s14, 1
      %p74 = scmp.ne.s32.totalorder %s69, %s71
      %p75 = scmp.eq.s32.totalorder %s14, 0
      %p76 = por %p74, %p75
      %p77 = scmp.ne.s32.totalorder %s69, %s71
      %p78 = scmp.eq.s32.totalorder %s19, 1
      %p79 = por %p77, %p78
      %p80 = scmp.ne.s32.totalorder %s71, %s72
      %p81 = scmp.eq.s32.totalorder %s19, 0
      %p82 = por %p80, %p81
      %p83 = scmp.ne.s32.totalorder %s71, %s72
      %p84 = scmp.eq.s32.totalorder %s20, 1
      %p85 = por %p83, %p84
      %p87 = scmp.ne.s32.totalorder %s72, %s86
      %p88 = scmp.eq.s32.totalorder %s20, 0
      %p89 = por %p87, %p88
      %s90 = ssub.s32 %s14, %s21
      %p91 = scmp.eq.s32.totalorder %s90, 0
      %s93 = sadd.s32 %s92, 1
      %s94 = scalar_select %p91, %s92, %s93
      %p97 = pneg %p91
      %p98 = scmp.eq.s32.totalorder %s14, 1
      %p99 = por %p97, %p98
      %p100 = scmp.ne.s32.totalorder %s92, %s95
      %p101 = scmp.eq.s32.totalorder %s14, 0
      %p102 = por %p100, %p101
      %p103 = scmp.ne.s32.totalorder %s92, %s95
      %p104 = scmp.eq.s32.totalorder %s19, 1
      %p105 = por %p103, %p104
      %p106 = scmp.ne.s32.totalorder %s95, %s96
      %p107 = scmp.eq.s32.totalorder %s19, 0
      %p108 = por %p106, %p107
      %p109 = scmp.ne.s32.totalorder %s95, %s96
      %p110 = scmp.eq.s32.totalorder %s20, 1
      %p111 = por %p109, %p110
      %p113 = scmp.ne.s32.totalorder %s96, %s112
      %p114 = scmp.eq.s32.totalorder %s20, 0
      %p115 = por %p113, %p114
      %p116 = scmp.le.s32.totalorder 1, %s14
      %p117 = scmp.lt.s32.totalorder %s14, 3
      %p118 = pnand %p116, %p117
      %p119 = pneg %p118
      // Predicated region
      $region9: #{tpu_custom_call.1} parent=5 // pred_check
        _
      $region10: #{tpu_custom_call.1} parent=5 // pred_check_branch
        %121 = sbr.rel (%p118) target = $region12
      $region11: #{tpu_custom_call.1} parent=5 // pred_region
        %s122 = ssub.s32 %s14, 1
        // Predicated region
        $region13: #{tpu_custom_call.1} parent=11 // pred_check
          %p123 = pneg %p61
        $region14: #{tpu_custom_call.1} parent=11 // pred_check_branch
          %125 = sbr.rel (%p123) target = $region16
        $region15: #{tpu_custom_call.1} parent=11 // pred_region
          _
        $region16: #{tpu_custom_call.1} parent=11 // pred_fallthru
          _
        // Predicated region
        $region17: #{tpu_custom_call.1} parent=11 // pred_check
          %p126 = pneg %p82
        $region18: #{tpu_custom_call.1} parent=11 // pred_check_branch
          %128 = sbr.rel (%p126) target = $region20
        $region19: #{tpu_custom_call.1} parent=11 // pred_region
          _
        $region20: #{tpu_custom_call.1} parent=11 // pred_fallthru
          _
      $region12: #{tpu_custom_call.1} parent=5 // pred_fallthru
        _
      %p129 = scmp.lt.s32.totalorder %s14, 2
      // Predicated region
      $region21: #{tpu_custom_call.1} parent=5 // pred_check
        %p130 = pneg %p129
      $region22: #{tpu_custom_call.1} parent=5 // pred_check_branch
        %132 = sbr.rel (%p130) target = $region24
      $region23: #{tpu_custom_call.1} parent=5 // pred_region
        // Predicated region
        $region25: #{tpu_custom_call.1} parent=23 // pred_check
          %p133 = pneg %p34
        $region26: #{tpu_custom_call.1} parent=23 // pred_check_branch
          %135 = sbr.rel (%p133) target = $region28
        $region27: #{tpu_custom_call.1} parent=23 // pred_region
          %s136 = sand.u32 %s24, 1
          %s137 = scalar_lea.sflag [#allocation4], %s136
          %s138 = sand.u32 %s24, 1
          %s139 = smul.addr %s138, 912
          %s140 = scalar_lea.vmem [#allocation3], %s139
          %s141 = smul.u32 19, %s14
          %s143 = ssub.s32 14592, 14592
          %144 = vsyncadd %s137, %s143
          %s145 = smul.addr %s141, 6
          %s146 = smul.addr %s145, 128
          %s147 = scalar_lea.hbm %s0, %s146
          %s148 = sshll.u32 %s140, 4
          %s149 = int_to_ptr.vmem [resolvable:$true] %s148
          %154 = dma.hbm_to_vmem [thread:$0]  %s147, 14592, %s149, %s137, 768, 768, 48
        $region28: #{tpu_custom_call.1} parent=23 // pred_fallthru
          _
      $region24: #{tpu_custom_call.1} parent=5 // pred_fallthru
        _
      %p155 = scmp.le.s32.totalorder 1, %s14
      %p156 = scmp.lt.s32.totalorder %s14, 3
      %p157 = pnand %p155, %p156
      %p158 = pneg %p157
      // Predicated region
      $region29: #{tpu_custom_call.1} parent=5 // pred_check
        _
      $region30: #{tpu_custom_call.1} parent=5 // pred_check_branch
        %160 = sbr.rel (%p157) target = $region32
      $region31: #{tpu_custom_call.1} parent=5 // pred_region
        %s161 = ssub.s32 %s14, 1
        %s162 = sand.u32 %s27, 1
        %s163 = scalar_lea.sflag [#allocation4], %s162
        %s164 = sand.u32 %s27, 1
        %s165 = smul.addr %s164, 912
        %s166 = scalar_lea.vmem [#allocation3], %s165
        // Predicated region
        $region33: #{tpu_custom_call.1} parent=31 // pred_check
          %p167 = pneg %p40
        $region34: #{tpu_custom_call.1} parent=31 // pred_check_branch
          %169 = sbr.rel (%p167) target = $region36
        $region35: #{tpu_custom_call.1} parent=31 // pred_region
          %170 = dma.done %s163, 14592
        $region36: #{tpu_custom_call.1} parent=31 // pred_fallthru
          _
        %s171 = sand.u32 %s27, 1
        %s172 = scalar_lea.sflag [#allocation4], %s171
        %s173 = sand.u32 %s27, 1
        %s174 = smul.addr %s173, 912
        %s175 = scalar_lea.vmem [#allocation3], %s174
        %p176 = pneg %p40
        %p177 = pneg %p37
        %p178 = pneg %p61
        %p179 = pneg %p58
        %p180 = pneg %p82
        %p181 = pneg %p79
        %p182 = pneg %p108
        %p183 = pneg %p105
        %s184 = smul.u32 19, %s19
        %p185 = scmp.lt.s32.totalorder %s184, 37
        %s186 = scalar_select %p185, %s184, 37
        %s187 = smul.addr %s186, 8
        %s188 = scalar_lea.vmem %s3, %s187
        %s189 = smul.u32 19, %s19
        %s190 = smul.u32 19, %s19
        %p191 = scmp.lt.s32.totalorder %s190, 37
        %s192 = scalar_select %p191, %s190, 37
        %s193 = smul.addr %s192, 8
        %s194 = scalar_lea.vmem %s3, %s193
        %s195 = smul.u32 19, %s19
        %v196 = vld [vmem:[%s166] sm:$0xff]
        %v197 = vld [vmem:[%s166 + $0x8] sm:$0xff]
        %v198 = vld [vmem:[%s166 + $0x10] sm:$0xff]
        %v199 = vld [vmem:[%s166 + $0x18] sm:$0xff]
        %v200 = vld [vmem:[%s166 + $0x20] sm:$0xff]
        %v201 = vld [vmem:[%s166 + $0x28] sm:$0xff]
        %v202 = vld [vmem:[%s166 + $0x30] sm:$0xff]
        %v203 = vld [vmem:[%s166 + $0x38] sm:$0xff]
        %v204 = vld [vmem:[%s166 + $0x40] sm:$0xff]
        %v205 = vld [vmem:[%s166 + $0x48] sm:$0xff]
        %v206 = vld [vmem:[%s166 + $0x50] sm:$0xff]
        %v207 = vld [vmem:[%s166 + $0x58] sm:$0xff]
        %v208 = vld [vmem:[%s166 + $0x60] sm:$0xff]
        %v209 = vld [vmem:[%s166 + $0x68] sm:$0xff]
        %v210 = vld [vmem:[%s166 + $0x70] sm:$0xff]
        %v211 = vld [vmem:[%s166 + $0x78] sm:$0xff]
        %v212 = vld [vmem:[%s166 + $0x80] sm:$0xff]
        %v213 = vld [vmem:[%s166 + $0x88] sm:$0xff]
        %v214 = vld [vmem:[%s166 + $0x90] sm:$0xff]
        %v215 = vld [vmem:[%s166 + $0x98] sm:$0xff]
        %v216 = vld [vmem:[%s166 + $0xa0] sm:$0xff]
        %v217 = vld [vmem:[%s166 + $0xa8] sm:$0xff]
        %v218 = vld [vmem:[%s166 + $0xb0] sm:$0xff]
        %v219 = vld [vmem:[%s166 + $0xb8] sm:$0xff]
        %v220 = vld [vmem:[%s166 + $0xc0] sm:$0xff]
        %v221 = vld [vmem:[%s166 + $0xc8] sm:$0xff]
        %v222 = vld [vmem:[%s166 + $0xd0] sm:$0xff]
        %v223 = vld [vmem:[%s166 + $0xd8] sm:$0xff]
        %v224 = vld [vmem:[%s166 + $0xe0] sm:$0xff]
        %v225 = vld [vmem:[%s166 + $0xe8] sm:$0xff]
        %v226 = vld [vmem:[%s166 + $0xf0] sm:$0xff]
        %v227 = vld [vmem:[%s166 + $0xf8] sm:$0xff]
        %v228 = vld [vmem:[%s166 + $0x100] sm:$0xff]
        %v229 = vld [vmem:[%s166 + $0x108] sm:$0xff]
        %v230 = vld [vmem:[%s166 + $0x110] sm:$0xff]
        %v231 = vld [vmem:[%s166 + $0x118] sm:$0xff]
        %v232 = vld [vmem:[%s166 + $0x120] sm:$0xff]
        %v233 = vld [vmem:[%s166 + $0x128] sm:$0xff]
        %v234 = vld [vmem:[%s166 + $0x130] sm:$0xff]
        %v235 = vld [vmem:[%s166 + $0x138] sm:$0xff]
        %v236 = vld [vmem:[%s166 + $0x140] sm:$0xff]
        %v237 = vld [vmem:[%s166 + $0x148] sm:$0xff]
        %v238 = vld [vmem:[%s166 + $0x150] sm:$0xff]
        %v239 = vld [vmem:[%s166 + $0x158] sm:$0xff]
        %v240 = vld [vmem:[%s166 + $0x160] sm:$0xff]
        %v241 = vld [vmem:[%s166 + $0x168] sm:$0xff]
        %v242 = vld [vmem:[%s166 + $0x170] sm:$0xff]
        %v243 = vld [vmem:[%s166 + $0x178] sm:$0xff]
        %v244 = vld [vmem:[%s166 + $0x180] sm:$0xff]
        %v245 = vld [vmem:[%s166 + $0x188] sm:$0xff]
        %v246 = vld [vmem:[%s166 + $0x190] sm:$0xff]
        %v247 = vld [vmem:[%s166 + $0x198] sm:$0xff]
        %v248 = vld [vmem:[%s166 + $0x1a0] sm:$0xff]
        %v249 = vld [vmem:[%s166 + $0x1a8] sm:$0xff]
        %v250 = vld [vmem:[%s166 + $0x1b0] sm:$0xff]
        %v251 = vld [vmem:[%s166 + $0x1b8] sm:$0xff]
        %v252 = vld [vmem:[%s166 + $0x1c0] sm:$0xff]
        %v253 = vld [vmem:[%s166 + $0x1c8] sm:$0xff]
        %v254 = vld [vmem:[%s166 + $0x1d0] sm:$0xff]
        %v255 = vld [vmem:[%s166 + $0x1d8] sm:$0xff]
        %v256 = vld [vmem:[%s166 + $0x1e0] sm:$0xff]
        %v257 = vld [vmem:[%s166 + $0x1e8] sm:$0xff]
        %v258 = vld [vmem:[%s166 + $0x1f0] sm:$0xff]
        %v259 = vld [vmem:[%s166 + $0x1f8] sm:$0xff]
        %v260 = vld [vmem:[%s166 + $0x200] sm:$0xff]
        %v261 = vld [vmem:[%s166 + $0x208] sm:$0xff]
        %v262 = vld [vmem:[%s166 + $0x210] sm:$0xff]
        %v263 = vld [vmem:[%s166 + $0x218] sm:$0xff]
        %v264 = vld [vmem:[%s166 + $0x220] sm:$0xff]
        %v265 = vld [vmem:[%s166 + $0x228] sm:$0xff]
        %v266 = vld [vmem:[%s166 + $0x230] sm:$0xff]
        %v267 = vld [vmem:[%s166 + $0x238] sm:$0xff]
        %v268 = vld [vmem:[%s166 + $0x240] sm:$0xff]
        %v269 = vld [vmem:[%s166 + $0x248] sm:$0xff]
        %v270 = vld [vmem:[%s166 + $0x250] sm:$0xff]
        %v271 = vld [vmem:[%s166 + $0x258] sm:$0xff]
        %v272 = vld [vmem:[%s166 + $0x260] sm:$0xff]
        %v273 = vld [vmem:[%s166 + $0x268] sm:$0xff]
        %v274 = vld [vmem:[%s166 + $0x270] sm:$0xff]
        %v275 = vld [vmem:[%s166 + $0x278] sm:$0xff]
        %v276 = vld [vmem:[%s166 + $0x280] sm:$0xff]
        %v277 = vld [vmem:[%s166 + $0x288] sm:$0xff]
        %v278 = vld [vmem:[%s166 + $0x290] sm:$0xff]
        %v279 = vld [vmem:[%s166 + $0x298] sm:$0xff]
        %v280 = vld [vmem:[%s166 + $0x2a0] sm:$0xff]
        %v281 = vld [vmem:[%s166 + $0x2a8] sm:$0xff]
        %v282 = vld [vmem:[%s166 + $0x2b0] sm:$0xff]
        %v283 = vld [vmem:[%s166 + $0x2b8] sm:$0xff]
        %v284 = vld [vmem:[%s166 + $0x2c0] sm:$0xff]
        %v285 = vld [vmem:[%s166 + $0x2c8] sm:$0xff]
        %v286 = vld [vmem:[%s166 + $0x2d0] sm:$0xff]
        %v287 = vld [vmem:[%s166 + $0x2d8] sm:$0xff]
        %v288 = vld [vmem:[%s166 + $0x2e0] sm:$0xff]
        %v289 = vld [vmem:[%s166 + $0x2e8] sm:$0xff]
        %v290 = vld [vmem:[%s166 + $0x2f0] sm:$0xff]
        %v291 = vld [vmem:[%s166 + $0x2f8] sm:$0xff]
        %v292 = vld [vmem:[%s166 + $0x300] sm:$0xff]
        %v293 = vld [vmem:[%s166 + $0x308] sm:$0xff]
        %v294 = vld [vmem:[%s166 + $0x310] sm:$0xff]
        %v295 = vld [vmem:[%s166 + $0x318] sm:$0xff]
        %v296 = vld [vmem:[%s166 + $0x320] sm:$0xff]
        %v297 = vld [vmem:[%s166 + $0x328] sm:$0xff]
        %v298 = vld [vmem:[%s166 + $0x330] sm:$0xff]
        %v299 = vld [vmem:[%s166 + $0x338] sm:$0xff]
        %v300 = vld [vmem:[%s166 + $0x340] sm:$0xff]
        %v301 = vld [vmem:[%s166 + $0x348] sm:$0xff]
        %v302 = vld [vmem:[%s166 + $0x350] sm:$0xff]
        %v303 = vld [vmem:[%s166 + $0x358] sm:$0xff]
        %v304 = vld [vmem:[%s166 + $0x360] sm:$0xff]
        %v305 = vld [vmem:[%s166 + $0x368] sm:$0xff]
        %v306 = vld [vmem:[%s166 + $0x370] sm:$0xff]
        %v307 = vld [vmem:[%s166 + $0x378] sm:$0xff]
        %v308 = vld [vmem:[%s166 + $0x380] sm:$0xff]
        %v309 = vld [vmem:[%s166 + $0x388] sm:$0xff]
        %v310 = vld [vmem:[%s1] sm:$0xff]
        %v311 = vld [vmem:[%s1 + $0x8] sm:$0xff]
        %v312 = vld [vmem:[%s1 + $0x10] sm:$0xff]
        %v313 = vld [vmem:[%s1 + $0x18] sm:$0xff]
        %v314 = vld [vmem:[%s1 + $0x20] sm:$0xff]
        %v315 = vld [vmem:[%s1 + $0x28] sm:$0xff]
        %v316 = vld [vmem:[%s1 + $0x30] sm:$0xff]
        %v317 = vld [vmem:[%s1 + $0x38] sm:$0xff]
        %v318 = vld [vmem:[%s1 + $0x40] sm:$0xff]
        %v319 = vld [vmem:[%s1 + $0x48] sm:$0xff]
        %v320 = vld [vmem:[%s1 + $0x50] sm:$0xff]
        %v321 = vld [vmem:[%s1 + $0x58] sm:$0xff]
        %v322 = vld [vmem:[%s1 + $0x60] sm:$0xff]
        %v323 = vld [vmem:[%s1 + $0x68] sm:$0xff]
        %v324 = vld [vmem:[%s1 + $0x70] sm:$0xff]
        %v325 = vld [vmem:[%s1 + $0x78] sm:$0xff]
        %v326 = vld [vmem:[%s1 + $0x80] sm:$0xff]
        %v327 = vld [vmem:[%s1 + $0x88] sm:$0xff]
        %v328 = vld [vmem:[%s1 + $0x90] sm:$0xff]
        %v329 = vld [vmem:[%s1 + $0x98] sm:$0xff]
        %v330 = vld [vmem:[%s1 + $0xa0] sm:$0xff]
        %v331 = vld [vmem:[%s1 + $0xa8] sm:$0xff]
        %v332 = vld [vmem:[%s1 + $0xb0] sm:$0xff]
        %v333 = vld [vmem:[%s1 + $0xb8] sm:$0xff]
        %v334 = vld [vmem:[%s1 + $0xc0] sm:$0xff]
        %v335 = vld [vmem:[%s1 + $0xc8] sm:$0xff]
        %v336 = vld [vmem:[%s1 + $0xd0] sm:$0xff]
        %v337 = vld [vmem:[%s1 + $0xd8] sm:$0xff]
        %v338 = vld [vmem:[%s1 + $0xe0] sm:$0xff]
        %v339 = vld [vmem:[%s1 + $0xe8] sm:$0xff]
        %v340 = vld [vmem:[%s1 + $0xf0] sm:$0xff]
        %v341 = vld [vmem:[%s1 + $0xf8] sm:$0xff]
        %v342 = vld [vmem:[%s1 + $0x100] sm:$0xff]
        %v343 = vld [vmem:[%s1 + $0x108] sm:$0xff]
        %v344 = vld [vmem:[%s1 + $0x110] sm:$0xff]
        %v345 = vld [vmem:[%s1 + $0x118] sm:$0xff]
        %v346 = vld [vmem:[%s1 + $0x120] sm:$0xff]
        %v347 = vld [vmem:[%s1 + $0x128] sm:$0xff]
        %v348 = vld [vmem:[%s1 + $0x130] sm:$0xff]
        %v349 = vld [vmem:[%s1 + $0x138] sm:$0xff]
        %v350 = vld [vmem:[%s1 + $0x140] sm:$0xff]
        %v351 = vld [vmem:[%s1 + $0x148] sm:$0xff]
        %v352 = vld [vmem:[%s1 + $0x150] sm:$0xff]
        %v353 = vld [vmem:[%s1 + $0x158] sm:$0xff]
        %v354 = vld [vmem:[%s1 + $0x160] sm:$0xff]
        %v355 = vld [vmem:[%s1 + $0x168] sm:$0xff]
        %v356 = vld [vmem:[%s1 + $0x170] sm:$0xff]
        %v357 = vld [vmem:[%s1 + $0x178] sm:$0xff]
        %v358 = vld [vmem:[%s1 + $0x180] sm:$0xff]
        %v359 = vld [vmem:[%s1 + $0x188] sm:$0xff]
        %v360 = vld [vmem:[%s1 + $0x190] sm:$0xff]
        %v361 = vld [vmem:[%s1 + $0x198] sm:$0xff]
        %v362 = vld [vmem:[%s1 + $0x1a0] sm:$0xff]
        %v363 = vld [vmem:[%s1 + $0x1a8] sm:$0xff]
        %v364 = vld [vmem:[%s1 + $0x1b0] sm:$0xff]
        %v365 = vld [vmem:[%s1 + $0x1b8] sm:$0xff]
        %v366 = vld [vmem:[%s1 + $0x1c0] sm:$0xff]
        %v367 = vld [vmem:[%s1 + $0x1c8] sm:$0xff]
        %v368 = vld [vmem:[%s1 + $0x1d0] sm:$0xff]
        %v369 = vld [vmem:[%s1 + $0x1d8] sm:$0xff]
        %v370 = vld [vmem:[%s1 + $0x1e0] sm:$0xff]
        %v371 = vld [vmem:[%s1 + $0x1e8] sm:$0xff]
        %v372 = vld [vmem:[%s1 + $0x1f0] sm:$0xff]
        %v373 = vld [vmem:[%s1 + $0x1f8] sm:$0xff]
        %v374 = vld [vmem:[%s1 + $0x200] sm:$0xff]
        %v375 = vld [vmem:[%s1 + $0x208] sm:$0xff]
        %v376 = vld [vmem:[%s1 + $0x210] sm:$0xff]
        %v377 = vld [vmem:[%s1 + $0x218] sm:$0xff]
        %v378 = vld [vmem:[%s1 + $0x220] sm:$0xff]
        %v379 = vld [vmem:[%s1 + $0x228] sm:$0xff]
        %v380 = vld [vmem:[%s1 + $0x230] sm:$0xff]
        %v381 = vld [vmem:[%s1 + $0x238] sm:$0xff]
        %v382 = vld [vmem:[%s1 + $0x240] sm:$0xff]
        %v383 = vld [vmem:[%s1 + $0x248] sm:$0xff]
        %v384 = vld [vmem:[%s1 + $0x250] sm:$0xff]
        %v385 = vld [vmem:[%s1 + $0x258] sm:$0xff]
        %v386 = vld [vmem:[%s1 + $0x260] sm:$0xff]
        %v387 = vld [vmem:[%s1 + $0x268] sm:$0xff]
        %v388 = vld [vmem:[%s1 + $0x270] sm:$0xff]
        %v389 = vld [vmem:[%s1 + $0x278] sm:$0xff]
        %v390 = vld [vmem:[%s1 + $0x280] sm:$0xff]
        %v391 = vld [vmem:[%s1 + $0x288] sm:$0xff]
        %v392 = vld [vmem:[%s1 + $0x290] sm:$0xff]
        %v393 = vld [vmem:[%s1 + $0x298] sm:$0xff]
        %v394 = vld [vmem:[%s1 + $0x2a0] sm:$0xff]
        %v395 = vld [vmem:[%s1 + $0x2a8] sm:$0xff]
        %v396 = vld [vmem:[%s1 + $0x2b0] sm:$0xff]
        %v397 = vld [vmem:[%s1 + $0x2b8] sm:$0xff]
        %v398 = vld [vmem:[%s1 + $0x2c0] sm:$0xff]
        %v399 = vld [vmem:[%s1 + $0x2c8] sm:$0xff]
        %v400 = vld [vmem:[%s1 + $0x2d0] sm:$0xff]
        %v401 = vld [vmem:[%s1 + $0x2d8] sm:$0xff]
        %v402 = vld [vmem:[%s1 + $0x2e0] sm:$0xff]
        %v403 = vld [vmem:[%s1 + $0x2e8] sm:$0xff]
        %v404 = vld [vmem:[%s1 + $0x2f0] sm:$0xff]
        %v405 = vld [vmem:[%s1 + $0x2f8] sm:$0xff]
        %v406 = vld [vmem:[#allocation2] sm:$0x1]
        %v408 = vlaneseq
        %v409 = vshrl.u32 %v408, 7
        %v410 = vsub.s32 0, %v409
        %v411 = vrot.slane %v406, %v410
        %413 = vmatprep.subr.mxu0 0.0
        %v414 = vand.u32 %v310, 4294901760
        %415 = vmatpush1.msra.mxu0 %v414
        %416 = vmatprep.subr.mxu0 0.0
        %v417 = vand.u32 %v311, 4294901760
        %418 = vmatpush1.msra.mxu0 %v417
        %419 = vmatprep.subr.mxu0 0.0
        %v420 = vand.u32 %v312, 4294901760
        %421 = vmatpush1.msra.mxu0 %v420
        %422 = vmatprep.subr.mxu0 0.0
        %v423 = vand.u32 %v313, 4294901760
        %424 = vmatpush1.msra.mxu0 %v423
        %425 = vmatprep.subr.mxu0 0.0
        %v426 = vand.u32 %v314, 4294901760
        %427 = vmatpush1.msra.mxu0 %v426
        %428 = vmatprep.subr.mxu0 0.0
        %v429 = vand.u32 %v315, 4294901760
        %430 = vmatpush1.msra.mxu0 %v429
        %431 = vmatprep.subr.mxu0 0.0
        %v432 = vand.u32 %v316, 4294901760
        %433 = vmatpush1.msra.mxu0 %v432
        %434 = vmatprep.subr.mxu0 0.0
        %v435 = vand.u32 %v317, 4294901760
        %436 = vmatpush1.msra.mxu0 %v435
        %437 = vmatprep.subr.mxu0 0.0
        %v438 = vand.u32 %v318, 4294901760
        %439 = vmatpush1.msra.mxu0 %v438
        %440 = vmatprep.subr.mxu0 0.0
        %v441 = vand.u32 %v319, 4294901760
        %442 = vmatpush1.msra.mxu0 %v441
        %443 = vmatprep.subr.mxu0 0.0
        %v444 = vand.u32 %v320, 4294901760
        %445 = vmatpush1.msra.mxu0 %v444
        %446 = vmatprep.subr.mxu0 0.0
        %v447 = vand.u32 %v321, 4294901760
        %448 = vmatpush1.msra.mxu0 %v447
        %449 = vmatprep.subr.mxu0 0.0
        %v450 = vand.u32 %v322, 4294901760
        %451 = vmatpush1.msra.mxu0 %v450
        %452 = vmatprep.subr.mxu0 0.0
        %v453 = vand.u32 %v323, 4294901760
        %454 = vmatpush1.msra.mxu0 %v453
        %455 = vmatprep.subr.mxu0 0.0
        %v456 = vand.u32 %v324, 4294901760
        %457 = vmatpush1.msra.mxu0 %v456
        %458 = vmatprep.subr.mxu0 0.0
        %v459 = vand.u32 %v325, 4294901760
        %460 = vmatpush1.msra.mxu0 %v459
        %461 = vmatprep.subr.mxu0 0.0
        %v462 = vand.u32 %v326, 4294901760
        %463 = vmatpush1.msra.mxu0 %v462
        %464 = vmatprep.subr.mxu0 0.0
        %v465 = vand.u32 %v327, 4294901760
        %466 = vmatpush1.msra.mxu0 %v465
        %467 = vmatprep.subr.mxu0 0.0
        %v468 = vand.u32 %v328, 4294901760
        %469 = vmatpush1.msra.mxu0 %v468
        %470 = vmatprep.subr.mxu0 0.0
        %v471 = vand.u32 %v329, 4294901760
        %472 = vmatpush1.msra.mxu0 %v471
        %473 = vmatprep.subr.mxu0 0.0
        %v474 = vand.u32 %v330, 4294901760
        %475 = vmatpush1.msra.mxu0 %v474
        %476 = vmatprep.subr.mxu0 0.0
        %v477 = vand.u32 %v331, 4294901760
        %478 = vmatpush1.msra.mxu0 %v477
        %479 = vmatprep.subr.mxu0 0.0
        %v480 = vand.u32 %v332, 4294901760
        %481 = vmatpush1.msra.mxu0 %v480
        %482 = vmatprep.subr.mxu0 0.0
        %v483 = vand.u32 %v333, 4294901760
        %484 = vmatpush1.msra.mxu0 %v483
        %485 = vmatprep.subr.mxu0 0.0
        %v486 = vand.u32 %v334, 4294901760
        %487 = vmatpush1.msra.mxu0 %v486
        %488 = vmatprep.subr.mxu0 0.0
        %v489 = vand.u32 %v335, 4294901760
        %490 = vmatpush1.msra.mxu0 %v489
        %491 = vmatprep.subr.mxu0 0.0
        %v492 = vand.u32 %v336, 4294901760
        %493 = vmatpush1.msra.mxu0 %v492
        %494 = vmatprep.subr.mxu0 0.0
        %v495 = vand.u32 %v337, 4294901760
        %496 = vmatpush1.msra.mxu0 %v495
        %497 = vmatprep.subr.mxu0 0.0
        %v498 = vand.u32 %v338, 4294901760
        %499 = vmatpush1.msra.mxu0 %v498
        %500 = vmatprep.subr.mxu0 0.0
        %v501 = vand.u32 %v339, 4294901760
        %502 = vmatpush1.msra.mxu0 %v501
        %503 = vmatprep.subr.mxu0 0.0
        %v504 = vand.u32 %v340, 4294901760
        %505 = vmatpush1.msra.mxu0 %v504
        %506 = vmatprep.subr.mxu0 0.0
        %v507 = vand.u32 %v341, 4294901760
        %508 = vmatpush1.msra.mxu0 %v507
        %v509 = vand.u32 %v197, 4294901760
        %v510 = vsub.f32 %v197, %v509
        %v511 = vand.u32 %v510, 4294901760
        %v512 = vsub.f32 %v510, %v511
        %v513 = vand.u32 %v512, 4294901760
        %514 = vmatprep.mubr.f32.mxu0 %v513
        %v515 = vand.u32 %v196, 4294901760
        %v516 = vsub.f32 %v196, %v515
        %v517 = vand.u32 %v516, 4294901760
        %v518 = vsub.f32 %v516, %v517
        %v519 = vand.u32 %v518, 4294901760
        %520 = vmatmul.mubr.f32.gmra.mrb[0].mxu0 %v519
        %v521 = vpop.f32.mrb[0].mxu0
        %v522 = vadd.f32 %v411, %v521
        %v523 = vpop.f32.mrb[0].mxu0
        %v524 = vand.u32 %v203, 4294901760
        %v525 = vsub.f32 %v203, %v524
        %v526 = vand.u32 %v525, 4294901760
        %v527 = vsub.f32 %v525, %v526
        %v528 = vand.u32 %v527, 4294901760
        %529 = vmatprep.mubr.f32.mxu0 %v528
        %v530 = vand.u32 %v202, 4294901760
        %v531 = vsub.f32 %v202, %v530
        %v532 = vand.u32 %v531, 4294901760
        %v533 = vsub.f32 %v531, %v532
        %v534 = vand.u32 %v533, 4294901760
        %535 = vmatmul.mubr.f32.gmra.mrb[0].mxu0 %v534
        %v536 = vpop.f32.mrb[0].mxu0
        %v537 = vadd.f32 %v411, %v536
        %v538 = vpop.f32.mrb[0].mxu0
        %v539 = vand.u32 %v209, 4294901760
        %v540 = vsub.f32 %v209, %v539
        %v541 = vand.u32 %v540, 4294901760
        %v542 = vsub.f32 %v540, %v541
        %v543 = vand.u32 %v542, 4294901760
        %544 = vmatprep.mubr.f32.mxu0 %v543
        %v545 = vand.u32 %v208, 4294901760
        %v546 = vsub.f32 %v208, %v545
        %v547 = vand.u32 %v546, 4294901760
        %v548 = vsub.f32 %v546, %v547
        %v549 = vand.u32 %v548, 4294901760
        %550 = vmatmul.mubr.f32.gmra.mrb[0].mxu0 %v549
        %v551 = vpop.f32.mrb[0].mxu0
        %v552 = vadd.f32 %v411, %v551
        %v553 = vpop.f32.mrb[0].mxu0
        %v554 = vand.u32 %v215, 4294901760
        %v555 = vsub.f32 %v215, %v554
        %v556 = vand.u32 %v555, 4294901760
        %v557 = vsub.f32 %v555, %v556
        %v558 = vand.u32 %v557, 4294901760
        %559 = vmatprep.mubr.f32.mxu0 %v558
        %v560 = vand.u32 %v214, 4294901760
        %v561 = vsub.f32 %v214, %v560
        %v562 = vand.u32 %v561, 4294901760
        %v563 = vsub.f32 %v561, %v562
        %v564 = vand.u32 %v563, 4294901760
        %565 = vmatmul.mubr.f32.gmra.mrb[0].mxu0 %v564
        %v566 = vpop.f32.mrb[0].mxu0
        %v567 = vadd.f32 %v411, %v566
        %v568 = vpop.f32.mrb[0].mxu0
        %v569 = vand.u32 %v221, 4294901760
        %v570 = vsub.f32 %v221, %v569
        %v571 = vand.u32 %v570, 4294901760
        %v572 = vsub.f32 %v570, %v571
        %v573 = vand.u32 %v572, 4294901760
        %574 = vmatprep.mubr.f32.mxu0 %v573
        %v575 = vand.u32 %v220, 4294901760
        %v576 = vsub.f32 %v220, %v575
        %v577 = vand.u32 %v576, 4294901760
        %v578 = vsub.f32 %v576, %v577
        %v579 = vand.u32 %v578, 4294901760
        %580 = vmatmul.mubr.f32.gmra.mrb[0].mxu0 %v579
        %v581 = vpop.f32.mrb[0].mxu0
        %v582 = vadd.f32 %v411, %v581
        %v583 = vpop.f32.mrb[0].mxu0
        %v584 = vand.u32 %v227, 4294901760
        %v585 = vsub.f32 %v227, %v584
        %v586 = vand.u32 %v585, 4294901760
        %v587 = vsub.f32 %v585, %v586
        %v588 = vand.u32 %v587, 4294901760
        %589 = vmatprep.mubr.f32.mxu0 %v588
        %v590 = vand.u32 %v226, 4294901760
        %v591 = vsub.f32 %v226, %v590
        %v592 = vand.u32 %v591, 4294901760
        %v593 = vsub.f32 %v591, %v592
        %v594 = vand.u32 %v593, 4294901760
        %595 = vmatmul.mubr.f32.gmra.mrb[0].mxu0 %v594
        %v596 = vpop.f32.mrb[0].mxu0
        %v597 = vadd.f32 %v411, %v596
        %v598 = vpop.f32.mrb[0].mxu0
        %v599 = vand.u32 %v233, 4294901760
        %v600 = vsub.f32 %v233, %v599
        %v601 = vand.u32 %v600, 4294901760
        %v602 = vsub.f32 %v600, %v601
        %v603 = vand.u32 %v602, 4294901760
        %604 = vmatprep.mubr.f32.mxu0 %v603
        %v605 = vand.u32 %v232, 4294901760
        %v606 = vsub.f32 %v232, %v605
        %v607 = vand.u32 %v606, 4294901760
        %v608 = vsub.f32 %v606, %v607
        %v609 = vand.u32 %v608, 4294901760
        %610 = vmatmul.mubr.f32.gmra.mrb[0].mxu0 %v609
        %v611 = vpop.f32.mrb[0].mxu0
        %v612 = vadd.f32 %v411, %v611
        %v613 = vpop.f32.mrb[0].mxu0
        %v614 = vand.u32 %v239, 4294901760
        %v615 = vsub.f32 %v239, %v614
        %v616 = vand.u32 %v615, 4294901760
        %v617 = vsub.f32 %v615, %v616
        %v618 = vand.u32 %v617, 4294901760
        %619 = vmatprep.mubr.f32.mxu0 %v618
        %v620 = vand.u32 %v238, 4294901760
        %v621 = vsub.f32 %v238, %v620
        %v622 = vand.u32 %v621, 4294901760
        %v623 = vsub.f32 %v621, %v622
        %v624 = vand.u32 %v623, 4294901760
        %625 = vmatmul.mubr.f32.gmra.mrb[0].mxu0 %v624
        %v626 = vpop.f32.mrb[0].mxu0
        %v627 = vadd.f32 %v411, %v626
        %v628 = vpop.f32.mrb[0].mxu0
        %v629 = vand.u32 %v245, 4294901760
        %v630 = vsub.f32 %v245, %v629
        %v631 = vand.u32 %v630, 4294901760
        %v632 = vsub.f32 %v630, %v631
        %v633 = vand.u32 %v632, 4294901760
        %634 = vmatprep.mubr.f32.mxu0 %v633
        %v635 = vand.u32 %v244, 4294901760
        %v636 = vsub.f32 %v244, %v635
        %v637 = vand.u32 %v636, 4294901760
        %v638 = vsub.f32 %v636, %v637
        %v639 = vand.u32 %v638, 4294901760
        %640 = vmatmul.mubr.f32.gmra.mrb[0].mxu0 %v639
        %v641 = vpop.f32.mrb[0].mxu0
        %v642 = vadd.f32 %v411, %v641
        %v643 = vpop.f32.mrb[0].mxu0
        %v644 = vand.u32 %v251, 4294901760
        %v645 = vsub.f32 %v251, %v644
        %v646 = vand.u32 %v645, 4294901760
        %v647 = vsub.f32 %v645, %v646
        %v648 = vand.u32 %v647, 4294901760
        %649 = vmatprep.mubr.f32.mxu0 %v648
        %v650 = vand.u32 %v250, 4294901760
        %v651 = vsub.f32 %v250, %v650
        %v652 = vand.u32 %v651, 4294901760
        %v653 = vsub.f32 %v651, %v652
        %v654 = vand.u32 %v653, 4294901760
        %655 = vmatmul.mubr.f32.gmra.mrb[0].mxu0 %v654
        %v656 = vpop.f32.mrb[0].mxu0
        %v657 = vadd.f32 %v411, %v656
        %v658 = vpop.f32.mrb[0].mxu0
        %v659 = vand.u32 %v257, 4294901760
        %v660 = vsub.f32 %v257, %v659
        %v661 = vand.u32 %v660, 4294901760
        %v662 = vsub.f32 %v660, %v661
        %v663 = vand.u32 %v662, 4294901760
        %664 = vmatprep.mubr.f32.mxu0 %v663
        %v665 = vand.u32 %v256, 4294901760
        %v666 = vsub.f32 %v256, %v665
        %v667 = vand.u32 %v666, 4294901760
        %v668 = vsub.f32 %v666, %v667
        %v669 = vand.u32 %v668, 4294901760
        %670 = vmatmul.mubr.f32.gmra.mrb[0].mxu0 %v669
        %v671 = vpop.f32.mrb[0].mxu0
        %v672 = vadd.f32 %v411, %v671
        %v673 = vpop.f32.mrb[0].mxu0
        %v674 = vand.u32 %v263, 4294901760
        %v675 = vsub.f32 %v263, %v674
        %v676 = vand.u32 %v675, 4294901760
        %v677 = vsub.f32 %v675, %v676
        %v678 = vand.u32 %v677, 4294901760
        %679 = vmatprep.mubr.f32.mxu0 %v678
        %v680 = vand.u32 %v262, 4294901760
        %v681 = vsub.f32 %v262, %v680
        %v682 = vand.u32 %v681, 4294901760
        %v683 = vsub.f32 %v681, %v682
        %v684 = vand.u32 %v683, 4294901760
        %685 = vmatmul.mubr.f32.gmra.mrb[0].mxu0 %v684
        %v686 = vpop.f32.mrb[0].mxu0
        %v687 = vadd.f32 %v411, %v686
        %v688 = vpop.f32.mrb[0].mxu0
        %v689 = vand.u32 %v269, 4294901760
        %v690 = vsub.f32 %v269, %v689
        %v691 = vand.u32 %v690, 4294901760
        %v692 = vsub.f32 %v690, %v691
        %v693 = vand.u32 %v692, 4294901760
        %694 = vmatprep.mubr.f32.mxu0 %v693
        %v695 = vand.u32 %v268, 4294901760
        %v696 = vsub.f32 %v268, %v695
        %v697 = vand.u32 %v696, 4294901760
        %v698 = vsub.f32 %v696, %v697
        %v699 = vand.u32 %v698, 4294901760
        %700 = vmatmul.mubr.f32.gmra.mrb[0].mxu0 %v699
        %v701 = vpop.f32.mrb[0].mxu0
        %v702 = vadd.f32 %v411, %v701
        %v703 = vpop.f32.mrb[0].mxu0
        %v704 = vand.u32 %v275, 4294901760
        %v705 = vsub.f32 %v275, %v704
        %v706 = vand.u32 %v705, 4294901760
        %v707 = vsub.f32 %v705, %v706
        %v708 = vand.u32 %v707, 4294901760
        %709 = vmatprep.mubr.f32.mxu0 %v708
        %v710 = vand.u32 %v274, 4294901760
        %v711 = vsub.f32 %v274, %v710
        %v712 = vand.u32 %v711, 4294901760
        %v713 = vsub.f32 %v711, %v712
        %v714 = vand.u32 %v713, 4294901760
        %715 = vmatmul.mubr.f32.gmra.mrb[0].mxu0 %v714
        %v716 = vpop.f32.mrb[0].mxu0
        %v717 = vadd.f32 %v411, %v716
        %v718 = vpop.f32.mrb[0].mxu0
        %v719 = vand.u32 %v281, 4294901760
        %v720 = vsub.f32 %v281, %v719
        %v721 = vand.u32 %v720, 4294901760
        %v722 = vsub.f32 %v720, %v721
        %v723 = vand.u32 %v722, 4294901760
        %724 = vmatprep.mubr.f32.mxu0 %v723
        %v725 = vand.u32 %v280, 4294901760
        %v726 = vsub.f32 %v280, %v725
        %v727 = vand.u32 %v726, 4294901760
        %v728 = vsub.f32 %v726, %v727
        %v729 = vand.u32 %v728, 4294901760
        %730 = vmatmul.mubr.f32.gmra.mrb[0].mxu0 %v729
        %v731 = vpop.f32.mrb[0].mxu0
        %v732 = vadd.f32 %v411, %v731
        %v733 = vpop.f32.mrb[0].mxu0
        %v734 = vand.u32 %v287, 4294901760
        %v735 = vsub.f32 %v287, %v734
        %v736 = vand.u32 %v735, 4294901760
        %v737 = vsub.f32 %v735, %v736
        %v738 = vand.u32 %v737, 4294901760
        %739 = vmatprep.mubr.f32.mxu0 %v738
        %v740 = vand.u32 %v286, 4294901760
        %v741 = vsub.f32 %v286, %v740
        %v742 = vand.u32 %v741, 4294901760
        %v743 = vsub.f32 %v741, %v742
        %v744 = vand.u32 %v743, 4294901760
        %745 = vmatmul.mubr.f32.gmra.mrb[0].mxu0 %v744
        %v746 = vpop.f32.mrb[0].mxu0
        %v747 = vadd.f32 %v411, %v746
        %v748 = vpop.f32.mrb[0].mxu0
        %v749 = vand.u32 %v293, 4294901760
        %v750 = vsub.f32 %v293, %v749
        %v751 = vand.u32 %v750, 4294901760
        %v752 = vsub.f32 %v750, %v751
        %v753 = vand.u32 %v752, 4294901760
        %754 = vmatprep.mubr.f32.mxu0 %v753
        %v755 = vand.u32 %v292, 4294901760
        %v756 = vsub.f32 %v292, %v755
        %v757 = vand.u32 %v756, 4294901760
        %v758 = vsub.f32 %v756, %v757
        %v759 = vand.u32 %v758, 4294901760
        %760 = vmatmul.mubr.f32.gmra.mrb[0].mxu0 %v759
        %v761 = vpop.f32.mrb[0].mxu0
        %v762 = vadd.f32 %v411, %v761
        %v763 = vpop.f32.mrb[0].mxu0
        %v764 = vand.u32 %v299, 4294901760
        %v765 = vsub.f32 %v299, %v764
        %v766 = vand.u32 %v765, 4294901760
        %v767 = vsub.f32 %v765, %v766
        %v768 = vand.u32 %v767, 4294901760
        %769 = vmatprep.mubr.f32.mxu0 %v768
        %v770 = vand.u32 %v298, 4294901760
        %v771 = vsub.f32 %v298, %v770
        %v772 = vand.u32 %v771, 4294901760
        %v773 = vsub.f32 %v771, %v772
        %v774 = vand.u32 %v773, 4294901760
        %775 = vmatmul.mubr.f32.gmra.mrb[0].mxu0 %v774
        %v776 = vpop.f32.mrb[0].mxu0
        %v777 = vadd.f32 %v411, %v776
        %v778 = vpop.f32.mrb[0].mxu0
        %v779 = vand.u32 %v305, 4294901760
        %v780 = vsub.f32 %v305, %v779
        %v781 = vand.u32 %v780, 4294901760
        %v782 = vsub.f32 %v780, %v781
        %v783 = vand.u32 %v782, 4294901760
        %784 = vmatprep.mubr.f32.mxu0 %v783
        %v785 = vand.u32 %v304, 4294901760
        %v786 = vsub.f32 %v304, %v785
        %v787 = vand.u32 %v786, 4294901760
        %v788 = vsub.f32 %v786, %v787
        %v789 = vand.u32 %v788, 4294901760
        %790 = vmatmul.mubr.f32.gmra.mrb[0].mxu0 %v789
        %v791 = vpop.f32.mrb[0].mxu0
        %v792 = vadd.f32 %v411, %v791
        %v793 = vpop.f32.mrb[0].mxu0
        %794 = vdwg.mxu0
        %795 = vmatprep.subr.mxu0 0.0
        %v796 = vand.u32 %v310, 4294901760
        %v797 = vsub.f32 %v310, %v796
        %v798 = vand.u32 %v797, 4294901760
        %v799 = vsub.f32 %v797, %v798
        %v800 = vand.u32 %v799, 4294901760
        %801 = vmatpush1.msra.mxu0 %v800
        %802 = vmatprep.subr.mxu0 0.0
        %v803 = vand.u32 %v311, 4294901760
        %v804 = vsub.f32 %v311, %v803
        %v805 = vand.u32 %v804, 4294901760
        %v806 = vsub.f32 %v804, %v805
        %v807 = vand.u32 %v806, 4294901760
        %808 = vmatpush1.msra.mxu0 %v807
        %809 = vmatprep.subr.mxu0 0.0
        %v810 = vand.u32 %v312, 4294901760
        %v811 = vsub.f32 %v312, %v810
        %v812 = vand.u32 %v811, 4294901760
        %v813 = vsub.f32 %v811, %v812
        %v814 = vand.u32 %v813, 4294901760
        %815 = vmatpush1.msra.mxu0 %v814
        %816 = vmatprep.subr.mxu0 0.0
        %v817 = vand.u32 %v313, 4294901760
        %v818 = vsub.f32 %v313, %v817
        %v819 = vand.u32 %v818, 4294901760
        %v820 = vsub.f32 %v818, %v819
        %v821 = vand.u32 %v820, 4294901760
        %822 = vmatpush1.msra.mxu0 %v821
        %823 = vmatprep.subr.mxu0 0.0
        %v824 = vand.u32 %v314, 4294901760
        %v825 = vsub.f32 %v314, %v824
        %v826 = vand.u32 %v825, 4294901760
        %v827 = vsub.f32 %v825, %v826
        %v828 = vand.u32 %v827, 4294901760
        %829 = vmatpush1.msra.mxu0 %v828
        %830 = vmatprep.subr.mxu0 0.0
        %v831 = vand.u32 %v315, 4294901760
        %v832 = vsub.f32 %v315, %v831
        %v833 = vand.u32 %v832, 4294901760
        %v834 = vsub.f32 %v832, %v833
        %v835 = vand.u32 %v834, 4294901760
        %836 = vmatpush1.msra.mxu0 %v835
        %837 = vmatprep.subr.mxu0 0.0
        %v838 = vand.u32 %v316, 4294901760
        %v839 = vsub.f32 %v316, %v838
        %v840 = vand.u32 %v839, 4294901760
        %v841 = vsub.f32 %v839, %v840
        %v842 = vand.u32 %v841, 4294901760
        %843 = vmatpush1.msra.mxu0 %v842
        %844 = vmatprep.subr.mxu0 0.0
        %v845 = vand.u32 %v317, 4294901760
        %v846 = vsub.f32 %v317, %v845
        %v847 = vand.u32 %v846, 4294901760
        %v848 = vsub.f32 %v846, %v847
        %v849 = vand.u32 %v848, 4294901760
        %850 = vmatpush1.msra.mxu0 %v849
        %851 = vmatprep.subr.mxu0 0.0
        %v852 = vand.u32 %v318, 4294901760
        %v853 = vsub.f32 %v318, %v852
        %v854 = vand.u32 %v853, 4294901760
        %v855 = vsub.f32 %v853, %v854
        %v856 = vand.u32 %v855, 4294901760
        %857 = vmatpush1.msra.mxu0 %v856
        %858 = vmatprep.subr.mxu0 0.0
        %v859 = vand.u32 %v319, 4294901760
        %v860 = vsub.f32 %v319, %v859
        %v861 = vand.u32 %v860, 4294901760
        %v862 = vsub.f32 %v860, %v861
        %v863 = vand.u32 %v862, 4294901760
        %864 = vmatpush1.msra.mxu0 %v863
        %865 = vmatprep.subr.mxu0 0.0
        %v866 = vand.u32 %v320, 4294901760
        %v867 = vsub.f32 %v320, %v866
        %v868 = vand.u32 %v867, 4294901760
        %v869 = vsub.f32 %v867, %v868
        %v870 = vand.u32 %v869, 4294901760
        %871 = vmatpush1.msra.mxu0 %v870
        %872 = vmatprep.subr.mxu0 0.0
        %v873 = vand.u32 %v321, 4294901760
        %v874 = vsub.f32 %v321, %v873
        %v875 = vand.u32 %v874, 4294901760
        %v876 = vsub.f32 %v874, %v875
        %v877 = vand.u32 %v876, 4294901760
        %878 = vmatpush1.msra.mxu0 %v877
        %879 = vmatprep.subr.mxu0 0.0
        %v880 = vand.u32 %v322, 4294901760
        %v881 = vsub.f32 %v322, %v880
        %v882 = vand.u32 %v881, 4294901760
        %v883 = vsub.f32 %v881, %v882
        %v884 = vand.u32 %v883, 4294901760
        %885 = vmatpush1.msra.mxu0 %v884
        %886 = vmatprep.subr.mxu0 0.0
        %v887 = vand.u32 %v323, 4294901760
        %v888 = vsub.f32 %v323, %v887
        %v889 = vand.u32 %v888, 4294901760
        %v890 = vsub.f32 %v888, %v889
        %v891 = vand.u32 %v890, 4294901760
        %892 = vmatpush1.msra.mxu0 %v891
        %893 = vmatprep.subr.mxu0 0.0
        %v894 = vand.u32 %v324, 4294901760
        %v895 = vsub.f32 %v324, %v894
        %v896 = vand.u32 %v895, 4294901760
        %v897 = vsub.f32 %v895, %v896
        %v898 = vand.u32 %v897, 4294901760
        %899 = vmatpush1.msra.mxu0 %v898
        %900 = vmatprep.subr.mxu0 0.0
        %v901 = vand.u32 %v325, 4294901760
        %v902 = vsub.f32 %v325, %v901
        %v903 = vand.u32 %v902, 4294901760
        %v904 = vsub.f32 %v902, %v903
        %v905 = vand.u32 %v904, 4294901760
        %906 = vmatpush1.msra.mxu0 %v905
        %907 = vmatprep.subr.mxu0 0.0
        %v908 = vand.u32 %v326, 4294901760
        %v909 = vsub.f32 %v326, %v908
        %v910 = vand.u32 %v909, 4294901760
        %v911 = vsub.f32 %v909, %v910
        %v912 = vand.u32 %v911, 4294901760
        %913 = vmatpush1.msra.mxu0 %v912
        %914 = vmatprep.subr.mxu0 0.0
        %v915 = vand.u32 %v327, 4294901760
        %v916 = vsub.f32 %v327, %v915
        %v917 = vand.u32 %v916, 4294901760
        %v918 = vsub.f32 %v916, %v917
        %v919 = vand.u32 %v918, 4294901760
        %920 = vmatpush1.msra.mxu0 %v919
        %921 = vmatprep.subr.mxu0 0.0
        %v922 = vand.u32 %v328, 4294901760
        %v923 = vsub.f32 %v328, %v922
        %v924 = vand.u32 %v923, 4294901760
        %v925 = vsub.f32 %v923, %v924
        %v926 = vand.u32 %v925, 4294901760
        %927 = vmatpush1.msra.mxu0 %v926
        %928 = vmatprep.subr.mxu0 0.0
        %v929 = vand.u32 %v329, 4294901760
        %v930 = vsub.f32 %v329, %v929
        %v931 = vand.u32 %v930, 4294901760
        %v932 = vsub.f32 %v930, %v931
        %v933 = vand.u32 %v932, 4294901760
        %934 = vmatpush1.msra.mxu0 %v933
        %935 = vmatprep.subr.mxu0 0.0
        %v936 = vand.u32 %v330, 4294901760
        %v937 = vsub.f32 %v330, %v936
        %v938 = vand.u32 %v937, 4294901760
        %v939 = vsub.f32 %v937, %v938
        %v940 = vand.u32 %v939, 4294901760
        %941 = vmatpush1.msra.mxu0 %v940
        %942 = vmatprep.subr.mxu0 0.0
        %v943 = vand.u32 %v331, 4294901760
        %v944 = vsub.f32 %v331, %v943
        %v945 = vand.u32 %v944, 4294901760
        %v946 = vsub.f32 %v944, %v945
        %v947 = vand.u32 %v946, 4294901760
        %948 = vmatpush1.msra.mxu0 %v947
        %949 = vmatprep.subr.mxu0 0.0
        %v950 = vand.u32 %v332, 4294901760
        %v951 = vsub.f32 %v332, %v950
        %v952 = vand.u32 %v951, 4294901760
        %v953 = vsub.f32 %v951, %v952
        %v954 = vand.u32 %v953, 4294901760
        %955 = vmatpush1.msra.mxu0 %v954
        %956 = vmatprep.subr.mxu0 0.0
        %v957 = vand.u32 %v333, 4294901760
        %v958 = vsub.f32 %v333, %v957
        %v959 = vand.u32 %v958, 4294901760
        %v960 = vsub.f32 %v958, %v959
        %v961 = vand.u32 %v960, 4294901760
        %962 = vmatpush1.msra.mxu0 %v961
        %963 = vmatprep.subr.mxu0 0.0
        %v964 = vand.u32 %v334, 4294901760
        %v965 = vsub.f32 %v334, %v964
        %v966 = vand.u32 %v965, 4294901760
        %v967 = vsub.f32 %v965, %v966
        %v968 = vand.u32 %v967, 4294901760
        %969 = vmatpush1.msra.mxu0 %v968
        %970 = vmatprep.subr.mxu0 0.0
        %v971 = vand.u32 %v335, 4294901760
        %v972 = vsub.f32 %v335, %v971
        %v973 = vand.u32 %v972, 4294901760
        %v974 = vsub.f32 %v972, %v973
        %v975 = vand.u32 %v974, 4294901760
        %976 = vmatpush1.msra.mxu0 %v975
        %977 = vmatprep.subr.mxu0 0.0
        %v978 = vand.u32 %v336, 4294901760
        %v979 = vsub.f32 %v336, %v978
        %v980 = vand.u32 %v979, 4294901760
        %v981 = vsub.f32 %v979, %v980
        %v982 = vand.u32 %v981, 4294901760
        %983 = vmatpush1.msra.mxu0 %v982
        %984 = vmatprep.subr.mxu0 0.0
        %v985 = vand.u32 %v337, 4294901760
        %v986 = vsub.f32 %v337, %v985
        %v987 = vand.u32 %v986, 4294901760
        %v988 = vsub.f32 %v986, %v987
        %v989 = vand.u32 %v988, 4294901760
        %990 = vmatpush1.msra.mxu0 %v989
        %991 = vmatprep.subr.mxu0 0.0
        %v992 = vand.u32 %v338, 4294901760
        %v993 = vsub.f32 %v338, %v992
        %v994 = vand.u32 %v993, 4294901760
        %v995 = vsub.f32 %v993, %v994
        %v996 = vand.u32 %v995, 4294901760
        %997 = vmatpush1.msra.mxu0 %v996
        %998 = vmatprep.subr.mxu0 0.0
        %v999 = vand.u32 %v339, 4294901760
        %v1000 = vsub.f32 %v339, %v999
        %v1001 = vand.u32 %v1000, 4294901760
        %v1002 = vsub.f32 %v1000, %v1001
        %v1003 = vand.u32 %v1002, 4294901760
        %1004 = vmatpush1.msra.mxu0 %v1003
        %1005 = vmatprep.subr.mxu0 0.0
        %v1006 = vand.u32 %v340, 4294901760
        %v1007 = vsub.f32 %v340, %v1006
        %v1008 = vand.u32 %v1007, 4294901760
        %v1009 = vsub.f32 %v1007, %v1008
        %v1010 = vand.u32 %v1009, 4294901760
        %1011 = vmatpush1.msra.mxu0 %v1010
        %1012 = vmatprep.subr.mxu0 0.0
        %v1013 = vand.u32 %v341, 4294901760
        %v1014 = vsub.f32 %v341, %v1013
        %v1015 = vand.u32 %v1014, 4294901760
        %v1016 = vsub.f32 %v1014, %v1015
        %v1017 = vand.u32 %v1016, 4294901760
        %1018 = vmatpush1.msra.mxu0 %v1017
        %v1019 = vand.u32 %v197, 4294901760
        %1020 = vmatprep.mubr.f32.mxu0 %v1019
        %v1021 = vand.u32 %v196, 4294901760
        %1022 = vmatmul.mubr.f32.gmra.mrb[0].mxu0 %v1021
        %v1023 = vpop.f32.mrb[0].mxu0
        %v1024 = vadd.f32 %v522, %v1023
        %v1025 = vpop.f32.mrb[0].mxu0
        %v1026 = vand.u32 %v203, 4294901760
        %1027 = vmatprep.mubr.f32.mxu0 %v1026
        %v1028 = vand.u32 %v202, 4294901760
        %1029 = vmatmul.mubr.f32.gmra.mrb[0].mxu0 %v1028
        %v1030 = vpop.f32.mrb[0].mxu0
        %v1031 = vadd.f32 %v537, %v1030
        %v1032 = vpop.f32.mrb[0].mxu0
        %v1033 = vand.u32 %v209, 4294901760
        %1034 = vmatprep.mubr.f32.mxu0 %v1033
        %v1035 = vand.u32 %v208, 4294901760
        %1036 = vmatmul.mubr.f32.gmra.mrb[0].mxu0 %v1035
        %v1037 = vpop.f32.mrb[0].mxu0
        %v1038 = vadd.f32 %v552, %v1037
        %v1039 = vpop.f32.mrb[0].mxu0
        %v1040 = vand.u32 %v215, 4294901760
        %1041 = vmatprep.mubr.f32.mxu0 %v1040
        %v1042 = vand.u32 %v214, 4294901760
        %1043 = vmatmul.mubr.f32.gmra.mrb[0].mxu0 %v1042
        %v1044 = vpop.f32.mrb[0].mxu0
        %v1045 = vadd.f32 %v567, %v1044
        %v1046 = vpop.f32.mrb[0].mxu0
        %v1047 = vand.u32 %v221, 4294901760
        %1048 = vmatprep.mubr.f32.mxu0 %v1047
        %v1049 = vand.u32 %v220, 4294901760
        %1050 = vmatmul.mubr.f32.gmra.mrb[0].mxu0 %v1049
        %v1051 = vpop.f32.mrb[0].mxu0
        %v1052 = vadd.f32 %v582, %v1051
        %v1053 = vpop.f32.mrb[0].mxu0
        %v1054 = vand.u32 %v227, 4294901760
        %1055 = vmatprep.mubr.f32.mxu0 %v1054
        %v1056 = vand.u32 %v226, 4294901760
        %1057 = vmatmul.mubr.f32.gmra.mrb[0].mxu0 %v1056
        %v1058 = vpop.f32.mrb[0].mxu0
        %v1059 = vadd.f32 %v597, %v1058
        %v1060 = vpop.f32.mrb[0].mxu0
        %v1061 = vand.u32 %v233, 4294901760
        %1062 = vmatprep.mubr.f32.mxu0 %v1061
        %v1063 = vand.u32 %v232, 4294901760
        %1064 = vmatmul.mubr.f32.gmra.mrb[0].mxu0 %v1063
        %v1065 = vpop.f32.mrb[0].mxu0
        %v1066 = vadd.f32 %v612, %v1065
        %v1067 = vpop.f32.mrb[0].mxu0
        %v1068 = vand.u32 %v239, 4294901760
        %1069 = vmatprep.mubr.f32.mxu0 %v1068
        %v1070 = vand.u32 %v238, 4294901760
        %1071 = vmatmul.mubr.f32.gmra.mrb[0].mxu0 %v1070
        %v1072 = vpop.f32.mrb[0].mxu0
        %v1073 = vadd.f32 %v627, %v1072
        %v1074 = vpop.f32.mrb[0].mxu0
        %v1075 = vand.u32 %v245, 4294901760
        %1076 = vmatprep.mubr.f32.mxu0 %v1075
        %v1077 = vand.u32 %v244, 4294901760
        %1078 = vmatmul.mubr.f32.gmra.mrb[0].mxu0 %v1077
        %v1079 = vpop.f32.mrb[0].mxu0
        %v1080 = vadd.f32 %v642, %v1079
        %v1081 = vpop.f32.mrb[0].mxu0
        %v1082 = vand.u32 %v251, 4294901760
        %1083 = vmatprep.mubr.f32.mxu0 %v1082
        %v1084 = vand.u32 %v250, 4294901760
        %1085 = vmatmul.mubr.f32.gmra.mrb[0].mxu0 %v1084
        %v1086 = vpop.f32.mrb[0].mxu0
        %v1087 = vadd.f32 %v657, %v1086
        %v1088 = vpop.f32.mrb[0].mxu0
        %v1089 = vand.u32 %v257, 4294901760
        %1090 = vmatprep.mubr.f32.mxu0 %v1089
        %v1091 = vand.u32 %v256, 4294901760
        %1092 = vmatmul.mubr.f32.gmra.mrb[0].mxu0 %v1091
        %v1093 = vpop.f32.mrb[0].mxu0
        %v1094 = vadd.f32 %v672, %v1093
        %v1095 = vpop.f32.mrb[0].mxu0
        %v1096 = vand.u32 %v263, 4294901760
        %1097 = vmatprep.mubr.f32.mxu0 %v1096
        %v1098 = vand.u32 %v262, 4294901760
        %1099 = vmatmul.mubr.f32.gmra.mrb[0].mxu0 %v1098
        %v1100 = vpop.f32.mrb[0].mxu0
        %v1101 = vadd.f32 %v687, %v1100
        %v1102 = vpop.f32.mrb[0].mxu0
        %v1103 = vand.u32 %v269, 4294901760
        %1104 = vmatprep.mubr.f32.mxu0 %v1103
        %v1105 = vand.u32 %v268, 4294901760
        %1106 = vmatmul.mubr.f32.gmra.mrb[0].mxu0 %v1105
        %v1107 = vpop.f32.mrb[0].mxu0
        %v1108 = vadd.f32 %v702, %v1107
        %v1109 = vpop.f32.mrb[0].mxu0
        %v1110 = vand.u32 %v275, 4294901760
        %1111 = vmatprep.mubr.f32.mxu0 %v1110
        %v1112 = vand.u32 %v274, 4294901760
        %1113 = vmatmul.mubr.f32.gmra.mrb[0].mxu0 %v1112
        %v1114 = vpop.f32.mrb[0].mxu0
        %v1115 = vadd.f32 %v717, %v1114
        %v1116 = vpop.f32.mrb[0].mxu0
        %v1117 = vand.u32 %v281, 4294901760
        %1118 = vmatprep.mubr.f32.mxu0 %v1117
        %v1119 = vand.u32 %v280, 4294901760
        %1120 = vmatmul.mubr.f32.gmra.mrb[0].mxu0 %v1119
        %v1121 = vpop.f32.mrb[0].mxu0
        %v1122 = vadd.f32 %v732, %v1121
        %v1123 = vpop.f32.mrb[0].mxu0
        %v1124 = vand.u32 %v287, 4294901760
        %1125 = vmatprep.mubr.f32.mxu0 %v1124
        %v1126 = vand.u32 %v286, 4294901760
        %1127 = vmatmul.mubr.f32.gmra.mrb[0].mxu0 %v1126
        %v1128 = vpop.f32.mrb[0].mxu0
        %v1129 = vadd.f32 %v747, %v1128
        %v1130 = vpop.f32.mrb[0].mxu0
        %v1131 = vand.u32 %v293, 4294901760
        %1132 = vmatprep.mubr.f32.mxu0 %v1131
        %v1133 = vand.u32 %v292, 4294901760
        %1134 = vmatmul.mubr.f32.gmra.mrb[0].mxu0 %v1133
        %v1135 = vpop.f32.mrb[0].mxu0
        %v1136 = vadd.f32 %v762, %v1135
        %v1137 = vpop.f32.mrb[0].mxu0
        %v1138 = vand.u32 %v299, 4294901760
        %1139 = vmatprep.mubr.f32.mxu0 %v1138
        %v1140 = vand.u32 %v298, 4294901760
        %1141 = vmatmul.mubr.f32.gmra.mrb[0].mxu0 %v1140
        %v1142 = vpop.f32.mrb[0].mxu0
        %v1143 = vadd.f32 %v777, %v1142
        %v1144 = vpop.f32.mrb[0].mxu0
        %v1145 = vand.u32 %v305, 4294901760
        %1146 = vmatprep.mubr.f32.mxu0 %v1145
        %v1147 = vand.u32 %v304, 4294901760
        %1148 = vmatmul.mubr.f32.gmra.mrb[0].mxu0 %v1147
        %v1149 = vpop.f32.mrb[0].mxu0
        %v1150 = vadd.f32 %v792, %v1149
        %v1151 = vpop.f32.mrb[0].mxu0
        %1152 = vdwg.mxu0
        %1153 = vmatprep.subr.mxu0 0.0
        %v1154 = vand.u32 %v310, 4294901760
        %v1155 = vsub.f32 %v310, %v1154
        %1156 = vmatpush1.msra.mxu0 %v1155
        %1157 = vmatprep.subr.mxu0 0.0
        %v1158 = vand.u32 %v311, 4294901760
        %v1159 = vsub.f32 %v311, %v1158
        %1160 = vmatpush1.msra.mxu0 %v1159
        %1161 = vmatprep.subr.mxu0 0.0
        %v1162 = vand.u32 %v312, 4294901760
        %v1163 = vsub.f32 %v312, %v1162
        %1164 = vmatpush1.msra.mxu0 %v1163
        %1165 = vmatprep.subr.mxu0 0.0
        %v1166 = vand.u32 %v313, 4294901760
        %v1167 = vsub.f32 %v313, %v1166
        %1168 = vmatpush1.msra.mxu0 %v1167
        %1169 = vmatprep.subr.mxu0 0.0
        %v1170 = vand.u32 %v314, 4294901760
        %v1171 = vsub.f32 %v314, %v1170
        %1172 = vmatpush1.msra.mxu0 %v1171
        %1173 = vmatprep.subr.mxu0 0.0
        %v1174 = vand.u32 %v315, 4294901760
        %v1175 = vsub.f32 %v315, %v1174
        %1176 = vmatpush1.msra.mxu0 %v1175
        %1177 = vmatprep.subr.mxu0 0.0
        %v1178 = vand.u32 %v316, 4294901760
        %v1179 = vsub.f32 %v316, %v1178
        %1180 = vmatpush1.msra.mxu0 %v1179
        %1181 = vmatprep.subr.mxu0 0.0
        %v1182 = vand.u32 %v317, 4294901760
        %v1183 = vsub.f32 %v317, %v1182
        %1184 = vmatpush1.msra.mxu0 %v1183
        %1185 = vmatprep.subr.mxu0 0.0
        %v1186 = vand.u32 %v318, 4294901760
        %v1187 = vsub.f32 %v318, %v1186
        %1188 = vmatpush1.msra.mxu0 %v1187
        %1189 = vmatprep.subr.mxu0 0.0
        %v1190 = vand.u32 %v319, 4294901760
        %v1191 = vsub.f32 %v319, %v1190
        %1192 = vmatpush1.msra.mxu0 %v1191
        %1193 = vmatprep.subr.mxu0 0.0
        %v1194 = vand.u32 %v320, 4294901760
        %v1195 = vsub.f32 %v320, %v1194
        %1196 = vmatpush1.msra.mxu0 %v1195
        %1197 = vmatprep.subr.mxu0 0.0
        %v1198 = vand.u32 %v321, 4294901760
        %v1199 = vsub.f32 %v321, %v1198
        %1200 = vmatpush1.msra.mxu0 %v1199
        %1201 = vmatprep.subr.mxu0 0.0
        %v1202 = vand.u32 %v322, 4294901760
        %v1203 = vsub.f32 %v322, %v1202
        %1204 = vmatpush1.msra.mxu0 %v1203
        %1205 = vmatprep.subr.mxu0 0.0
        %v1206 = vand.u32 %v323, 4294901760
        %v1207 = vsub.f32 %v323, %v1206
        %1208 = vmatpush1.msra.mxu0 %v1207
        %1209 = vmatprep.subr.mxu0 0.0
        %v1210 = vand.u32 %v324, 4294901760
        %v1211 = vsub.f32 %v324, %v1210
        %1212 = vmatpush1.msra.mxu0 %v1211
        %1213 = vmatprep.subr.mxu0 0.0
        %v1214 = vand.u32 %v325, 4294901760
        %v1215 = vsub.f32 %v325, %v1214
        %1216 = vmatpush1.msra.mxu0 %v1215
        %1217 = vmatprep.subr.mxu0 0.0
        %v1218 = vand.u32 %v326, 4294901760
        %v1219 = vsub.f32 %v326, %v1218
        %1220 = vmatpush1.msra.mxu0 %v1219
        %1221 = vmatprep.subr.mxu0 0.0
        %v1222 = vand.u32 %v327, 4294901760
        %v1223 = vsub.f32 %v327, %v1222
        %1224 = vmatpush1.msra.mxu0 %v1223
        %1225 = vmatprep.subr.mxu0 0.0
        %v1226 = vand.u32 %v328, 4294901760
        %v1227 = vsub.f32 %v328, %v1226
        %1228 = vmatpush1.msra.mxu0 %v1227
        %1229 = vmatprep.subr.mxu0 0.0
        %v1230 = vand.u32 %v329, 4294901760
        %v1231 = vsub.f32 %v329, %v1230
        %1232 = vmatpush1.msra.mxu0 %v1231
        %1233 = vmatprep.subr.mxu0 0.0
        %v1234 = vand.u32 %v330, 4294901760
        %v1235 = vsub.f32 %v330, %v1234
        %1236 = vmatpush1.msra.mxu0 %v1235
        %1237 = vmatprep.subr.mxu0 0.0
        %v1238 = vand.u32 %v331, 4294901760
        %v1239 = vsub.f32 %v331, %v1238
        %1240 = vmatpush1.msra.mxu0 %v1239
        %1241 = vmatprep.subr.mxu0 0.0
        %v1242 = vand.u32 %v332, 4294901760
        %v1243 = vsub.f32 %v332, %v1242
        %1244 = vmatpush1.msra.mxu0 %v1243
        %1245 = vmatprep.subr.mxu0 0.0
        %v1246 = vand.u32 %v333, 4294901760
        %v1247 = vsub.f32 %v333, %v1246
        %1248 = vmatpush1.msra.mxu0 %v1247
        %1249 = vmatprep.subr.mxu0 0.0
        %v1250 = vand.u32 %v334, 4294901760
        %v1251 = vsub.f32 %v334, %v1250
        %1252 = vmatpush1.msra.mxu0 %v1251
        %1253 = vmatprep.subr.mxu0 0.0
        %v1254 = vand.u32 %v335, 4294901760
        %v1255 = vsub.f32 %v335, %v1254
        %1256 = vmatpush1.msra.mxu0 %v1255
        %1257 = vmatprep.subr.mxu0 0.0
        %v1258 = vand.u32 %v336, 4294901760
        %v1259 = vsub.f32 %v336, %v1258
        %1260 = vmatpush1.msra.mxu0 %v1259
        %1261 = vmatprep.subr.mxu0 0.0
        %v1262 = vand.u32 %v337, 4294901760
        %v1263 = vsub.f32 %v337, %v1262
        %1264 = vmatpush1.msra.mxu0 %v1263
        %1265 = vmatprep.subr.mxu0 0.0
        %v1266 = vand.u32 %v338, 4294901760
        %v1267 = vsub.f32 %v338, %v1266
        %1268 = vmatpush1.msra.mxu0 %v1267
        %1269 = vmatprep.subr.mxu0 0.0
        %v1270 = vand.u32 %v339, 4294901760
        %v1271 = vsub.f32 %v339, %v1270
        %1272 = vmatpush1.msra.mxu0 %v1271
        %1273 = vmatprep.subr.mxu0 0.0
        %v1274 = vand.u32 %v340, 4294901760
        %v1275 = vsub.f32 %v340, %v1274
        %1276 = vmatpush1.msra.mxu0 %v1275
        %1277 = vmatprep.subr.mxu0 0.0
        %v1278 = vand.u32 %v341, 4294901760
        %v1279 = vsub.f32 %v341, %v1278
        %1280 = vmatpush1.msra.mxu0 %v1279
        %v1281 = vand.u32 %v197, 4294901760
        %v1282 = vsub.f32 %v197, %v1281
        %1283 = vmatprep.mubr.f32.mxu0 %v1282
        %v1284 = vand.u32 %v196, 4294901760
        %v1285 = vsub.f32 %v196, %v1284
        %1286 = vmatmul.mubr.f32.gmra.mrb[0].mxu0 %v1285
        %v1287 = vpop.f32.mrb[0].mxu0
        %v1288 = vadd.f32 %v1024, %v1287
        %v1289 = vpop.f32.mrb[0].mxu0
        %v1290 = vand.u32 %v203, 4294901760
        %v1291 = vsub.f32 %v203, %v1290
        %1292 = vmatprep.mubr.f32.mxu0 %v1291
        %v1293 = vand.u32 %v202, 4294901760
        %v1294 = vsub.f32 %v202, %v1293
        %1295 = vmatmul.mubr.f32.gmra.mrb[0].mxu0 %v1294
        %v1296 = vpop.f32.mrb[0].mxu0
        %v1297 = vadd.f32 %v1031, %v1296
        %v1298 = vpop.f32.mrb[0].mxu0
        %v1299 = vand.u32 %v209, 4294901760
        %v1300 = vsub.f32 %v209, %v1299
        %1301 = vmatprep.mubr.f32.mxu0 %v1300
        %v1302 = vand.u32 %v208, 4294901760
        %v1303 = vsub.f32 %v208, %v1302
        %1304 = vmatmul.mubr.f32.gmra.mrb[0].mxu0 %v1303
        %v1305 = vpop.f32.mrb[0].mxu0
        %v1306 = vadd.f32 %v1038, %v1305
        %v1307 = vpop.f32.mrb[0].mxu0
        %v1308 = vand.u32 %v215, 4294901760
        %v1309 = vsub.f32 %v215, %v1308
        %1310 = vmatprep.mubr.f32.mxu0 %v1309
        %v1311 = vand.u32 %v214, 4294901760
        %v1312 = vsub.f32 %v214, %v1311
        %1313 = vmatmul.mubr.f32.gmra.mrb[0].mxu0 %v1312
        %v1314 = vpop.f32.mrb[0].mxu0
        %v1315 = vadd.f32 %v1045, %v1314
        %v1316 = vpop.f32.mrb[0].mxu0
        %v1317 = vand.u32 %v221, 4294901760
        %v1318 = vsub.f32 %v221, %v1317
        %1319 = vmatprep.mubr.f32.mxu0 %v1318
        %v1320 = vand.u32 %v220, 4294901760
        %v1321 = vsub.f32 %v220, %v1320
        %1322 = vmatmul.mubr.f32.gmra.mrb[0].mxu0 %v1321
        %v1323 = vpop.f32.mrb[0].mxu0
        %v1324 = vadd.f32 %v1052, %v1323
        %v1325 = vpop.f32.mrb[0].mxu0
        %v1326 = vand.u32 %v227, 4294901760
        %v1327 = vsub.f32 %v227, %v1326
        %1328 = vmatprep.mubr.f32.mxu0 %v1327
        %v1329 = vand.u32 %v226, 4294901760
        %v1330 = vsub.f32 %v226, %v1329
        %1331 = vmatmul.mubr.f32.gmra.mrb[0].mxu0 %v1330
        %v1332 = vpop.f32.mrb[0].mxu0
        %v1333 = vadd.f32 %v1059, %v1332
        %v1334 = vpop.f32.mrb[0].mxu0
        %v1335 = vand.u32 %v233, 4294901760
        %v1336 = vsub.f32 %v233, %v1335
        %1337 = vmatprep.mubr.f32.mxu0 %v1336
        %v1338 = vand.u32 %v232, 4294901760
        %v1339 = vsub.f32 %v232, %v1338
        %1340 = vmatmul.mubr.f32.gmra.mrb[0].mxu0 %v1339
        %v1341 = vpop.f32.mrb[0].mxu0
        %v1342 = vadd.f32 %v1066, %v1341
        %v1343 = vpop.f32.mrb[0].mxu0
        %v1344 = vand.u32 %v239, 4294901760
        %v1345 = vsub.f32 %v239, %v1344
        %1346 = vmatprep.mubr.f32.mxu0 %v1345
        %v1347 = vand.u32 %v238, 4294901760
        %v1348 = vsub.f32 %v238, %v1347
        %1349 = vmatmul.mubr.f32.gmra.mrb[0].mxu0 %v1348
        %v1350 = vpop.f32.mrb[0].mxu0
        %v1351 = vadd.f32 %v1073, %v1350
        %v1352 = vpop.f32.mrb[0].mxu0
        %v1353 = vand.u32 %v245, 4294901760
        %v1354 = vsub.f32 %v245, %v1353
        %1355 = vmatprep.mubr.f32.mxu0 %v1354
        %v1356 = vand.u32 %v244, 4294901760
        %v1357 = vsub.f32 %v244, %v1356
        %1358 = vmatmul.mubr.f32.gmra.mrb[0].mxu0 %v1357
        %v1359 = vpop.f32.mrb[0].mxu0
        %v1360 = vadd.f32 %v1080, %v1359
        %v1361 = vpop.f32.mrb[0].mxu0
        %v1362 = vand.u32 %v251, 4294901760
        %v1363 = vsub.f32 %v251, %v1362
        %1364 = vmatprep.mubr.f32.mxu0 %v1363
        %v1365 = vand.u32 %v250, 4294901760
        %v1366 = vsub.f32 %v250, %v1365
        %1367 = vmatmul.mubr.f32.gmra.mrb[0].mxu0 %v1366
        %v1368 = vpop.f32.mrb[0].mxu0
        %v1369 = vadd.f32 %v1087, %v1368
        %v1370 = vpop.f32.mrb[0].mxu0
        %v1371 = vand.u32 %v257, 4294901760
        %v1372 = vsub.f32 %v257, %v1371
        %1373 = vmatprep.mubr.f32.mxu0 %v1372
        %v1374 = vand.u32 %v256, 4294901760
        %v1375 = vsub.f32 %v256, %v1374
        %1376 = vmatmul.mubr.f32.gmra.mrb[0].mxu0 %v1375
        %v1377 = vpop.f32.mrb[0].mxu0
        %v1378 = vadd.f32 %v1094, %v1377
        %v1379 = vpop.f32.mrb[0].mxu0
        %v1380 = vand.u32 %v263, 4294901760
        %v1381 = vsub.f32 %v263, %v1380
        %1382 = vmatprep.mubr.f32.mxu0 %v1381
        %v1383 = vand.u32 %v262, 4294901760
        %v1384 = vsub.f32 %v262, %v1383
        %1385 = vmatmul.mubr.f32.gmra.mrb[0].mxu0 %v1384
        %v1386 = vpop.f32.mrb[0].mxu0
        %v1387 = vadd.f32 %v1101, %v1386
        %v1388 = vpop.f32.mrb[0].mxu0
        %v1389 = vand.u32 %v269, 4294901760
        %v1390 = vsub.f32 %v269, %v1389
        %1391 = vmatprep.mubr.f32.mxu0 %v1390
        %v1392 = vand.u32 %v268, 4294901760
        %v1393 = vsub.f32 %v268, %v1392
        %1394 = vmatmul.mubr.f32.gmra.mrb[0].mxu0 %v1393
        %v1395 = vpop.f32.mrb[0].mxu0
        %v1396 = vadd.f32 %v1108, %v1395
        %v1397 = vpop.f32.mrb[0].mxu0
        %v1398 = vand.u32 %v275, 4294901760
        %v1399 = vsub.f32 %v275, %v1398
        %1400 = vmatprep.mubr.f32.mxu0 %v1399
        %v1401 = vand.u32 %v274, 4294901760
        %v1402 = vsub.f32 %v274, %v1401
        %1403 = vmatmul.mubr.f32.gmra.mrb[0].mxu0 %v1402
        %v1404 = vpop.f32.mrb[0].mxu0
        %v1405 = vadd.f32 %v1115, %v1404
        %v1406 = vpop.f32.mrb[0].mxu0
        %v1407 = vand.u32 %v281, 4294901760
        %v1408 = vsub.f32 %v281, %v1407
        %1409 = vmatprep.mubr.f32.mxu0 %v1408
        %v1410 = vand.u32 %v280, 4294901760
        %v1411 = vsub.f32 %v280, %v1410
        %1412 = vmatmul.mubr.f32.gmra.mrb[0].mxu0 %v1411
        %v1413 = vpop.f32.mrb[0].mxu0
        %v1414 = vadd.f32 %v1122, %v1413
        %v1415 = vpop.f32.mrb[0].mxu0
        %v1416 = vand.u32 %v287, 4294901760
        %v1417 = vsub.f32 %v287, %v1416
        %1418 = vmatprep.mubr.f32.mxu0 %v1417
        %v1419 = vand.u32 %v286, 4294901760
        %v1420 = vsub.f32 %v286, %v1419
        %1421 = vmatmul.mubr.f32.gmra.mrb[0].mxu0 %v1420
        %v1422 = vpop.f32.mrb[0].mxu0
        %v1423 = vadd.f32 %v1129, %v1422
        %v1424 = vpop.f32.mrb[0].mxu0
        %v1425 = vand.u32 %v293, 4294901760
        %v1426 = vsub.f32 %v293, %v1425
        %1427 = vmatprep.mubr.f32.mxu0 %v1426
        %v1428 = vand.u32 %v292, 4294901760
        %v1429 = vsub.f32 %v292, %v1428
        %1430 = vmatmul.mubr.f32.gmra.mrb[0].mxu0 %v1429
        %v1431 = vpop.f32.mrb[0].mxu0
        %v1432 = vadd.f32 %v1136, %v1431
        %v1433 = vpop.f32.mrb[0].mxu0
        %v1434 = vand.u32 %v299, 4294901760
        %v1435 = vsub.f32 %v299, %v1434
        %1436 = vmatprep.mubr.f32.mxu0 %v1435
        %v1437 = vand.u32 %v298, 4294901760
        %v1438 = vsub.f32 %v298, %v1437
        %1439 = vmatmul.mubr.f32.gmra.mrb[0].mxu0 %v1438
        %v1440 = vpop.f32.mrb[0].mxu0
        %v1441 = vadd.f32 %v1143, %v1440
        %v1442 = vpop.f32.mrb[0].mxu0
        %v1443 = vand.u32 %v305, 4294901760
        %v1444 = vsub.f32 %v305, %v1443
        %1445 = vmatprep.mubr.f32.mxu0 %v1444
        %v1446 = vand.u32 %v304, 4294901760
        %v1447 = vsub.f32 %v304, %v1446
        %1448 = vmatmul.mubr.f32.gmra.mrb[0].mxu0 %v1447
        %v1449 = vpop.f32.mrb[0].mxu0
        %v1450 = vadd.f32 %v1150, %v1449
        %v1451 = vpop.f32.mrb[0].mxu0
        %1452 = vdwg.mxu0
        %1453 = vmatprep.subr.mxu0 0.0
        %v1454 = vand.u32 %v310, 4294901760
        %1455 = vmatpush1.msra.mxu0 %v1454
        %1456 = vmatprep.subr.mxu0 0.0
        %v1457 = vand.u32 %v311, 4294901760
        %1458 = vmatpush1.msra.mxu0 %v1457
        %1459 = vmatprep.subr.mxu0 0.0
        %v1460 = vand.u32 %v312, 4294901760
        %1461 = vmatpush1.msra.mxu0 %v1460
        %1462 = vmatprep.subr.mxu0 0.0
        %v1463 = vand.u32 %v313, 4294901760
        %1464 = vmatpush1.msra.mxu0 %v1463
        %1465 = vmatprep.subr.mxu0 0.0
        %v1466 = vand.u32 %v314, 4294901760
        %1467 = vmatpush1.msra.mxu0 %v1466
        %1468 = vmatprep.subr.mxu0 0.0
        %v1469 = vand.u32 %v315, 4294901760
        %1470 = vmatpush1.msra.mxu0 %v1469
        %1471 = vmatprep.subr.mxu0 0.0
        %v1472 = vand.u32 %v316, 4294901760
        %1473 = vmatpush1.msra.mxu0 %v1472
        %1474 = vmatprep.subr.mxu0 0.0
        %v1475 = vand.u32 %v317, 4294901760
        %1476 = vmatpush1.msra.mxu0 %v1475
        %1477 = vmatprep.subr.mxu0 0.0
        %v1478 = vand.u32 %v318, 4294901760
        %1479 = vmatpush1.msra.mxu0 %v1478
        %1480 = vmatprep.subr.mxu0 0.0
        %v1481 = vand.u32 %v319, 4294901760
        %1482 = vmatpush1.msra.mxu0 %v1481
        %1483 = vmatprep.subr.mxu0 0.0
        %v1484 = vand.u32 %v320, 4294901760
        %1485 = vmatpush1.msra.mxu0 %v1484
        %1486 = vmatprep.subr.mxu0 0.0
        %v1487 = vand.u32 %v321, 4294901760
        %1488 = vmatpush1.msra.mxu0 %v1487
        %1489 = vmatprep.subr.mxu0 0.0
        %v1490 = vand.u32 %v322, 4294901760
        %1491 = vmatpush1.msra.mxu0 %v1490
        %1492 = vmatprep.subr.mxu0 0.0
        %v1493 = vand.u32 %v323, 4294901760
        %1494 = vmatpush1.msra.mxu0 %v1493
        %1495 = vmatprep.subr.mxu0 0.0
        %v1496 = vand.u32 %v324, 4294901760
        %1497 = vmatpush1.msra.mxu0 %v1496
        %1498 = vmatprep.subr.mxu0 0.0
        %v1499 = vand.u32 %v325, 4294901760
        %1500 = vmatpush1.msra.mxu0 %v1499
        %1501 = vmatprep.subr.mxu0 0.0
        %v1502 = vand.u32 %v326, 4294901760
        %1503 = vmatpush1.msra.mxu0 %v1502
        %1504 = vmatprep.subr.mxu0 0.0
        %v1505 = vand.u32 %v327, 4294901760
        %1506 = vmatpush1.msra.mxu0 %v1505
        %1507 = vmatprep.subr.mxu0 0.0
        %v1508 = vand.u32 %v328, 4294901760
        %1509 = vmatpush1.msra.mxu0 %v1508
        %1510 = vmatprep.subr.mxu0 0.0
        %v1511 = vand.u32 %v329, 4294901760
        %1512 = vmatpush1.msra.mxu0 %v1511
        %1513 = vmatprep.subr.mxu0 0.0
        %v1514 = vand.u32 %v330, 4294901760
        %1515 = vmatpush1.msra.mxu0 %v1514
        %1516 = vmatprep.subr.mxu0 0.0
        %v1517 = vand.u32 %v331, 4294901760
        %1518 = vmatpush1.msra.mxu0 %v1517
        %1519 = vmatprep.subr.mxu0 0.0
        %v1520 = vand.u32 %v332, 4294901760
        %1521 = vmatpush1.msra.mxu0 %v1520
        %1522 = vmatprep.subr.mxu0 0.0
        %v1523 = vand.u32 %v333, 4294901760
        %1524 = vmatpush1.msra.mxu0 %v1523
        %1525 = vmatprep.subr.mxu0 0.0
        %v1526 = vand.u32 %v334, 4294901760
        %1527 = vmatpush1.msra.mxu0 %v1526
        %1528 = vmatprep.subr.mxu0 0.0
        %v1529 = vand.u32 %v335, 4294901760
        %1530 = vmatpush1.msra.mxu0 %v1529
        %1531 = vmatprep.subr.mxu0 0.0
        %v1532 = vand.u32 %v336, 4294901760
        %1533 = vmatpush1.msra.mxu0 %v1532
        %1534 = vmatprep.subr.mxu0 0.0
        %v1535 = vand.u32 %v337, 4294901760
        %1536 = vmatpush1.msra.mxu0 %v1535
        %1537 = vmatprep.subr.mxu0 0.0
        %v1538 = vand.u32 %v338, 4294901760
        %1539 = vmatpush1.msra.mxu0 %v1538
        %1540 = vmatprep.subr.mxu0 0.0
        %v1541 = vand.u32 %v339, 4294901760
        %1542 = vmatpush1.msra.mxu0 %v1541
        %1543 = vmatprep.subr.mxu0 0.0
        %v1544 = vand.u32 %v340, 4294901760
        %1545 = vmatpush1.msra.mxu0 %v1544
        %1546 = vmatprep.subr.mxu0 0.0
        %v1547 = vand.u32 %v341, 4294901760
        %1548 = vmatpush1.msra.mxu0 %v1547
        %v1549 = vand.u32 %v197, 4294901760
        %v1550 = vsub.f32 %v197, %v1549
        %v1551 = vand.u32 %v1550, 4294901760
        %1552 = vmatprep.mubr.f32.mxu0 %v1551
        %v1553 = vand.u32 %v196, 4294901760
        %v1554 = vsub.f32 %v196, %v1553
        %v1555 = vand.u32 %v1554, 4294901760
        %1556 = vmatmul.mubr.f32.gmra.mrb[0].mxu0 %v1555
        %v1557 = vpop.f32.mrb[0].mxu0
        %v1558 = vadd.f32 %v1288, %v1557
        %v1559 = vpop.f32.mrb[0].mxu0
        %v1560 = vand.u32 %v203, 4294901760
        %v1561 = vsub.f32 %v203, %v1560
        %v1562 = vand.u32 %v1561, 4294901760
        %1563 = vmatprep.mubr.f32.mxu0 %v1562
        %v1564 = vand.u32 %v202, 4294901760
        %v1565 = vsub.f32 %v202, %v1564
        %v1566 = vand.u32 %v1565, 4294901760
        %1567 = vmatmul.mubr.f32.gmra.mrb[0].mxu0 %v1566
        %v1568 = vpop.f32.mrb[0].mxu0
        %v1569 = vadd.f32 %v1297, %v1568
        %v1570 = vpop.f32.mrb[0].mxu0
        %v1571 = vand.u32 %v209, 4294901760
        %v1572 = vsub.f32 %v209, %v1571
        %v1573 = vand.u32 %v1572, 4294901760
        %1574 = vmatprep.mubr.f32.mxu0 %v1573
        %v1575 = vand.u32 %v208, 4294901760
        %v1576 = vsub.f32 %v208, %v1575
        %v1577 = vand.u32 %v1576, 4294901760
        %1578 = vmatmul.mubr.f32.gmra.mrb[0].mxu0 %v1577
        %v1579 = vpop.f32.mrb[0].mxu0
        %v1580 = vadd.f32 %v1306, %v1579
        %v1581 = vpop.f32.mrb[0].mxu0
        %v1582 = vand.u32 %v215, 4294901760
        %v1583 = vsub.f32 %v215, %v1582
        %v1584 = vand.u32 %v1583, 4294901760
        %1585 = vmatprep.mubr.f32.mxu0 %v1584
        %v1586 = vand.u32 %v214, 4294901760
        %v1587 = vsub.f32 %v214, %v1586
        %v1588 = vand.u32 %v1587, 4294901760
        %1589 = vmatmul.mubr.f32.gmra.mrb[0].mxu0 %v1588
        %v1590 = vpop.f32.mrb[0].mxu0
        %v1591 = vadd.f32 %v1315, %v1590
        %v1592 = vpop.f32.mrb[0].mxu0
        %v1593 = vand.u32 %v221, 4294901760
        %v1594 = vsub.f32 %v221, %v1593
        %v1595 = vand.u32 %v1594, 4294901760
        %1596 = vmatprep.mubr.f32.mxu0 %v1595
        %v1597 = vand.u32 %v220, 4294901760
        %v1598 = vsub.f32 %v220, %v1597
        %v1599 = vand.u32 %v1598, 4294901760
        %1600 = vmatmul.mubr.f32.gmra.mrb[0].mxu0 %v1599
        %v1601 = vpop.f32.mrb[0].mxu0
        %v1602 = vadd.f32 %v1324, %v1601
        %v1603 = vpop.f32.mrb[0].mxu0
        %v1604 = vand.u32 %v227, 4294901760
        %v1605 = vsub.f32 %v227, %v1604
        %v1606 = vand.u32 %v1605, 4294901760
        %1607 = vmatprep.mubr.f32.mxu0 %v1606
        %v1608 = vand.u32 %v226, 4294901760
        %v1609 = vsub.f32 %v226, %v1608
        %v1610 = vand.u32 %v1609, 4294901760
        %1611 = vmatmul.mubr.f32.gmra.mrb[0].mxu0 %v1610
        %v1612 = vpop.f32.mrb[0].mxu0
        %v1613 = vadd.f32 %v1333, %v1612
        %v1614 = vpop.f32.mrb[0].mxu0
        %v1615 = vand.u32 %v233, 4294901760
        %v1616 = vsub.f32 %v233, %v1615
        %v1617 = vand.u32 %v1616, 4294901760
        %1618 = vmatprep.mubr.f32.mxu0 %v1617
        %v1619 = vand.u32 %v232, 4294901760
        %v1620 = vsub.f32 %v232, %v1619
        %v1621 = vand.u32 %v1620, 4294901760
        %1622 = vmatmul.mubr.f32.gmra.mrb[0].mxu0 %v1621
        %v1623 = vpop.f32.mrb[0].mxu0
        %v1624 = vadd.f32 %v1342, %v1623
        %v1625 = vpop.f32.mrb[0].mxu0
        %v1626 = vand.u32 %v239, 4294901760
        %v1627 = vsub.f32 %v239, %v1626
        %v1628 = vand.u32 %v1627, 4294901760
        %1629 = vmatprep.mubr.f32.mxu0 %v1628
        %v1630 = vand.u32 %v238, 4294901760
        %v1631 = vsub.f32 %v238, %v1630
        %v1632 = vand.u32 %v1631, 4294901760
        %1633 = vmatmul.mubr.f32.gmra.mrb[0].mxu0 %v1632
        %v1634 = vpop.f32.mrb[0].mxu0
        %v1635 = vadd.f32 %v1351, %v1634
        %v1636 = vpop.f32.mrb[0].mxu0
        %v1637 = vand.u32 %v245, 4294901760
        %v1638 = vsub.f32 %v245, %v1637
        %v1639 = vand.u32 %v1638, 4294901760
        %1640 = vmatprep.mubr.f32.mxu0 %v1639
        %v1641 = vand.u32 %v244, 4294901760
        %v1642 = vsub.f32 %v244, %v1641
        %v1643 = vand.u32 %v1642, 4294901760
        %1644 = vmatmul.mubr.f32.gmra.mrb[0].mxu0 %v1643
        %v1645 = vpop.f32.mrb[0].mxu0
        %v1646 = vadd.f32 %v1360, %v1645
        %v1647 = vpop.f32.mrb[0].mxu0
        %v1648 = vand.u32 %v251, 4294901760
        %v1649 = vsub.f32 %v251, %v1648
        %v1650 = vand.u32 %v1649, 4294901760
        %1651 = vmatprep.mubr.f32.mxu0 %v1650
        %v1652 = vand.u32 %v250, 4294901760
        %v1653 = vsub.f32 %v250, %v1652
        %v1654 = vand.u32 %v1653, 4294901760
        %1655 = vmatmul.mubr.f32.gmra.mrb[0].mxu0 %v1654
        %v1656 = vpop.f32.mrb[0].mxu0
        %v1657 = vadd.f32 %v1369, %v1656
        %v1658 = vpop.f32.mrb[0].mxu0
        %v1659 = vand.u32 %v257, 4294901760
        %v1660 = vsub.f32 %v257, %v1659
        %v1661 = vand.u32 %v1660, 4294901760
        %1662 = vmatprep.mubr.f32.mxu0 %v1661
        %v1663 = vand.u32 %v256, 4294901760
        %v1664 = vsub.f32 %v256, %v1663
        %v1665 = vand.u32 %v1664, 4294901760
        %1666 = vmatmul.mubr.f32.gmra.mrb[0].mxu0 %v1665
        %v1667 = vpop.f32.mrb[0].mxu0
        %v1668 = vadd.f32 %v1378, %v1667
        %v1669 = vpop.f32.mrb[0].mxu0
        %v1670 = vand.u32 %v263, 4294901760
        %v1671 = vsub.f32 %v263, %v1670
        %v1672 = vand.u32 %v1671, 4294901760
        %1673 = vmatprep.mubr.f32.mxu0 %v1672
        %v1674 = vand.u32 %v262, 4294901760
        %v1675 = vsub.f32 %v262, %v1674
        %v1676 = vand.u32 %v1675, 4294901760
        %1677 = vmatmul.mubr.f32.gmra.mrb[0].mxu0 %v1676
        %v1678 = vpop.f32.mrb[0].mxu0
        %v1679 = vadd.f32 %v1387, %v1678
        %v1680 = vpop.f32.mrb[0].mxu0
        %v1681 = vand.u32 %v269, 4294901760
        %v1682 = vsub.f32 %v269, %v1681
        %v1683 = vand.u32 %v1682, 4294901760
        %1684 = vmatprep.mubr.f32.mxu0 %v1683
        %v1685 = vand.u32 %v268, 4294901760
        %v1686 = vsub.f32 %v268, %v1685
        %v1687 = vand.u32 %v1686, 4294901760
        %1688 = vmatmul.mubr.f32.gmra.mrb[0].mxu0 %v1687
        %v1689 = vpop.f32.mrb[0].mxu0
        %v1690 = vadd.f32 %v1396, %v1689
        %v1691 = vpop.f32.mrb[0].mxu0
        %v1692 = vand.u32 %v275, 4294901760
        %v1693 = vsub.f32 %v275, %v1692
        %v1694 = vand.u32 %v1693, 4294901760
        %1695 = vmatprep.mubr.f32.mxu0 %v1694
        %v1696 = vand.u32 %v274, 4294901760
        %v1697 = vsub.f32 %v274, %v1696
        %v1698 = vand.u32 %v1697, 4294901760
        %1699 = vmatmul.mubr.f32.gmra.mrb[0].mxu0 %v1698
        %v1700 = vpop.f32.mrb[0].mxu0
        %v1701 = vadd.f32 %v1405, %v1700
        %v1702 = vpop.f32.mrb[0].mxu0
        %v1703 = vand.u32 %v281, 4294901760
        %v1704 = vsub.f32 %v281, %v1703
        %v1705 = vand.u32 %v1704, 4294901760
        %1706 = vmatprep.mubr.f32.mxu0 %v1705
        %v1707 = vand.u32 %v280, 4294901760
        %v1708 = vsub.f32 %v280, %v1707
        %v1709 = vand.u32 %v1708, 4294901760
        %1710 = vmatmul.mubr.f32.gmra.mrb[0].mxu0 %v1709
        %v1711 = vpop.f32.mrb[0].mxu0
        %v1712 = vadd.f32 %v1414, %v1711
        %v1713 = vpop.f32.mrb[0].mxu0
        %v1714 = vand.u32 %v287, 4294901760
        %v1715 = vsub.f32 %v287, %v1714
        %v1716 = vand.u32 %v1715, 4294901760
        %1717 = vmatprep.mubr.f32.mxu0 %v1716
        %v1718 = vand.u32 %v286, 4294901760
        %v1719 = vsub.f32 %v286, %v1718
        %v1720 = vand.u32 %v1719, 4294901760
        %1721 = vmatmul.mubr.f32.gmra.mrb[0].mxu0 %v1720
        %v1722 = vpop.f32.mrb[0].mxu0
        %v1723 = vadd.f32 %v1423, %v1722
        %v1724 = vpop.f32.mrb[0].mxu0
        %v1725 = vand.u32 %v293, 4294901760
        %v1726 = vsub.f32 %v293, %v1725
        %v1727 = vand.u32 %v1726, 4294901760
        %1728 = vmatprep.mubr.f32.mxu0 %v1727
        %v1729 = vand.u32 %v292, 4294901760
        %v1730 = vsub.f32 %v292, %v1729
        %v1731 = vand.u32 %v1730, 4294901760
        %1732 = vmatmul.mubr.f32.gmra.mrb[0].mxu0 %v1731
        %v1733 = vpop.f32.mrb[0].mxu0
        %v1734 = vadd.f32 %v1432, %v1733
        %v1735 = vpop.f32.mrb[0].mxu0
        %v1736 = vand.u32 %v299, 4294901760
        %v1737 = vsub.f32 %v299, %v1736
        %v1738 = vand.u32 %v1737, 4294901760
        %1739 = vmatprep.mubr.f32.mxu0 %v1738
        %v1740 = vand.u32 %v298, 4294901760
        %v1741 = vsub.f32 %v298, %v1740
        %v1742 = vand.u32 %v1741, 4294901760
        %1743 = vmatmul.mubr.f32.gmra.mrb[0].mxu0 %v1742
        %v1744 = vpop.f32.mrb[0].mxu0
        %v1745 = vadd.f32 %v1441, %v1744
        %v1746 = vpop.f32.mrb[0].mxu0
        %v1747 = vand.u32 %v305, 4294901760
        %v1748 = vsub.f32 %v305, %v1747
        %v1749 = vand.u32 %v1748, 4294901760
        %1750 = vmatprep.mubr.f32.mxu0 %v1749
        %v1751 = vand.u32 %v304, 4294901760
        %v1752 = vsub.f32 %v304, %v1751
        %v1753 = vand.u32 %v1752, 4294901760
        %1754 = vmatmul.mubr.f32.gmra.mrb[0].mxu0 %v1753
        %v1755 = vpop.f32.mrb[0].mxu0
        %v1756 = vadd.f32 %v1450, %v1755
        %v1757 = vpop.f32.mrb[0].mxu0
        %1758 = vdwg.mxu0
        %1759 = vmatprep.subr.mxu0 0.0
        %v1760 = vand.u32 %v310, 4294901760
        %v1761 = vsub.f32 %v310, %v1760
        %v1762 = vand.u32 %v1761, 4294901760
        %1763 = vmatpush1.msra.mxu0 %v1762
        %1764 = vmatprep.subr.mxu0 0.0
        %v1765 = vand.u32 %v311, 4294901760
        %v1766 = vsub.f32 %v311, %v1765
        %v1767 = vand.u32 %v1766, 4294901760
        %1768 = vmatpush1.msra.mxu0 %v1767
        %1769 = vmatprep.subr.mxu0 0.0
        %v1770 = vand.u32 %v312, 4294901760
        %v1771 = vsub.f32 %v312, %v1770
        %v1772 = vand.u32 %v1771, 4294901760
        %1773 = vmatpush1.msra.mxu0 %v1772
        %1774 = vmatprep.subr.mxu0 0.0
        %v1775 = vand.u32 %v313, 4294901760
        %v1776 = vsub.f32 %v313, %v1775
        %v1777 = vand.u32 %v1776, 4294901760
        %1778 = vmatpush1.msra.mxu0 %v1777
        %1779 = vmatprep.subr.mxu0 0.0
        %v1780 = vand.u32 %v314, 4294901760
        %v1781 = vsub.f32 %v314, %v1780
        %v1782 = vand.u32 %v1781, 4294901760
        %1783 = vmatpush1.msra.mxu0 %v1782
        %1784 = vmatprep.subr.mxu0 0.0
        %v1785 = vand.u32 %v315, 4294901760
        %v1786 = vsub.f32 %v315, %v1785
        %v1787 = vand.u32 %v1786, 4294901760
        %1788 = vmatpush1.msra.mxu0 %v1787
        %1789 = vmatprep.subr.mxu0 0.0
        %v1790 = vand.u32 %v316, 4294901760
        %v1791 = vsub.f32 %v316, %v1790
        %v1792 = vand.u32 %v1791, 4294901760
        %1793 = vmatpush1.msra.mxu0 %v1792
        %1794 = vmatprep.subr.mxu0 0.0
        %v1795 = vand.u32 %v317, 4294901760
        %v1796 = vsub.f32 %v317, %v1795
        %v1797 = vand.u32 %v1796, 4294901760
        %1798 = vmatpush1.msra.mxu0 %v1797
        %1799 = vmatprep.subr.mxu0 0.0
        %v1800 = vand.u32 %v318, 4294901760
        %v1801 = vsub.f32 %v318, %v1800
        %v1802 = vand.u32 %v1801, 4294901760
        %1803 = vmatpush1.msra.mxu0 %v1802
        %1804 = vmatprep.subr.mxu0 0.0
        %v1805 = vand.u32 %v319, 4294901760
        %v1806 = vsub.f32 %v319, %v1805
        %v1807 = vand.u32 %v1806, 4294901760
        %1808 = vmatpush1.msra.mxu0 %v1807
        %1809 = vmatprep.subr.mxu0 0.0
        %v1810 = vand.u32 %v320, 4294901760
        %v1811 = vsub.f32 %v320, %v1810
        %v1812 = vand.u32 %v1811, 4294901760
        %1813 = vmatpush1.msra.mxu0 %v1812
        %1814 = vmatprep.subr.mxu0 0.0
        %v1815 = vand.u32 %v321, 4294901760
        %v1816 = vsub.f32 %v321, %v1815
        %v1817 = vand.u32 %v1816, 4294901760
        %1818 = vmatpush1.msra.mxu0 %v1817
        %1819 = vmatprep.subr.mxu0 0.0
        %v1820 = vand.u32 %v322, 4294901760
        %v1821 = vsub.f32 %v322, %v1820
        %v1822 = vand.u32 %v1821, 4294901760
        %1823 = vmatpush1.msra.mxu0 %v1822
        %1824 = vmatprep.subr.mxu0 0.0
        %v1825 = vand.u32 %v323, 4294901760
        %v1826 = vsub.f32 %v323, %v1825
        %v1827 = vand.u32 %v1826, 4294901760
        %1828 = vmatpush1.msra.mxu0 %v1827
        %1829 = vmatprep.subr.mxu0 0.0
        %v1830 = vand.u32 %v324, 4294901760
        %v1831 = vsub.f32 %v324, %v1830
        %v1832 = vand.u32 %v1831, 4294901760
        %1833 = vmatpush1.msra.mxu0 %v1832
        %1834 = vmatprep.subr.mxu0 0.0
        %v1835 = vand.u32 %v325, 4294901760
        %v1836 = vsub.f32 %v325, %v1835
        %v1837 = vand.u32 %v1836, 4294901760
        %1838 = vmatpush1.msra.mxu0 %v1837
        %1839 = vmatprep.subr.mxu0 0.0
        %v1840 = vand.u32 %v326, 4294901760
        %v1841 = vsub.f32 %v326, %v1840
        %v1842 = vand.u32 %v1841, 4294901760
        %1843 = vmatpush1.msra.mxu0 %v1842
        %1844 = vmatprep.subr.mxu0 0.0
        %v1845 = vand.u32 %v327, 4294901760
        %v1846 = vsub.f32 %v327, %v1845
        %v1847 = vand.u32 %v1846, 4294901760
        %1848 = vmatpush1.msra.mxu0 %v1847
        %1849 = vmatprep.subr.mxu0 0.0
        %v1850 = vand.u32 %v328, 4294901760
        %v1851 = vsub.f32 %v328, %v1850
        %v1852 = vand.u32 %v1851, 4294901760
        %1853 = vmatpush1.msra.mxu0 %v1852
        %1854 = vmatprep.subr.mxu0 0.0
        %v1855 = vand.u32 %v329, 4294901760
        %v1856 = vsub.f32 %v329, %v1855
        %v1857 = vand.u32 %v1856, 4294901760
        %1858 = vmatpush1.msra.mxu0 %v1857
        %1859 = vmatprep.subr.mxu0 0.0
        %v1860 = vand.u32 %v330, 4294901760
        %v1861 = vsub.f32 %v330, %v1860
        %v1862 = vand.u32 %v1861, 4294901760
        %1863 = vmatpush1.msra.mxu0 %v1862
        %1864 = vmatprep.subr.mxu0 0.0
        %v1865 = vand.u32 %v331, 4294901760
        %v1866 = vsub.f32 %v331, %v1865
        %v1867 = vand.u32 %v1866, 4294901760
        %1868 = vmatpush1.msra.mxu0 %v1867
        %1869 = vmatprep.subr.mxu0 0.0
        %v1870 = vand.u32 %v332, 4294901760
        %v1871 = vsub.f32 %v332, %v1870
        %v1872 = vand.u32 %v1871, 4294901760
        %1873 = vmatpush1.msra.mxu0 %v1872
        %1874 = vmatprep.subr.mxu0 0.0
        %v1875 = vand.u32 %v333, 4294901760
        %v1876 = vsub.f32 %v333, %v1875
        %v1877 = vand.u32 %v1876, 4294901760
        %1878 = vmatpush1.msra.mxu0 %v1877
        %1879 = vmatprep.subr.mxu0 0.0
        %v1880 = vand.u32 %v334, 4294901760
        %v1881 = vsub.f32 %v334, %v1880
        %v1882 = vand.u32 %v1881, 4294901760
        %1883 = vmatpush1.msra.mxu0 %v1882
        %1884 = vmatprep.subr.mxu0 0.0
        %v1885 = vand.u32 %v335, 4294901760
        %v1886 = vsub.f32 %v335, %v1885
        %v1887 = vand.u32 %v1886, 4294901760
        %1888 = vmatpush1.msra.mxu0 %v1887
        %1889 = vmatprep.subr.mxu0 0.0
        %v1890 = vand.u32 %v336, 4294901760
        %v1891 = vsub.f32 %v336, %v1890
        %v1892 = vand.u32 %v1891, 4294901760
        %1893 = vmatpush1.msra.mxu0 %v1892
        %1894 = vmatprep.subr.mxu0 0.0
        %v1895 = vand.u32 %v337, 4294901760
        %v1896 = vsub.f32 %v337, %v1895
        %v1897 = vand.u32 %v1896, 4294901760
        %1898 = vmatpush1.msra.mxu0 %v1897
        %1899 = vmatprep.subr.mxu0 0.0
        %v1900 = vand.u32 %v338, 4294901760
        %v1901 = vsub.f32 %v338, %v1900
        %v1902 = vand.u32 %v1901, 4294901760
        %1903 = vmatpush1.msra.mxu0 %v1902
        %1904 = vmatprep.subr.mxu0 0.0
        %v1905 = vand.u32 %v339, 4294901760
        %v1906 = vsub.f32 %v339, %v1905
        %v1907 = vand.u32 %v1906, 4294901760
        %1908 = vmatpush1.msra.mxu0 %v1907
        %1909 = vmatprep.subr.mxu0 0.0
        %v1910 = vand.u32 %v340, 4294901760
        %v1911 = vsub.f32 %v340, %v1910
        %v1912 = vand.u32 %v1911, 4294901760
        %1913 = vmatpush1.msra.mxu0 %v1912
        %1914 = vmatprep.subr.mxu0 0.0
        %v1915 = vand.u32 %v341, 4294901760
        %v1916 = vsub.f32 %v341, %v1915
        %v1917 = vand.u32 %v1916, 4294901760
        %1918 = vmatpush1.msra.mxu0 %v1917
        %v1919 = vand.u32 %v197, 4294901760
        %1920 = vmatprep.mubr.f32.mxu0 %v1919
        %v1921 = vand.u32 %v196, 4294901760
        %1922 = vmatmul.mubr.f32.gmra.mrb[0].mxu0 %v1921
        %v1923 = vpop.f32.mrb[0].mxu0
        %v1924 = vadd.f32 %v1558, %v1923
        %v1925 = vpop.f32.mrb[0].mxu0
        %v1926 = vand.u32 %v203, 4294901760
        %1927 = vmatprep.mubr.f32.mxu0 %v1926
        %v1928 = vand.u32 %v202, 4294901760
        %1929 = vmatmul.mubr.f32.gmra.mrb[0].mxu0 %v1928
        %v1930 = vpop.f32.mrb[0].mxu0
        %v1931 = vadd.f32 %v1569, %v1930
        %v1932 = vpop.f32.mrb[0].mxu0
        %v1933 = vand.u32 %v209, 4294901760
        %1934 = vmatprep.mubr.f32.mxu0 %v1933
        %v1935 = vand.u32 %v208, 4294901760
        %1936 = vmatmul.mubr.f32.gmra.mrb[0].mxu0 %v1935
        %v1937 = vpop.f32.mrb[0].mxu0
        %v1938 = vadd.f32 %v1580, %v1937
        %v1939 = vpop.f32.mrb[0].mxu0
        %v1940 = vand.u32 %v215, 4294901760
        %1941 = vmatprep.mubr.f32.mxu0 %v1940
        %v1942 = vand.u32 %v214, 4294901760
        %1943 = vmatmul.mubr.f32.gmra.mrb[0].mxu0 %v1942
        %v1944 = vpop.f32.mrb[0].mxu0
        %v1945 = vadd.f32 %v1591, %v1944
        %v1946 = vpop.f32.mrb[0].mxu0
        %v1947 = vand.u32 %v221, 4294901760
        %1948 = vmatprep.mubr.f32.mxu0 %v1947
        %v1949 = vand.u32 %v220, 4294901760
        %1950 = vmatmul.mubr.f32.gmra.mrb[0].mxu0 %v1949
        %v1951 = vpop.f32.mrb[0].mxu0
        %v1952 = vadd.f32 %v1602, %v1951
        %v1953 = vpop.f32.mrb[0].mxu0
        %v1954 = vand.u32 %v227, 4294901760
        %1955 = vmatprep.mubr.f32.mxu0 %v1954
        %v1956 = vand.u32 %v226, 4294901760
        %1957 = vmatmul.mubr.f32.gmra.mrb[0].mxu0 %v1956
        %v1958 = vpop.f32.mrb[0].mxu0
        %v1959 = vadd.f32 %v1613, %v1958
        %v1960 = vpop.f32.mrb[0].mxu0
        %v1961 = vand.u32 %v233, 4294901760
        %1962 = vmatprep.mubr.f32.mxu0 %v1961
        %v1963 = vand.u32 %v232, 4294901760
        %1964 = vmatmul.mubr.f32.gmra.mrb[0].mxu0 %v1963
        %v1965 = vpop.f32.mrb[0].mxu0
        %v1966 = vadd.f32 %v1624, %v1965
        %v1967 = vpop.f32.mrb[0].mxu0
        %v1968 = vand.u32 %v239, 4294901760
        %1969 = vmatprep.mubr.f32.mxu0 %v1968
        %v1970 = vand.u32 %v238, 4294901760
        %1971 = vmatmul.mubr.f32.gmra.mrb[0].mxu0 %v1970
        %v1972 = vpop.f32.mrb[0].mxu0
        %v1973 = vadd.f32 %v1635, %v1972
        %v1974 = vpop.f32.mrb[0].mxu0
        %v1975 = vand.u32 %v245, 4294901760
        %1976 = vmatprep.mubr.f32.mxu0 %v1975
        %v1977 = vand.u32 %v244, 4294901760
        %1978 = vmatmul.mubr.f32.gmra.mrb[0].mxu0 %v1977
        %v1979 = vpop.f32.mrb[0].mxu0
        %v1980 = vadd.f32 %v1646, %v1979
        %v1981 = vpop.f32.mrb[0].mxu0
        %v1982 = vand.u32 %v251, 4294901760
        %1983 = vmatprep.mubr.f32.mxu0 %v1982
        %v1984 = vand.u32 %v250, 4294901760
        %1985 = vmatmul.mubr.f32.gmra.mrb[0].mxu0 %v1984
        %v1986 = vpop.f32.mrb[0].mxu0
        %v1987 = vadd.f32 %v1657, %v1986
        %v1988 = vpop.f32.mrb[0].mxu0
        %v1989 = vand.u32 %v257, 4294901760
        %1990 = vmatprep.mubr.f32.mxu0 %v1989
        %v1991 = vand.u32 %v256, 4294901760
        %1992 = vmatmul.mubr.f32.gmra.mrb[0].mxu0 %v1991
        %v1993 = vpop.f32.mrb[0].mxu0
        %v1994 = vadd.f32 %v1668, %v1993
        %v1995 = vpop.f32.mrb[0].mxu0
        %v1996 = vand.u32 %v263, 4294901760
        %1997 = vmatprep.mubr.f32.mxu0 %v1996
        %v1998 = vand.u32 %v262, 4294901760
        %1999 = vmatmul.mubr.f32.gmra.mrb[0].mxu0 %v1998
        %v2000 = vpop.f32.mrb[0].mxu0
        %v2001 = vadd.f32 %v1679, %v2000
        %v2002 = vpop.f32.mrb[0].mxu0
        %v2003 = vand.u32 %v269, 4294901760
        %2004 = vmatprep.mubr.f32.mxu0 %v2003
        %v2005 = vand.u32 %v268, 4294901760
        %2006 = vmatmul.mubr.f32.gmra.mrb[0].mxu0 %v2005
        %v2007 = vpop.f32.mrb[0].mxu0
        %v2008 = vadd.f32 %v1690, %v2007
        %v2009 = vpop.f32.mrb[0].mxu0
        %v2010 = vand.u32 %v275, 4294901760
        %2011 = vmatprep.mubr.f32.mxu0 %v2010
        %v2012 = vand.u32 %v274, 4294901760
        %2013 = vmatmul.mubr.f32.gmra.mrb[0].mxu0 %v2012
        %v2014 = vpop.f32.mrb[0].mxu0
        %v2015 = vadd.f32 %v1701, %v2014
        %v2016 = vpop.f32.mrb[0].mxu0
        %v2017 = vand.u32 %v281, 4294901760
        %2018 = vmatprep.mubr.f32.mxu0 %v2017
        %v2019 = vand.u32 %v280, 4294901760
        %2020 = vmatmul.mubr.f32.gmra.mrb[0].mxu0 %v2019
        %v2021 = vpop.f32.mrb[0].mxu0
        %v2022 = vadd.f32 %v1712, %v2021
        %v2023 = vpop.f32.mrb[0].mxu0
        %v2024 = vand.u32 %v287, 4294901760
        %2025 = vmatprep.mubr.f32.mxu0 %v2024
        %v2026 = vand.u32 %v286, 4294901760
        %2027 = vmatmul.mubr.f32.gmra.mrb[0].mxu0 %v2026
        %v2028 = vpop.f32.mrb[0].mxu0
        %v2029 = vadd.f32 %v1723, %v2028
        %v2030 = vpop.f32.mrb[0].mxu0
        %v2031 = vand.u32 %v293, 4294901760
        %2032 = vmatprep.mubr.f32.mxu0 %v2031
        %v2033 = vand.u32 %v292, 4294901760
        %2034 = vmatmul.mubr.f32.gmra.mrb[0].mxu0 %v2033
        %v2035 = vpop.f32.mrb[0].mxu0
        %v2036 = vadd.f32 %v1734, %v2035
        %v2037 = vpop.f32.mrb[0].mxu0
        %v2038 = vand.u32 %v299, 4294901760
        %2039 = vmatprep.mubr.f32.mxu0 %v2038
        %v2040 = vand.u32 %v298, 4294901760
        %2041 = vmatmul.mubr.f32.gmra.mrb[0].mxu0 %v2040
        %v2042 = vpop.f32.mrb[0].mxu0
        %v2043 = vadd.f32 %v1745, %v2042
        %v2044 = vpop.f32.mrb[0].mxu0
        %v2045 = vand.u32 %v305, 4294901760
        %2046 = vmatprep.mubr.f32.mxu0 %v2045
        %v2047 = vand.u32 %v304, 4294901760
        %2048 = vmatmul.mubr.f32.gmra.mrb[0].mxu0 %v2047
        %v2049 = vpop.f32.mrb[0].mxu0
        %v2050 = vadd.f32 %v1756, %v2049
        %v2051 = vpop.f32.mrb[0].mxu0
        %2052 = vdwg.mxu0
        %2053 = vmatprep.subr.mxu0 0.0
        %v2054 = vand.u32 %v310, 4294901760
        %2055 = vmatpush1.msra.mxu0 %v2054
        %2056 = vmatprep.subr.mxu0 0.0
        %v2057 = vand.u32 %v311, 4294901760
        %2058 = vmatpush1.msra.mxu0 %v2057
        %2059 = vmatprep.subr.mxu0 0.0
        %v2060 = vand.u32 %v312, 4294901760
        %2061 = vmatpush1.msra.mxu0 %v2060
        %2062 = vmatprep.subr.mxu0 0.0
        %v2063 = vand.u32 %v313, 4294901760
        %2064 = vmatpush1.msra.mxu0 %v2063
        %2065 = vmatprep.subr.mxu0 0.0
        %v2066 = vand.u32 %v314, 4294901760
        %2067 = vmatpush1.msra.mxu0 %v2066
        %2068 = vmatprep.subr.mxu0 0.0
        %v2069 = vand.u32 %v315, 4294901760
        %2070 = vmatpush1.msra.mxu0 %v2069
        %2071 = vmatprep.subr.mxu0 0.0
        %v2072 = vand.u32 %v316, 4294901760
        %2073 = vmatpush1.msra.mxu0 %v2072
        %2074 = vmatprep.subr.mxu0 0.0
        %v2075 = vand.u32 %v317, 4294901760
        %2076 = vmatpush1.msra.mxu0 %v2075
        %2077 = vmatprep.subr.mxu0 0.0
        %v2078 = vand.u32 %v318, 4294901760
        %2079 = vmatpush1.msra.mxu0 %v2078
        %2080 = vmatprep.subr.mxu0 0.0
        %v2081 = vand.u32 %v319, 4294901760
        %2082 = vmatpush1.msra.mxu0 %v2081
        %2083 = vmatprep.subr.mxu0 0.0
        %v2084 = vand.u32 %v320, 4294901760
        %2085 = vmatpush1.msra.mxu0 %v2084
        %2086 = vmatprep.subr.mxu0 0.0
        %v2087 = vand.u32 %v321, 4294901760
        %2088 = vmatpush1.msra.mxu0 %v2087
        %2089 = vmatprep.subr.mxu0 0.0
        %v2090 = vand.u32 %v322, 4294901760
        %2091 = vmatpush1.msra.mxu0 %v2090
        %2092 = vmatprep.subr.mxu0 0.0
        %v2093 = vand.u32 %v323, 4294901760
        %2094 = vmatpush1.msra.mxu0 %v2093
        %2095 = vmatprep.subr.mxu0 0.0
        %v2096 = vand.u32 %v324, 4294901760
        %2097 = vmatpush1.msra.mxu0 %v2096
        %2098 = vmatprep.subr.mxu0 0.0
        %v2099 = vand.u32 %v325, 4294901760
        %2100 = vmatpush1.msra.mxu0 %v2099
        %2101 = vmatprep.subr.mxu0 0.0
        %v2102 = vand.u32 %v326, 4294901760
        %2103 = vmatpush1.msra.mxu0 %v2102
        %2104 = vmatprep.subr.mxu0 0.0
        %v2105 = vand.u32 %v327, 4294901760
        %2106 = vmatpush1.msra.mxu0 %v2105
        %2107 = vmatprep.subr.mxu0 0.0
        %v2108 = vand.u32 %v328, 4294901760
        %2109 = vmatpush1.msra.mxu0 %v2108
        %2110 = vmatprep.subr.mxu0 0.0
        %v2111 = vand.u32 %v329, 4294901760
        %2112 = vmatpush1.msra.mxu0 %v2111
        %2113 = vmatprep.subr.mxu0 0.0
        %v2114 = vand.u32 %v330, 4294901760
        %2115 = vmatpush1.msra.mxu0 %v2114
        %2116 = vmatprep.subr.mxu0 0.0
        %v2117 = vand.u32 %v331, 4294901760
        %2118 = vmatpush1.msra.mxu0 %v2117
        %2119 = vmatprep.subr.mxu0 0.0
        %v2120 = vand.u32 %v332, 4294901760
        %2121 = vmatpush1.msra.mxu0 %v2120
        %2122 = vmatprep.subr.mxu0 0.0
        %v2123 = vand.u32 %v333, 4294901760
        %2124 = vmatpush1.msra.mxu0 %v2123
        %2125 = vmatprep.subr.mxu0 0.0
        %v2126 = vand.u32 %v334, 4294901760
        %2127 = vmatpush1.msra.mxu0 %v2126
        %2128 = vmatprep.subr.mxu0 0.0
        %v2129 = vand.u32 %v335, 4294901760
        %2130 = vmatpush1.msra.mxu0 %v2129
        %2131 = vmatprep.subr.mxu0 0.0
        %v2132 = vand.u32 %v336, 4294901760
        %2133 = vmatpush1.msra.mxu0 %v2132
        %2134 = vmatprep.subr.mxu0 0.0
        %v2135 = vand.u32 %v337, 4294901760
        %2136 = vmatpush1.msra.mxu0 %v2135
        %2137 = vmatprep.subr.mxu0 0.0
        %v2138 = vand.u32 %v338, 4294901760
        %2139 = vmatpush1.msra.mxu0 %v2138
        %2140 = vmatprep.subr.mxu0 0.0
        %v2141 = vand.u32 %v339, 4294901760
        %2142 = vmatpush1.msra.mxu0 %v2141
        %2143 = vmatprep.subr.mxu0 0.0
        %v2144 = vand.u32 %v340, 4294901760
        %2145 = vmatpush1.msra.mxu0 %v2144
        %2146 = vmatprep.subr.mxu0 0.0
        %v2147 = vand.u32 %v341, 4294901760
        %2148 = vmatpush1.msra.mxu0 %v2147
        %v2149 = vand.u32 %v197, 4294901760
        %2150 = vmatprep.mubr.f32.mxu0 %v2149
        %v2151 = vand.u32 %v196, 4294901760
        %2152 = vmatmul.mubr.f32.gmra.mrb[0].mxu0 %v2151
        %v2153 = vpop.f32.mrb[0].mxu0
        %v2154 = vadd.f32 %v1924, %v2153
        %v2155 = vpop.f32.mrb[0].mxu0
        %v2156 = vand.u32 %v203, 4294901760
        %2157 = vmatprep.mubr.f32.mxu0 %v2156
        %v2158 = vand.u32 %v202, 4294901760
        %2159 = vmatmul.mubr.f32.gmra.mrb[0].mxu0 %v2158
        %v2160 = vpop.f32.mrb[0].mxu0
        %v2161 = vadd.f32 %v1931, %v2160
        %v2162 = vpop.f32.mrb[0].mxu0
        %v2163 = vand.u32 %v209, 4294901760
        %2164 = vmatprep.mubr.f32.mxu0 %v2163
        %v2165 = vand.u32 %v208, 4294901760
        %2166 = vmatmul.mubr.f32.gmra.mrb[0].mxu0 %v2165
        %v2167 = vpop.f32.mrb[0].mxu0
        %v2168 = vadd.f32 %v1938, %v2167
        %v2169 = vpop.f32.mrb[0].mxu0
        %v2170 = vand.u32 %v215, 4294901760
        %2171 = vmatprep.mubr.f32.mxu0 %v2170
        %v2172 = vand.u32 %v214, 4294901760
        %2173 = vmatmul.mubr.f32.gmra.mrb[0].mxu0 %v2172
        %v2174 = vpop.f32.mrb[0].mxu0
        %v2175 = vadd.f32 %v1945, %v2174
        %v2176 = vpop.f32.mrb[0].mxu0
        %v2177 = vand.u32 %v221, 4294901760
        %2178 = vmatprep.mubr.f32.mxu0 %v2177
        %v2179 = vand.u32 %v220, 4294901760
        %2180 = vmatmul.mubr.f32.gmra.mrb[0].mxu0 %v2179
        %v2181 = vpop.f32.mrb[0].mxu0
        %v2182 = vadd.f32 %v1952, %v2181
        %v2183 = vpop.f32.mrb[0].mxu0
        %v2184 = vand.u32 %v227, 4294901760
        %2185 = vmatprep.mubr.f32.mxu0 %v2184
        %v2186 = vand.u32 %v226, 4294901760
        %2187 = vmatmul.mubr.f32.gmra.mrb[0].mxu0 %v2186
        %v2188 = vpop.f32.mrb[0].mxu0
        %v2189 = vadd.f32 %v1959, %v2188
        %v2190 = vpop.f32.mrb[0].mxu0
        %v2191 = vand.u32 %v233, 4294901760
        %2192 = vmatprep.mubr.f32.mxu0 %v2191
        %v2193 = vand.u32 %v232, 4294901760
        %2194 = vmatmul.mubr.f32.gmra.mrb[0].mxu0 %v2193
        %v2195 = vpop.f32.mrb[0].mxu0
        %v2196 = vadd.f32 %v1966, %v2195
        %v2197 = vpop.f32.mrb[0].mxu0
        %v2198 = vand.u32 %v239, 4294901760
        %2199 = vmatprep.mubr.f32.mxu0 %v2198
        %v2200 = vand.u32 %v238, 4294901760
        %2201 = vmatmul.mubr.f32.gmra.mrb[0].mxu0 %v2200
        %v2202 = vpop.f32.mrb[0].mxu0
        %v2203 = vadd.f32 %v1973, %v2202
        %v2204 = vpop.f32.mrb[0].mxu0
        %v2205 = vand.u32 %v245, 4294901760
        %2206 = vmatprep.mubr.f32.mxu0 %v2205
        %v2207 = vand.u32 %v244, 4294901760
        %2208 = vmatmul.mubr.f32.gmra.mrb[0].mxu0 %v2207
        %v2209 = vpop.f32.mrb[0].mxu0
        %v2210 = vadd.f32 %v1980, %v2209
        %v2211 = vpop.f32.mrb[0].mxu0
        %v2212 = vand.u32 %v251, 4294901760
        %2213 = vmatprep.mubr.f32.mxu0 %v2212
        %v2214 = vand.u32 %v250, 4294901760
        %2215 = vmatmul.mubr.f32.gmra.mrb[0].mxu0 %v2214
        %v2216 = vpop.f32.mrb[0].mxu0
        %v2217 = vadd.f32 %v1987, %v2216
        %v2218 = vpop.f32.mrb[0].mxu0
        %v2219 = vand.u32 %v257, 4294901760
        %2220 = vmatprep.mubr.f32.mxu0 %v2219
        %v2221 = vand.u32 %v256, 4294901760
        %2222 = vmatmul.mubr.f32.gmra.mrb[0].mxu0 %v2221
        %v2223 = vpop.f32.mrb[0].mxu0
        %v2224 = vadd.f32 %v1994, %v2223
        %v2225 = vpop.f32.mrb[0].mxu0
        %v2226 = vand.u32 %v263, 4294901760
        %2227 = vmatprep.mubr.f32.mxu0 %v2226
        %v2228 = vand.u32 %v262, 4294901760
        %2229 = vmatmul.mubr.f32.gmra.mrb[0].mxu0 %v2228
        %v2230 = vpop.f32.mrb[0].mxu0
        %v2231 = vadd.f32 %v2001, %v2230
        %v2232 = vpop.f32.mrb[0].mxu0
        %v2233 = vand.u32 %v269, 4294901760
        %2234 = vmatprep.mubr.f32.mxu0 %v2233
        %v2235 = vand.u32 %v268, 4294901760
        %2236 = vmatmul.mubr.f32.gmra.mrb[0].mxu0 %v2235
        %v2237 = vpop.f32.mrb[0].mxu0
        %v2238 = vadd.f32 %v2008, %v2237
        %v2239 = vpop.f32.mrb[0].mxu0
        %v2240 = vand.u32 %v275, 4294901760
        %2241 = vmatprep.mubr.f32.mxu0 %v2240
        %v2242 = vand.u32 %v274, 4294901760
        %2243 = vmatmul.mubr.f32.gmra.mrb[0].mxu0 %v2242
        %v2244 = vpop.f32.mrb[0].mxu0
        %v2245 = vadd.f32 %v2015, %v2244
        %v2246 = vpop.f32.mrb[0].mxu0
        %v2247 = vand.u32 %v281, 4294901760
        %2248 = vmatprep.mubr.f32.mxu0 %v2247
        %v2249 = vand.u32 %v280, 4294901760
        %2250 = vmatmul.mubr.f32.gmra.mrb[0].mxu0 %v2249
        %v2251 = vpop.f32.mrb[0].mxu0
        %v2252 = vadd.f32 %v2022, %v2251
        %v2253 = vpop.f32.mrb[0].mxu0
        %v2254 = vand.u32 %v287, 4294901760
        %2255 = vmatprep.mubr.f32.mxu0 %v2254
        %v2256 = vand.u32 %v286, 4294901760
        %2257 = vmatmul.mubr.f32.gmra.mrb[0].mxu0 %v2256
        %v2258 = vpop.f32.mrb[0].mxu0
        %v2259 = vadd.f32 %v2029, %v2258
        %v2260 = vpop.f32.mrb[0].mxu0
        %v2261 = vand.u32 %v293, 4294901760
        %2262 = vmatprep.mubr.f32.mxu0 %v2261
        %v2263 = vand.u32 %v292, 4294901760
        %2264 = vmatmul.mubr.f32.gmra.mrb[0].mxu0 %v2263
        %v2265 = vpop.f32.mrb[0].mxu0
        %v2266 = vadd.f32 %v2036, %v2265
        %v2267 = vpop.f32.mrb[0].mxu0
        %v2268 = vand.u32 %v299, 4294901760
        %2269 = vmatprep.mubr.f32.mxu0 %v2268
        %v2270 = vand.u32 %v298, 4294901760
        %2271 = vmatmul.mubr.f32.gmra.mrb[0].mxu0 %v2270
        %v2272 = vpop.f32.mrb[0].mxu0
        %v2273 = vadd.f32 %v2043, %v2272
        %v2274 = vpop.f32.mrb[0].mxu0
        %v2275 = vand.u32 %v305, 4294901760
        %2276 = vmatprep.mubr.f32.mxu0 %v2275
        %v2277 = vand.u32 %v304, 4294901760
        %2278 = vmatmul.mubr.f32.gmra.mrb[0].mxu0 %v2277
        %v2279 = vpop.f32.mrb[0].mxu0
        %v2280 = vadd.f32 %v2050, %v2279
        %v2281 = vpop.f32.mrb[0].mxu0
        %2282 = vdwg.mxu0
        %2283 = vmatprep.subr.mxu0 0.0
        %v2284 = vand.u32 %v342, 4294901760
        %2285 = vmatpush1.msra.mxu0 %v2284
        %2286 = vmatprep.subr.mxu0 0.0
        %v2287 = vand.u32 %v343, 4294901760
        %2288 = vmatpush1.msra.mxu0 %v2287
        %2289 = vmatprep.subr.mxu0 0.0
        %v2290 = vand.u32 %v344, 4294901760
        %2291 = vmatpush1.msra.mxu0 %v2290
        %2292 = vmatprep.subr.mxu0 0.0
        %v2293 = vand.u32 %v345, 4294901760
        %2294 = vmatpush1.msra.mxu0 %v2293
        %2295 = vmatprep.subr.mxu0 0.0
        %v2296 = vand.u32 %v346, 4294901760
        %2297 = vmatpush1.msra.mxu0 %v2296
        %2298 = vmatprep.subr.mxu0 0.0
        %v2299 = vand.u32 %v347, 4294901760
        %2300 = vmatpush1.msra.mxu0 %v2299
        %2301 = vmatprep.subr.mxu0 0.0
        %v2302 = vand.u32 %v348, 4294901760
        %2303 = vmatpush1.msra.mxu0 %v2302
        %2304 = vmatprep.subr.mxu0 0.0
        %v2305 = vand.u32 %v349, 4294901760
        %2306 = vmatpush1.msra.mxu0 %v2305
        %2307 = vmatprep.subr.mxu0 0.0
        %v2308 = vand.u32 %v350, 4294901760
        %2309 = vmatpush1.msra.mxu0 %v2308
        %2310 = vmatprep.subr.mxu0 0.0
        %v2311 = vand.u32 %v351, 4294901760
        %2312 = vmatpush1.msra.mxu0 %v2311
        %2313 = vmatprep.subr.mxu0 0.0
        %v2314 = vand.u32 %v352, 4294901760
        %2315 = vmatpush1.msra.mxu0 %v2314
        %2316 = vmatprep.subr.mxu0 0.0
        %v2317 = vand.u32 %v353, 4294901760
        %2318 = vmatpush1.msra.mxu0 %v2317
        %2319 = vmatprep.subr.mxu0 0.0
        %v2320 = vand.u32 %v354, 4294901760
        %2321 = vmatpush1.msra.mxu0 %v2320
        %2322 = vmatprep.subr.mxu0 0.0
        %v2323 = vand.u32 %v355, 4294901760
        %2324 = vmatpush1.msra.mxu0 %v2323
        %2325 = vmatprep.subr.mxu0 0.0
        %v2326 = vand.u32 %v356, 4294901760
        %2327 = vmatpush1.msra.mxu0 %v2326
        %2328 = vmatprep.subr.mxu0 0.0
        %v2329 = vand.u32 %v357, 4294901760
        %2330 = vmatpush1.msra.mxu0 %v2329
        %2331 = vmatprep.subr.mxu0 0.0
        %v2332 = vand.u32 %v358, 4294901760
        %2333 = vmatpush1.msra.mxu0 %v2332
        %2334 = vmatprep.subr.mxu0 0.0
        %v2335 = vand.u32 %v359, 4294901760
        %2336 = vmatpush1.msra.mxu0 %v2335
        %2337 = vmatprep.subr.mxu0 0.0
        %v2338 = vand.u32 %v360, 4294901760
        %2339 = vmatpush1.msra.mxu0 %v2338
        %2340 = vmatprep.subr.mxu0 0.0
        %v2341 = vand.u32 %v361, 4294901760
        %2342 = vmatpush1.msra.mxu0 %v2341
        %2343 = vmatprep.subr.mxu0 0.0
        %v2344 = vand.u32 %v362, 4294901760
        %2345 = vmatpush1.msra.mxu0 %v2344
        %2346 = vmatprep.subr.mxu0 0.0
        %v2347 = vand.u32 %v363, 4294901760
        %2348 = vmatpush1.msra.mxu0 %v2347
        %2349 = vmatprep.subr.mxu0 0.0
        %v2350 = vand.u32 %v364, 4294901760
        %2351 = vmatpush1.msra.mxu0 %v2350
        %2352 = vmatprep.subr.mxu0 0.0
        %v2353 = vand.u32 %v365, 4294901760
        %2354 = vmatpush1.msra.mxu0 %v2353
        %2355 = vmatprep.subr.mxu0 0.0
        %v2356 = vand.u32 %v366, 4294901760
        %2357 = vmatpush1.msra.mxu0 %v2356
        %2358 = vmatprep.subr.mxu0 0.0
        %v2359 = vand.u32 %v367, 4294901760
        %2360 = vmatpush1.msra.mxu0 %v2359
        %2361 = vmatprep.subr.mxu0 0.0
        %v2362 = vand.u32 %v368, 4294901760
        %2363 = vmatpush1.msra.mxu0 %v2362
        %2364 = vmatprep.subr.mxu0 0.0
        %v2365 = vand.u32 %v369, 4294901760
        %2366 = vmatpush1.msra.mxu0 %v2365
        %2367 = vmatprep.subr.mxu0 0.0
        %v2368 = vand.u32 %v370, 4294901760
        %2369 = vmatpush1.msra.mxu0 %v2368
        %2370 = vmatprep.subr.mxu0 0.0
        %v2371 = vand.u32 %v371, 4294901760
        %2372 = vmatpush1.msra.mxu0 %v2371
        %2373 = vmatprep.subr.mxu0 0.0
        %v2374 = vand.u32 %v372, 4294901760
        %2375 = vmatpush1.msra.mxu0 %v2374
        %2376 = vmatprep.subr.mxu0 0.0
        %v2377 = vand.u32 %v373, 4294901760
        %2378 = vmatpush1.msra.mxu0 %v2377
        %v2379 = vand.u32 %v199, 4294901760
        %v2380 = vsub.f32 %v199, %v2379
        %v2381 = vand.u32 %v2380, 4294901760
        %v2382 = vsub.f32 %v2380, %v2381
        %v2383 = vand.u32 %v2382, 4294901760
        %2384 = vmatprep.mubr.f32.mxu0 %v2383
        %v2385 = vand.u32 %v198, 4294901760
        %v2386 = vsub.f32 %v198, %v2385
        %v2387 = vand.u32 %v2386, 4294901760
        %v2388 = vsub.f32 %v2386, %v2387
        %v2389 = vand.u32 %v2388, 4294901760
        %2390 = vmatmul.mubr.f32.gmra.mrb[0].mxu0 %v2389
        %v2391 = vpop.f32.mrb[0].mxu0
        %v2392 = vadd.f32 %v2154, %v2391
        %v2393 = vpop.f32.mrb[0].mxu0
        %v2394 = vand.u32 %v205, 4294901760
        %v2395 = vsub.f32 %v205, %v2394
        %v2396 = vand.u32 %v2395, 4294901760
        %v2397 = vsub.f32 %v2395, %v2396
        %v2398 = vand.u32 %v2397, 4294901760
        %2399 = vmatprep.mubr.f32.mxu0 %v2398
        %v2400 = vand.u32 %v204, 4294901760
        %v2401 = vsub.f32 %v204, %v2400
        %v2402 = vand.u32 %v2401, 4294901760
        %v2403 = vsub.f32 %v2401, %v2402
        %v2404 = vand.u32 %v2403, 4294901760
        %2405 = vmatmul.mubr.f32.gmra.mrb[0].mxu0 %v2404
        %v2406 = vpop.f32.mrb[0].mxu0
        %v2407 = vadd.f32 %v2161, %v2406
        %v2408 = vpop.f32.mrb[0].mxu0
        %v2409 = vand.u32 %v211, 4294901760
        %v2410 = vsub.f32 %v211, %v2409
        %v2411 = vand.u32 %v2410, 4294901760
        %v2412 = vsub.f32 %v2410, %v2411
        %v2413 = vand.u32 %v2412, 4294901760
        %2414 = vmatprep.mubr.f32.mxu0 %v2413
        %v2415 = vand.u32 %v210, 4294901760
        %v2416 = vsub.f32 %v210, %v2415
        %v2417 = vand.u32 %v2416, 4294901760
        %v2418 = vsub.f32 %v2416, %v2417
        %v2419 = vand.u32 %v2418, 4294901760
        %2420 = vmatmul.mubr.f32.gmra.mrb[0].mxu0 %v2419
        %v2421 = vpop.f32.mrb[0].mxu0
        %v2422 = vadd.f32 %v2168, %v2421
        %v2423 = vpop.f32.mrb[0].mxu0
        %v2424 = vand.u32 %v217, 4294901760
        %v2425 = vsub.f32 %v217, %v2424
        %v2426 = vand.u32 %v2425, 4294901760
        %v2427 = vsub.f32 %v2425, %v2426
        %v2428 = vand.u32 %v2427, 4294901760
        %2429 = vmatprep.mubr.f32.mxu0 %v2428
        %v2430 = vand.u32 %v216, 4294901760
        %v2431 = vsub.f32 %v216, %v2430
        %v2432 = vand.u32 %v2431, 4294901760
        %v2433 = vsub.f32 %v2431, %v2432
        %v2434 = vand.u32 %v2433, 4294901760
        %2435 = vmatmul.mubr.f32.gmra.mrb[0].mxu0 %v2434
        %v2436 = vpop.f32.mrb[0].mxu0
        %v2437 = vadd.f32 %v2175, %v2436
        %v2438 = vpop.f32.mrb[0].mxu0
        %v2439 = vand.u32 %v223, 4294901760
        %v2440 = vsub.f32 %v223, %v2439
        %v2441 = vand.u32 %v2440, 4294901760
        %v2442 = vsub.f32 %v2440, %v2441
        %v2443 = vand.u32 %v2442, 4294901760
        %2444 = vmatprep.mubr.f32.mxu0 %v2443
        %v2445 = vand.u32 %v222, 4294901760
        %v2446 = vsub.f32 %v222, %v2445
        %v2447 = vand.u32 %v2446, 4294901760
        %v2448 = vsub.f32 %v2446, %v2447
        %v2449 = vand.u32 %v2448, 4294901760
        %2450 = vmatmul.mubr.f32.gmra.mrb[0].mxu0 %v2449
        %v2451 = vpop.f32.mrb[0].mxu0
        %v2452 = vadd.f32 %v2182, %v2451
        %v2453 = vpop.f32.mrb[0].mxu0
        %v2454 = vand.u32 %v229, 4294901760
        %v2455 = vsub.f32 %v229, %v2454
        %v2456 = vand.u32 %v2455, 4294901760
        %v2457 = vsub.f32 %v2455, %v2456
        %v2458 = vand.u32 %v2457, 4294901760
        %2459 = vmatprep.mubr.f32.mxu0 %v2458
        %v2460 = vand.u32 %v228, 4294901760
        %v2461 = vsub.f32 %v228, %v2460
        %v2462 = vand.u32 %v2461, 4294901760
        %v2463 = vsub.f32 %v2461, %v2462
        %v2464 = vand.u32 %v2463, 4294901760
        %2465 = vmatmul.mubr.f32.gmra.mrb[0].mxu0 %v2464
        %v2466 = vpop.f32.mrb[0].mxu0
        %v2467 = vadd.f32 %v2189, %v2466
        %v2468 = vpop.f32.mrb[0].mxu0
        %v2469 = vand.u32 %v235, 4294901760
        %v2470 = vsub.f32 %v235, %v2469
        %v2471 = vand.u32 %v2470, 4294901760
        %v2472 = vsub.f32 %v2470, %v2471
        %v2473 = vand.u32 %v2472, 4294901760
        %2474 = vmatprep.mubr.f32.mxu0 %v2473
        %v2475 = vand.u32 %v234, 4294901760
        %v2476 = vsub.f32 %v234, %v2475
        %v2477 = vand.u32 %v2476, 4294901760
        %v2478 = vsub.f32 %v2476, %v2477
        %v2479 = vand.u32 %v2478, 4294901760
        %2480 = vmatmul.mubr.f32.gmra.mrb[0].mxu0 %v2479
        %v2481 = vpop.f32.mrb[0].mxu0
        %v2482 = vadd.f32 %v2196, %v2481
        %v2483 = vpop.f32.mrb[0].mxu0
        %v2484 = vand.u32 %v241, 4294901760
        %v2485 = vsub.f32 %v241, %v2484
        %v2486 = vand.u32 %v2485, 4294901760
        %v2487 = vsub.f32 %v2485, %v2486
        %v2488 = vand.u32 %v2487, 4294901760
        %2489 = vmatprep.mubr.f32.mxu0 %v2488
        %v2490 = vand.u32 %v240, 4294901760
        %v2491 = vsub.f32 %v240, %v2490
        %v2492 = vand.u32 %v2491, 4294901760
        %v2493 = vsub.f32 %v2491, %v2492
        %v2494 = vand.u32 %v2493, 4294901760
        %2495 = vmatmul.mubr.f32.gmra.mrb[0].mxu0 %v2494
        %v2496 = vpop.f32.mrb[0].mxu0
        %v2497 = vadd.f32 %v2203, %v2496
        %v2498 = vpop.f32.mrb[0].mxu0
        %v2499 = vand.u32 %v247, 4294901760
        %v2500 = vsub.f32 %v247, %v2499
        %v2501 = vand.u32 %v2500, 4294901760
        %v2502 = vsub.f32 %v2500, %v2501
        %v2503 = vand.u32 %v2502, 4294901760
        %2504 = vmatprep.mubr.f32.mxu0 %v2503
        %v2505 = vand.u32 %v246, 4294901760
        %v2506 = vsub.f32 %v246, %v2505
        %v2507 = vand.u32 %v2506, 4294901760
        %v2508 = vsub.f32 %v2506, %v2507
        %v2509 = vand.u32 %v2508, 4294901760
        %2510 = vmatmul.mubr.f32.gmra.mrb[0].mxu0 %v2509
        %v2511 = vpop.f32.mrb[0].mxu0
        %v2512 = vadd.f32 %v2210, %v2511
        %v2513 = vpop.f32.mrb[0].mxu0
        %v2514 = vand.u32 %v253, 4294901760
        %v2515 = vsub.f32 %v253, %v2514
        %v2516 = vand.u32 %v2515, 4294901760
        %v2517 = vsub.f32 %v2515, %v2516
        %v2518 = vand.u32 %v2517, 4294901760
        %2519 = vmatprep.mubr.f32.mxu0 %v2518
        %v2520 = vand.u32 %v252, 4294901760
        %v2521 = vsub.f32 %v252, %v2520
        %v2522 = vand.u32 %v2521, 4294901760
        %v2523 = vsub.f32 %v2521, %v2522
        %v2524 = vand.u32 %v2523, 4294901760
        %2525 = vmatmul.mubr.f32.gmra.mrb[0].mxu0 %v2524
        %v2526 = vpop.f32.mrb[0].mxu0
        %v2527 = vadd.f32 %v2217, %v2526
        %v2528 = vpop.f32.mrb[0].mxu0
        %v2529 = vand.u32 %v259, 4294901760
        %v2530 = vsub.f32 %v259, %v2529
        %v2531 = vand.u32 %v2530, 4294901760
        %v2532 = vsub.f32 %v2530, %v2531
        %v2533 = vand.u32 %v2532, 4294901760
        %2534 = vmatprep.mubr.f32.mxu0 %v2533
        %v2535 = vand.u32 %v258, 4294901760
        %v2536 = vsub.f32 %v258, %v2535
        %v2537 = vand.u32 %v2536, 4294901760
        %v2538 = vsub.f32 %v2536, %v2537
        %v2539 = vand.u32 %v2538, 4294901760
        %2540 = vmatmul.mubr.f32.gmra.mrb[0].mxu0 %v2539
        %v2541 = vpop.f32.mrb[0].mxu0
        %v2542 = vadd.f32 %v2224, %v2541
        %v2543 = vpop.f32.mrb[0].mxu0
        %v2544 = vand.u32 %v265, 4294901760
        %v2545 = vsub.f32 %v265, %v2544
        %v2546 = vand.u32 %v2545, 4294901760
        %v2547 = vsub.f32 %v2545, %v2546
        %v2548 = vand.u32 %v2547, 4294901760
        %2549 = vmatprep.mubr.f32.mxu0 %v2548
        %v2550 = vand.u32 %v264, 4294901760
        %v2551 = vsub.f32 %v264, %v2550
        %v2552 = vand.u32 %v2551, 4294901760
        %v2553 = vsub.f32 %v2551, %v2552
        %v2554 = vand.u32 %v2553, 4294901760
        %2555 = vmatmul.mubr.f32.gmra.mrb[0].mxu0 %v2554
        %v2556 = vpop.f32.mrb[0].mxu0
        %v2557 = vadd.f32 %v2231, %v2556
        %v2558 = vpop.f32.mrb[0].mxu0
        %v2559 = vand.u32 %v271, 4294901760
        %v2560 = vsub.f32 %v271, %v2559
        %v2561 = vand.u32 %v2560, 4294901760
        %v2562 = vsub.f32 %v2560, %v2561
        %v2563 = vand.u32 %v2562, 4294901760
        %2564 = vmatprep.mubr.f32.mxu0 %v2563
        %v2565 = vand.u32 %v270, 4294901760
        %v2566 = vsub.f32 %v270, %v2565
        %v2567 = vand.u32 %v2566, 4294901760
        %v2568 = vsub.f32 %v2566, %v2567
        %v2569 = vand.u32 %v2568, 4294901760
        %2570 = vmatmul.mubr.f32.gmra.mrb[0].mxu0 %v2569
        %v2571 = vpop.f32.mrb[0].mxu0
        %v2572 = vadd.f32 %v2238, %v2571
        %v2573 = vpop.f32.mrb[0].mxu0
        %v2574 = vand.u32 %v277, 4294901760
        %v2575 = vsub.f32 %v277, %v2574
        %v2576 = vand.u32 %v2575, 4294901760
        %v2577 = vsub.f32 %v2575, %v2576
        %v2578 = vand.u32 %v2577, 4294901760
        %2579 = vmatprep.mubr.f32.mxu0 %v2578
        %v2580 = vand.u32 %v276, 4294901760
        %v2581 = vsub.f32 %v276, %v2580
        %v2582 = vand.u32 %v2581, 4294901760
        %v2583 = vsub.f32 %v2581, %v2582
        %v2584 = vand.u32 %v2583, 4294901760
        %2585 = vmatmul.mubr.f32.gmra.mrb[0].mxu0 %v2584
        %v2586 = vpop.f32.mrb[0].mxu0
        %v2587 = vadd.f32 %v2245, %v2586
        %v2588 = vpop.f32.mrb[0].mxu0
        %v2589 = vand.u32 %v283, 4294901760
        %v2590 = vsub.f32 %v283, %v2589
        %v2591 = vand.u32 %v2590, 4294901760
        %v2592 = vsub.f32 %v2590, %v2591
        %v2593 = vand.u32 %v2592, 4294901760
        %2594 = vmatprep.mubr.f32.mxu0 %v2593
        %v2595 = vand.u32 %v282, 4294901760
        %v2596 = vsub.f32 %v282, %v2595
        %v2597 = vand.u32 %v2596, 4294901760
        %v2598 = vsub.f32 %v2596, %v2597
        %v2599 = vand.u32 %v2598, 4294901760
        %2600 = vmatmul.mubr.f32.gmra.mrb[0].mxu0 %v2599
        %v2601 = vpop.f32.mrb[0].mxu0
        %v2602 = vadd.f32 %v2252, %v2601
        %v2603 = vpop.f32.mrb[0].mxu0
        %v2604 = vand.u32 %v289, 4294901760
        %v2605 = vsub.f32 %v289, %v2604
        %v2606 = vand.u32 %v2605, 4294901760
        %v2607 = vsub.f32 %v2605, %v2606
        %v2608 = vand.u32 %v2607, 4294901760
        %2609 = vmatprep.mubr.f32.mxu0 %v2608
        %v2610 = vand.u32 %v288, 4294901760
        %v2611 = vsub.f32 %v288, %v2610
        %v2612 = vand.u32 %v2611, 4294901760
        %v2613 = vsub.f32 %v2611, %v2612
        %v2614 = vand.u32 %v2613, 4294901760
        %2615 = vmatmul.mubr.f32.gmra.mrb[0].mxu0 %v2614
        %v2616 = vpop.f32.mrb[0].mxu0
        %v2617 = vadd.f32 %v2259, %v2616
        %v2618 = vpop.f32.mrb[0].mxu0
        %v2619 = vand.u32 %v295, 4294901760
        %v2620 = vsub.f32 %v295, %v2619
        %v2621 = vand.u32 %v2620, 4294901760
        %v2622 = vsub.f32 %v2620, %v2621
        %v2623 = vand.u32 %v2622, 4294901760
        %2624 = vmatprep.mubr.f32.mxu0 %v2623
        %v2625 = vand.u32 %v294, 4294901760
        %v2626 = vsub.f32 %v294, %v2625
        %v2627 = vand.u32 %v2626, 4294901760
        %v2628 = vsub.f32 %v2626, %v2627
        %v2629 = vand.u32 %v2628, 4294901760
        %2630 = vmatmul.mubr.f32.gmra.mrb[0].mxu0 %v2629
        %v2631 = vpop.f32.mrb[0].mxu0
        %v2632 = vadd.f32 %v2266, %v2631
        %v2633 = vpop.f32.mrb[0].mxu0
        %v2634 = vand.u32 %v301, 4294901760
        %v2635 = vsub.f32 %v301, %v2634
        %v2636 = vand.u32 %v2635, 4294901760
        %v2637 = vsub.f32 %v2635, %v2636
        %v2638 = vand.u32 %v2637, 4294901760
        %2639 = vmatprep.mubr.f32.mxu0 %v2638
        %v2640 = vand.u32 %v300, 4294901760
        %v2641 = vsub.f32 %v300, %v2640
        %v2642 = vand.u32 %v2641, 4294901760
        %v2643 = vsub.f32 %v2641, %v2642
        %v2644 = vand.u32 %v2643, 4294901760
        %2645 = vmatmul.mubr.f32.gmra.mrb[0].mxu0 %v2644
        %v2646 = vpop.f32.mrb[0].mxu0
        %v2647 = vadd.f32 %v2273, %v2646
        %v2648 = vpop.f32.mrb[0].mxu0
        %v2649 = vand.u32 %v307, 4294901760
        %v2650 = vsub.f32 %v307, %v2649
        %v2651 = vand.u32 %v2650, 4294901760
        %v2652 = vsub.f32 %v2650, %v2651
        %v2653 = vand.u32 %v2652, 4294901760
        %2654 = vmatprep.mubr.f32.mxu0 %v2653
        %v2655 = vand.u32 %v306, 4294901760
        %v2656 = vsub.f32 %v306, %v2655
        %v2657 = vand.u32 %v2656, 4294901760
        %v2658 = vsub.f32 %v2656, %v2657
        %v2659 = vand.u32 %v2658, 4294901760
        %2660 = vmatmul.mubr.f32.gmra.mrb[0].mxu0 %v2659
        %v2661 = vpop.f32.mrb[0].mxu0
        %v2662 = vadd.f32 %v2280, %v2661
        %v2663 = vpop.f32.mrb[0].mxu0
        %2664 = vdwg.mxu0
        %2665 = vmatprep.subr.mxu0 0.0
        %v2666 = vand.u32 %v342, 4294901760
        %v2667 = vsub.f32 %v342, %v2666
        %v2668 = vand.u32 %v2667, 4294901760
        %v2669 = vsub.f32 %v2667, %v2668
        %v2670 = vand.u32 %v2669, 4294901760
        %2671 = vmatpush1.msra.mxu0 %v2670
        %2672 = vmatprep.subr.mxu0 0.0
        %v2673 = vand.u32 %v343, 4294901760
        %v2674 = vsub.f32 %v343, %v2673
        %v2675 = vand.u32 %v2674, 4294901760
        %v2676 = vsub.f32 %v2674, %v2675
        %v2677 = vand.u32 %v2676, 4294901760
        %2678 = vmatpush1.msra.mxu0 %v2677
        %2679 = vmatprep.subr.mxu0 0.0
        %v2680 = vand.u32 %v344, 4294901760
        %v2681 = vsub.f32 %v344, %v2680
        %v2682 = vand.u32 %v2681, 4294901760
        %v2683 = vsub.f32 %v2681, %v2682
        %v2684 = vand.u32 %v2683, 4294901760
        %2685 = vmatpush1.msra.mxu0 %v2684
        %2686 = vmatprep.subr.mxu0 0.0
        %v2687 = vand.u32 %v345, 4294901760
        %v2688 = vsub.f32 %v345, %v2687
        %v2689 = vand.u32 %v2688, 4294901760
        %v2690 = vsub.f32 %v2688, %v2689
        %v2691 = vand.u32 %v2690, 4294901760
        %2692 = vmatpush1.msra.mxu0 %v2691
        %2693 = vmatprep.subr.mxu0 0.0
        %v2694 = vand.u32 %v346, 4294901760
        %v2695 = vsub.f32 %v346, %v2694
        %v2696 = vand.u32 %v2695, 4294901760
        %v2697 = vsub.f32 %v2695, %v2696
        %v2698 = vand.u32 %v2697, 4294901760
        %2699 = vmatpush1.msra.mxu0 %v2698
        %2700 = vmatprep.subr.mxu0 0.0
        %v2701 = vand.u32 %v347, 4294901760
        %v2702 = vsub.f32 %v347, %v2701
        %v2703 = vand.u32 %v2702, 4294901760
        %v2704 = vsub.f32 %v2702, %v2703
        %v2705 = vand.u32 %v2704, 4294901760
        %2706 = vmatpush1.msra.mxu0 %v2705
        %2707 = vmatprep.subr.mxu0 0.0
        %v2708 = vand.u32 %v348, 4294901760
        %v2709 = vsub.f32 %v348, %v2708
        %v2710 = vand.u32 %v2709, 4294901760
        %v2711 = vsub.f32 %v2709, %v2710
        %v2712 = vand.u32 %v2711, 4294901760
        %2713 = vmatpush1.msra.mxu0 %v2712
        %2714 = vmatprep.subr.mxu0 0.0
        %v2715 = vand.u32 %v349, 4294901760
        %v2716 = vsub.f32 %v349, %v2715
        %v2717 = vand.u32 %v2716, 4294901760
        %v2718 = vsub.f32 %v2716, %v2717
        %v2719 = vand.u32 %v2718, 4294901760
        %2720 = vmatpush1.msra.mxu0 %v2719
        %2721 = vmatprep.subr.mxu0 0.0
        %v2722 = vand.u32 %v350, 4294901760
        %v2723 = vsub.f32 %v350, %v2722
        %v2724 = vand.u32 %v2723, 4294901760
        %v2725 = vsub.f32 %v2723, %v2724
        %v2726 = vand.u32 %v2725, 4294901760
        %2727 = vmatpush1.msra.mxu0 %v2726
        %2728 = vmatprep.subr.mxu0 0.0
        %v2729 = vand.u32 %v351, 4294901760
        %v2730 = vsub.f32 %v351, %v2729
        %v2731 = vand.u32 %v2730, 4294901760
        %v2732 = vsub.f32 %v2730, %v2731
        %v2733 = vand.u32 %v2732, 4294901760
        %2734 = vmatpush1.msra.mxu0 %v2733
        %2735 = vmatprep.subr.mxu0 0.0
        %v2736 = vand.u32 %v352, 4294901760
        %v2737 = vsub.f32 %v352, %v2736
        %v2738 = vand.u32 %v2737, 4294901760
        %v2739 = vsub.f32 %v2737, %v2738
        %v2740 = vand.u32 %v2739, 4294901760
        %2741 = vmatpush1.msra.mxu0 %v2740
        %2742 = vmatprep.subr.mxu0 0.0
        %v2743 = vand.u32 %v353, 4294901760
        %v2744 = vsub.f32 %v353, %v2743
        %v2745 = vand.u32 %v2744, 4294901760
        %v2746 = vsub.f32 %v2744, %v2745
        %v2747 = vand.u32 %v2746, 4294901760
        %2748 = vmatpush1.msra.mxu0 %v2747
        %2749 = vmatprep.subr.mxu0 0.0
        %v2750 = vand.u32 %v354, 4294901760
        %v2751 = vsub.f32 %v354, %v2750
        %v2752 = vand.u32 %v2751, 4294901760
        %v2753 = vsub.f32 %v2751, %v2752
        %v2754 = vand.u32 %v2753, 4294901760
        %2755 = vmatpush1.msra.mxu0 %v2754
        %2756 = vmatprep.subr.mxu0 0.0
        %v2757 = vand.u32 %v355, 4294901760
        %v2758 = vsub.f32 %v355, %v2757
        %v2759 = vand.u32 %v2758, 4294901760
        %v2760 = vsub.f32 %v2758, %v2759
        %v2761 = vand.u32 %v2760, 4294901760
        %2762 = vmatpush1.msra.mxu0 %v2761
        %2763 = vmatprep.subr.mxu0 0.0
        %v2764 = vand.u32 %v356, 4294901760
        %v2765 = vsub.f32 %v356, %v2764
        %v2766 = vand.u32 %v2765, 4294901760
        %v2767 = vsub.f32 %v2765, %v2766
        %v2768 = vand.u32 %v2767, 4294901760
        %2769 = vmatpush1.msra.mxu0 %v2768
        %2770 = vmatprep.subr.mxu0 0.0
        %v2771 = vand.u32 %v357, 4294901760
        %v2772 = vsub.f32 %v357, %v2771
        %v2773 = vand.u32 %v2772, 4294901760
        %v2774 = vsub.f32 %v2772, %v2773
        %v2775 = vand.u32 %v2774, 4294901760
        %2776 = vmatpush1.msra.mxu0 %v2775
        %2777 = vmatprep.subr.mxu0 0.0
        %v2778 = vand.u32 %v358, 4294901760
        %v2779 = vsub.f32 %v358, %v2778
        %v2780 = vand.u32 %v2779, 4294901760
        %v2781 = vsub.f32 %v2779, %v2780
        %v2782 = vand.u32 %v2781, 4294901760
        %2783 = vmatpush1.msra.mxu0 %v2782
        %2784 = vmatprep.subr.mxu0 0.0
        %v2785 = vand.u32 %v359, 4294901760
        %v2786 = vsub.f32 %v359, %v2785
        %v2787 = vand.u32 %v2786, 4294901760
        %v2788 = vsub.f32 %v2786, %v2787
        %v2789 = vand.u32 %v2788, 4294901760
        %2790 = vmatpush1.msra.mxu0 %v2789
        %2791 = vmatprep.subr.mxu0 0.0
        %v2792 = vand.u32 %v360, 4294901760
        %v2793 = vsub.f32 %v360, %v2792
        %v2794 = vand.u32 %v2793, 4294901760
        %v2795 = vsub.f32 %v2793, %v2794
        %v2796 = vand.u32 %v2795, 4294901760
        %2797 = vmatpush1.msra.mxu0 %v2796
        %2798 = vmatprep.subr.mxu0 0.0
        %v2799 = vand.u32 %v361, 4294901760
        %v2800 = vsub.f32 %v361, %v2799
        %v2801 = vand.u32 %v2800, 4294901760
        %v2802 = vsub.f32 %v2800, %v2801
        %v2803 = vand.u32 %v2802, 4294901760
        %2804 = vmatpush1.msra.mxu0 %v2803
        %2805 = vmatprep.subr.mxu0 0.0
        %v2806 = vand.u32 %v362, 4294901760
        %v2807 = vsub.f32 %v362, %v2806
        %v2808 = vand.u32 %v2807, 4294901760
        %v2809 = vsub.f32 %v2807, %v2808
        %v2810 = vand.u32 %v2809, 4294901760
        %2811 = vmatpush1.msra.mxu0 %v2810
        %2812 = vmatprep.subr.mxu0 0.0
        %v2813 = vand.u32 %v363, 4294901760
        %v2814 = vsub.f32 %v363, %v2813
        %v2815 = vand.u32 %v2814, 4294901760
        %v2816 = vsub.f32 %v2814, %v2815
        %v2817 = vand.u32 %v2816, 4294901760
        %2818 = vmatpush1.msra.mxu0 %v2817
        %2819 = vmatprep.subr.mxu0 0.0
        %v2820 = vand.u32 %v364, 4294901760
        %v2821 = vsub.f32 %v364, %v2820
        %v2822 = vand.u32 %v2821, 4294901760
        %v2823 = vsub.f32 %v2821, %v2822
        %v2824 = vand.u32 %v2823, 4294901760
        %2825 = vmatpush1.msra.mxu0 %v2824
        %2826 = vmatprep.subr.mxu0 0.0
        %v2827 = vand.u32 %v365, 4294901760
        %v2828 = vsub.f32 %v365, %v2827
        %v2829 = vand.u32 %v2828, 4294901760
        %v2830 = vsub.f32 %v2828, %v2829
        %v2831 = vand.u32 %v2830, 4294901760
        %2832 = vmatpush1.msra.mxu0 %v2831
        %2833 = vmatprep.subr.mxu0 0.0
        %v2834 = vand.u32 %v366, 4294901760
        %v2835 = vsub.f32 %v366, %v2834
        %v2836 = vand.u32 %v2835, 4294901760
        %v2837 = vsub.f32 %v2835, %v2836
        %v2838 = vand.u32 %v2837, 4294901760
        %2839 = vmatpush1.msra.mxu0 %v2838
        %2840 = vmatprep.subr.mxu0 0.0
        %v2841 = vand.u32 %v367, 4294901760
        %v2842 = vsub.f32 %v367, %v2841
        %v2843 = vand.u32 %v2842, 4294901760
        %v2844 = vsub.f32 %v2842, %v2843
        %v2845 = vand.u32 %v2844, 4294901760
        %2846 = vmatpush1.msra.mxu0 %v2845
        %2847 = vmatprep.subr.mxu0 0.0
        %v2848 = vand.u32 %v368, 4294901760
        %v2849 = vsub.f32 %v368, %v2848
        %v2850 = vand.u32 %v2849, 4294901760
        %v2851 = vsub.f32 %v2849, %v2850
        %v2852 = vand.u32 %v2851, 4294901760
        %2853 = vmatpush1.msra.mxu0 %v2852
        %2854 = vmatprep.subr.mxu0 0.0
        %v2855 = vand.u32 %v369, 4294901760
        %v2856 = vsub.f32 %v369, %v2855
        %v2857 = vand.u32 %v2856, 4294901760
        %v2858 = vsub.f32 %v2856, %v2857
        %v2859 = vand.u32 %v2858, 4294901760
        %2860 = vmatpush1.msra.mxu0 %v2859
        %2861 = vmatprep.subr.mxu0 0.0
        %v2862 = vand.u32 %v370, 4294901760
        %v2863 = vsub.f32 %v370, %v2862
        %v2864 = vand.u32 %v2863, 4294901760
        %v2865 = vsub.f32 %v2863, %v2864
        %v2866 = vand.u32 %v2865, 4294901760
        %2867 = vmatpush1.msra.mxu0 %v2866
        %2868 = vmatprep.subr.mxu0 0.0
        %v2869 = vand.u32 %v371, 4294901760
        %v2870 = vsub.f32 %v371, %v2869
        %v2871 = vand.u32 %v2870, 4294901760
        %v2872 = vsub.f32 %v2870, %v2871
        %v2873 = vand.u32 %v2872, 4294901760
        %2874 = vmatpush1.msra.mxu0 %v2873
        %2875 = vmatprep.subr.mxu0 0.0
        %v2876 = vand.u32 %v372, 4294901760
        %v2877 = vsub.f32 %v372, %v2876
        %v2878 = vand.u32 %v2877, 4294901760
        %v2879 = vsub.f32 %v2877, %v2878
        %v2880 = vand.u32 %v2879, 4294901760
        %2881 = vmatpush1.msra.mxu0 %v2880
        %2882 = vmatprep.subr.mxu0 0.0
        %v2883 = vand.u32 %v373, 4294901760
        %v2884 = vsub.f32 %v373, %v2883
        %v2885 = vand.u32 %v2884, 4294901760
        %v2886 = vsub.f32 %v2884, %v2885
        %v2887 = vand.u32 %v2886, 4294901760
        %2888 = vmatpush1.msra.mxu0 %v2887
        %v2889 = vand.u32 %v199, 4294901760
        %2890 = vmatprep.mubr.f32.mxu0 %v2889
        %v2891 = vand.u32 %v198, 4294901760
        %2892 = vmatmul.mubr.f32.gmra.mrb[0].mxu0 %v2891
        %v2893 = vpop.f32.mrb[0].mxu0
        %v2894 = vadd.f32 %v2392, %v2893
        %v2895 = vpop.f32.mrb[0].mxu0
        %v2896 = vand.u32 %v205, 4294901760
        %2897 = vmatprep.mubr.f32.mxu0 %v2896
        %v2898 = vand.u32 %v204, 4294901760
        %2899 = vmatmul.mubr.f32.gmra.mrb[0].mxu0 %v2898
        %v2900 = vpop.f32.mrb[0].mxu0
        %v2901 = vadd.f32 %v2407, %v2900
        %v2902 = vpop.f32.mrb[0].mxu0
        %v2903 = vand.u32 %v211, 4294901760
        %2904 = vmatprep.mubr.f32.mxu0 %v2903
        %v2905 = vand.u32 %v210, 4294901760
        %2906 = vmatmul.mubr.f32.gmra.mrb[0].mxu0 %v2905
        %v2907 = vpop.f32.mrb[0].mxu0
        %v2908 = vadd.f32 %v2422, %v2907
        %v2909 = vpop.f32.mrb[0].mxu0
        %v2910 = vand.u32 %v217, 4294901760
        %2911 = vmatprep.mubr.f32.mxu0 %v2910
        %v2912 = vand.u32 %v216, 4294901760
        %2913 = vmatmul.mubr.f32.gmra.mrb[0].mxu0 %v2912
        %v2914 = vpop.f32.mrb[0].mxu0
        %v2915 = vadd.f32 %v2437, %v2914
        %v2916 = vpop.f32.mrb[0].mxu0
        %v2917 = vand.u32 %v223, 4294901760
        %2918 = vmatprep.mubr.f32.mxu0 %v2917
        %v2919 = vand.u32 %v222, 4294901760
        %2920 = vmatmul.mubr.f32.gmra.mrb[0].mxu0 %v2919
        %v2921 = vpop.f32.mrb[0].mxu0
        %v2922 = vadd.f32 %v2452, %v2921
        %v2923 = vpop.f32.mrb[0].mxu0
        %v2924 = vand.u32 %v229, 4294901760
        %2925 = vmatprep.mubr.f32.mxu0 %v2924
        %v2926 = vand.u32 %v228, 4294901760
        %2927 = vmatmul.mubr.f32.gmra.mrb[0].mxu0 %v2926
        %v2928 = vpop.f32.mrb[0].mxu0
        %v2929 = vadd.f32 %v2467, %v2928
        %v2930 = vpop.f32.mrb[0].mxu0
        %v2931 = vand.u32 %v235, 4294901760
        %2932 = vmatprep.mubr.f32.mxu0 %v2931
        %v2933 = vand.u32 %v234, 4294901760
        %2934 = vmatmul.mubr.f32.gmra.mrb[0].mxu0 %v2933
        %v2935 = vpop.f32.mrb[0].mxu0
        %v2936 = vadd.f32 %v2482, %v2935
        %v2937 = vpop.f32.mrb[0].mxu0
        %v2938 = vand.u32 %v241, 4294901760
        %2939 = vmatprep.mubr.f32.mxu0 %v2938
        %v2940 = vand.u32 %v240, 4294901760
        %2941 = vmatmul.mubr.f32.gmra.mrb[0].mxu0 %v2940
        %v2942 = vpop.f32.mrb[0].mxu0
        %v2943 = vadd.f32 %v2497, %v2942
        %v2944 = vpop.f32.mrb[0].mxu0
        %v2945 = vand.u32 %v247, 4294901760
        %2946 = vmatprep.mubr.f32.mxu0 %v2945
        %v2947 = vand.u32 %v246, 4294901760
        %2948 = vmatmul.mubr.f32.gmra.mrb[0].mxu0 %v2947
        %v2949 = vpop.f32.mrb[0].mxu0
        %v2950 = vadd.f32 %v2512, %v2949
        %v2951 = vpop.f32.mrb[0].mxu0
        %v2952 = vand.u32 %v253, 4294901760
        %2953 = vmatprep.mubr.f32.mxu0 %v2952
        %v2954 = vand.u32 %v252, 4294901760
        %2955 = vmatmul.mubr.f32.gmra.mrb[0].mxu0 %v2954
        %v2956 = vpop.f32.mrb[0].mxu0
        %v2957 = vadd.f32 %v2527, %v2956
        %v2958 = vpop.f32.mrb[0].mxu0
        %v2959 = vand.u32 %v259, 4294901760
        %2960 = vmatprep.mubr.f32.mxu0 %v2959
        %v2961 = vand.u32 %v258, 4294901760
        %2962 = vmatmul.mubr.f32.gmra.mrb[0].mxu0 %v2961
        %v2963 = vpop.f32.mrb[0].mxu0
        %v2964 = vadd.f32 %v2542, %v2963
        %v2965 = vpop.f32.mrb[0].mxu0
        %v2966 = vand.u32 %v265, 4294901760
        %2967 = vmatprep.mubr.f32.mxu0 %v2966
        %v2968 = vand.u32 %v264, 4294901760
        %2969 = vmatmul.mubr.f32.gmra.mrb[0].mxu0 %v2968
        %v2970 = vpop.f32.mrb[0].mxu0
        %v2971 = vadd.f32 %v2557, %v2970
        %v2972 = vpop.f32.mrb[0].mxu0
        %v2973 = vand.u32 %v271, 4294901760
        %2974 = vmatprep.mubr.f32.mxu0 %v2973
        %v2975 = vand.u32 %v270, 4294901760
        %2976 = vmatmul.mubr.f32.gmra.mrb[0].mxu0 %v2975
        %v2977 = vpop.f32.mrb[0].mxu0
        %v2978 = vadd.f32 %v2572, %v2977
        %v2979 = vpop.f32.mrb[0].mxu0
        %v2980 = vand.u32 %v277, 4294901760
        %2981 = vmatprep.mubr.f32.mxu0 %v2980
        %v2982 = vand.u32 %v276, 4294901760
        %2983 = vmatmul.mubr.f32.gmra.mrb[0].mxu0 %v2982
        %v2984 = vpop.f32.mrb[0].mxu0
        %v2985 = vadd.f32 %v2587, %v2984
        %v2986 = vpop.f32.mrb[0].mxu0
        %v2987 = vand.u32 %v283, 4294901760
        %2988 = vmatprep.mubr.f32.mxu0 %v2987
        %v2989 = vand.u32 %v282, 4294901760
        %2990 = vmatmul.mubr.f32.gmra.mrb[0].mxu0 %v2989
        %v2991 = vpop.f32.mrb[0].mxu0
        %v2992 = vadd.f32 %v2602, %v2991
        %v2993 = vpop.f32.mrb[0].mxu0
        %v2994 = vand.u32 %v289, 4294901760
        %2995 = vmatprep.mubr.f32.mxu0 %v2994
        %v2996 = vand.u32 %v288, 4294901760
        %2997 = vmatmul.mubr.f32.gmra.mrb[0].mxu0 %v2996
        %v2998 = vpop.f32.mrb[0].mxu0
        %v2999 = vadd.f32 %v2617, %v2998
        %v3000 = vpop.f32.mrb[0].mxu0
        %v3001 = vand.u32 %v295, 4294901760
        %3002 = vmatprep.mubr.f32.mxu0 %v3001
        %v3003 = vand.u32 %v294, 4294901760
        %3004 = vmatmul.mubr.f32.gmra.mrb[0].mxu0 %v3003
        %v3005 = vpop.f32.mrb[0].mxu0
        %v3006 = vadd.f32 %v2632, %v3005
        %v3007 = vpop.f32.mrb[0].mxu0
        %v3008 = vand.u32 %v301, 4294901760
        %3009 = vmatprep.mubr.f32.mxu0 %v3008
        %v3010 = vand.u32 %v300, 4294901760
        %3011 = vmatmul.mubr.f32.gmra.mrb[0].mxu0 %v3010
        %v3012 = vpop.f32.mrb[0].mxu0
        %v3013 = vadd.f32 %v2647, %v3012
        %v3014 = vpop.f32.mrb[0].mxu0
        %v3015 = vand.u32 %v307, 4294901760
        %3016 = vmatprep.mubr.f32.mxu0 %v3015
        %v3017 = vand.u32 %v306, 4294901760
        %3018 = vmatmul.mubr.f32.gmra.mrb[0].mxu0 %v3017
        %v3019 = vpop.f32.mrb[0].mxu0
        %v3020 = vadd.f32 %v2662, %v3019
        %v3021 = vpop.f32.mrb[0].mxu0
        %3022 = vdwg.mxu0
        %3023 = vmatprep.subr.mxu0 0.0
        %v3024 = vand.u32 %v342, 4294901760
        %v3025 = vsub.f32 %v342, %v3024
        %3026 = vmatpush1.msra.mxu0 %v3025
        %3027 = vmatprep.subr.mxu0 0.0
        %v3028 = vand.u32 %v343, 4294901760
        %v3029 = vsub.f32 %v343, %v3028
        %3030 = vmatpush1.msra.mxu0 %v3029
        %3031 = vmatprep.subr.mxu0 0.0
        %v3032 = vand.u32 %v344, 4294901760
        %v3033 = vsub.f32 %v344, %v3032
        %3034 = vmatpush1.msra.mxu0 %v3033
        %3035 = vmatprep.subr.mxu0 0.0
        %v3036 = vand.u32 %v345, 4294901760
        %v3037 = vsub.f32 %v345, %v3036
        %3038 = vmatpush1.msra.mxu0 %v3037
        %3039 = vmatprep.subr.mxu0 0.0
        %v3040 = vand.u32 %v346, 4294901760
        %v3041 = vsub.f32 %v346, %v3040
        %3042 = vmatpush1.msra.mxu0 %v3041
        %3043 = vmatprep.subr.mxu0 0.0
        %v3044 = vand.u32 %v347, 4294901760
        %v3045 = vsub.f32 %v347, %v3044
        %3046 = vmatpush1.msra.mxu0 %v3045
        %3047 = vmatprep.subr.mxu0 0.0
        %v3048 = vand.u32 %v348, 4294901760
        %v3049 = vsub.f32 %v348, %v3048
        %3050 = vmatpush1.msra.mxu0 %v3049
        %3051 = vmatprep.subr.mxu0 0.0
        %v3052 = vand.u32 %v349, 4294901760
        %v3053 = vsub.f32 %v349, %v3052
        %3054 = vmatpush1.msra.mxu0 %v3053
        %3055 = vmatprep.subr.mxu0 0.0
        %v3056 = vand.u32 %v350, 4294901760
        %v3057 = vsub.f32 %v350, %v3056
        %3058 = vmatpush1.msra.mxu0 %v3057
        %3059 = vmatprep.subr.mxu0 0.0
        %v3060 = vand.u32 %v351, 4294901760
        %v3061 = vsub.f32 %v351, %v3060
        %3062 = vmatpush1.msra.mxu0 %v3061
        %3063 = vmatprep.subr.mxu0 0.0
        %v3064 = vand.u32 %v352, 4294901760
        %v3065 = vsub.f32 %v352, %v3064
        %3066 = vmatpush1.msra.mxu0 %v3065
        %3067 = vmatprep.subr.mxu0 0.0
        %v3068 = vand.u32 %v353, 4294901760
        %v3069 = vsub.f32 %v353, %v3068
        %3070 = vmatpush1.msra.mxu0 %v3069
        %3071 = vmatprep.subr.mxu0 0.0
        %v3072 = vand.u32 %v354, 4294901760
        %v3073 = vsub.f32 %v354, %v3072
        %3074 = vmatpush1.msra.mxu0 %v3073
        %3075 = vmatprep.subr.mxu0 0.0
        %v3076 = vand.u32 %v355, 4294901760
        %v3077 = vsub.f32 %v355, %v3076
        %3078 = vmatpush1.msra.mxu0 %v3077
        %3079 = vmatprep.subr.mxu0 0.0
        %v3080 = vand.u32 %v356, 4294901760
        %v3081 = vsub.f32 %v356, %v3080
        %3082 = vmatpush1.msra.mxu0 %v3081
        %3083 = vmatprep.subr.mxu0 0.0
        %v3084 = vand.u32 %v357, 4294901760
        %v3085 = vsub.f32 %v357, %v3084
        %3086 = vmatpush1.msra.mxu0 %v3085
        %3087 = vmatprep.subr.mxu0 0.0
        %v3088 = vand.u32 %v358, 4294901760
        %v3089 = vsub.f32 %v358, %v3088
        %3090 = vmatpush1.msra.mxu0 %v3089
        %3091 = vmatprep.subr.mxu0 0.0
        %v3092 = vand.u32 %v359, 4294901760
        %v3093 = vsub.f32 %v359, %v3092
        %3094 = vmatpush1.msra.mxu0 %v3093
        %3095 = vmatprep.subr.mxu0 0.0
        %v3096 = vand.u32 %v360, 4294901760
        %v3097 = vsub.f32 %v360, %v3096
        %3098 = vmatpush1.msra.mxu0 %v3097
        %3099 = vmatprep.subr.mxu0 0.0
        %v3100 = vand.u32 %v361, 4294901760
        %v3101 = vsub.f32 %v361, %v3100
        %3102 = vmatpush1.msra.mxu0 %v3101
        %3103 = vmatprep.subr.mxu0 0.0
        %v3104 = vand.u32 %v362, 4294901760
        %v3105 = vsub.f32 %v362, %v3104
        %3106 = vmatpush1.msra.mxu0 %v3105
        %3107 = vmatprep.subr.mxu0 0.0
        %v3108 = vand.u32 %v363, 4294901760
        %v3109 = vsub.f32 %v363, %v3108
        %3110 = vmatpush1.msra.mxu0 %v3109
        %3111 = vmatprep.subr.mxu0 0.0
        %v3112 = vand.u32 %v364, 4294901760
        %v3113 = vsub.f32 %v364, %v3112
        %3114 = vmatpush1.msra.mxu0 %v3113
        %3115 = vmatprep.subr.mxu0 0.0
        %v3116 = vand.u32 %v365, 4294901760
        %v3117 = vsub.f32 %v365, %v3116
        %3118 = vmatpush1.msra.mxu0 %v3117
        %3119 = vmatprep.subr.mxu0 0.0
        %v3120 = vand.u32 %v366, 4294901760
        %v3121 = vsub.f32 %v366, %v3120
        %3122 = vmatpush1.msra.mxu0 %v3121
        %3123 = vmatprep.subr.mxu0 0.0
        %v3124 = vand.u32 %v367, 4294901760
        %v3125 = vsub.f32 %v367, %v3124
        %3126 = vmatpush1.msra.mxu0 %v3125
        %3127 = vmatprep.subr.mxu0 0.0
        %v3128 = vand.u32 %v368, 4294901760
        %v3129 = vsub.f32 %v368, %v3128
        %3130 = vmatpush1.msra.mxu0 %v3129
        %3131 = vmatprep.subr.mxu0 0.0
        %v3132 = vand.u32 %v369, 4294901760
        %v3133 = vsub.f32 %v369, %v3132
        %3134 = vmatpush1.msra.mxu0 %v3133
        %3135 = vmatprep.subr.mxu0 0.0
        %v3136 = vand.u32 %v370, 4294901760
        %v3137 = vsub.f32 %v370, %v3136
        %3138 = vmatpush1.msra.mxu0 %v3137
        %3139 = vmatprep.subr.mxu0 0.0
        %v3140 = vand.u32 %v371, 4294901760
        %v3141 = vsub.f32 %v371, %v3140
        %3142 = vmatpush1.msra.mxu0 %v3141
        %3143 = vmatprep.subr.mxu0 0.0
        %v3144 = vand.u32 %v372, 4294901760
        %v3145 = vsub.f32 %v372, %v3144
        %3146 = vmatpush1.msra.mxu0 %v3145
        %3147 = vmatprep.subr.mxu0 0.0
        %v3148 = vand.u32 %v373, 4294901760
        %v3149 = vsub.f32 %v373, %v3148
        %3150 = vmatpush1.msra.mxu0 %v3149
        %v3151 = vand.u32 %v199, 4294901760
        %v3152 = vsub.f32 %v199, %v3151
        %3153 = vmatprep.mubr.f32.mxu0 %v3152
        %v3154 = vand.u32 %v198, 4294901760
        %v3155 = vsub.f32 %v198, %v3154
        %3156 = vmatmul.mubr.f32.gmra.mrb[0].mxu0 %v3155
        %v3157 = vpop.f32.mrb[0].mxu0
        %v3158 = vadd.f32 %v2894, %v3157
        %v3159 = vpop.f32.mrb[0].mxu0
        %v3160 = vand.u32 %v205, 4294901760
        %v3161 = vsub.f32 %v205, %v3160
        %3162 = vmatprep.mubr.f32.mxu0 %v3161
        %v3163 = vand.u32 %v204, 4294901760
        %v3164 = vsub.f32 %v204, %v3163
        %3165 = vmatmul.mubr.f32.gmra.mrb[0].mxu0 %v3164
        %v3166 = vpop.f32.mrb[0].mxu0
        %v3167 = vadd.f32 %v2901, %v3166
        %v3168 = vpop.f32.mrb[0].mxu0
        %v3169 = vand.u32 %v211, 4294901760
        %v3170 = vsub.f32 %v211, %v3169
        %3171 = vmatprep.mubr.f32.mxu0 %v3170
        %v3172 = vand.u32 %v210, 4294901760
        %v3173 = vsub.f32 %v210, %v3172
        %3174 = vmatmul.mubr.f32.gmra.mrb[0].mxu0 %v3173
        %v3175 = vpop.f32.mrb[0].mxu0
        %v3176 = vadd.f32 %v2908, %v3175
        %v3177 = vpop.f32.mrb[0].mxu0
        %v3178 = vand.u32 %v217, 4294901760
        %v3179 = vsub.f32 %v217, %v3178
        %3180 = vmatprep.mubr.f32.mxu0 %v3179
        %v3181 = vand.u32 %v216, 4294901760
        %v3182 = vsub.f32 %v216, %v3181
        %3183 = vmatmul.mubr.f32.gmra.mrb[0].mxu0 %v3182
        %v3184 = vpop.f32.mrb[0].mxu0
        %v3185 = vadd.f32 %v2915, %v3184
        %v3186 = vpop.f32.mrb[0].mxu0
        %v3187 = vand.u32 %v223, 4294901760
        %v3188 = vsub.f32 %v223, %v3187
        %3189 = vmatprep.mubr.f32.mxu0 %v3188
        %v3190 = vand.u32 %v222, 4294901760
        %v3191 = vsub.f32 %v222, %v3190
        %3192 = vmatmul.mubr.f32.gmra.mrb[0].mxu0 %v3191
        %v3193 = vpop.f32.mrb[0].mxu0
        %v3194 = vadd.f32 %v2922, %v3193
        %v3195 = vpop.f32.mrb[0].mxu0
        %v3196 = vand.u32 %v229, 4294901760
        %v3197 = vsub.f32 %v229, %v3196
        %3198 = vmatprep.mubr.f32.mxu0 %v3197
        %v3199 = vand.u32 %v228, 4294901760
        %v3200 = vsub.f32 %v228, %v3199
        %3201 = vmatmul.mubr.f32.gmra.mrb[0].mxu0 %v3200
        %v3202 = vpop.f32.mrb[0].mxu0
        %v3203 = vadd.f32 %v2929, %v3202
        %v3204 = vpop.f32.mrb[0].mxu0
        %v3205 = vand.u32 %v235, 4294901760
        %v3206 = vsub.f32 %v235, %v3205
        %3207 = vmatprep.mubr.f32.mxu0 %v3206
        %v3208 = vand.u32 %v234, 4294901760
        %v3209 = vsub.f32 %v234, %v3208
        %3210 = vmatmul.mubr.f32.gmra.mrb[0].mxu0 %v3209
        %v3211 = vpop.f32.mrb[0].mxu0
        %v3212 = vadd.f32 %v2936, %v3211
        %v3213 = vpop.f32.mrb[0].mxu0
        %v3214 = vand.u32 %v241, 4294901760
        %v3215 = vsub.f32 %v241, %v3214
        %3216 = vmatprep.mubr.f32.mxu0 %v3215
        %v3217 = vand.u32 %v240, 4294901760
        %v3218 = vsub.f32 %v240, %v3217
        %3219 = vmatmul.mubr.f32.gmra.mrb[0].mxu0 %v3218
        %v3220 = vpop.f32.mrb[0].mxu0
        %v3221 = vadd.f32 %v2943, %v3220
        %v3222 = vpop.f32.mrb[0].mxu0
        %v3223 = vand.u32 %v247, 4294901760
        %v3224 = vsub.f32 %v247, %v3223
        %3225 = vmatprep.mubr.f32.mxu0 %v3224
        %v3226 = vand.u32 %v246, 4294901760
        %v3227 = vsub.f32 %v246, %v3226
        %3228 = vmatmul.mubr.f32.gmra.mrb[0].mxu0 %v3227
        %v3229 = vpop.f32.mrb[0].mxu0
        %v3230 = vadd.f32 %v2950, %v3229
        %v3231 = vpop.f32.mrb[0].mxu0
        %v3232 = vand.u32 %v253, 4294901760
        %v3233 = vsub.f32 %v253, %v3232
        %3234 = vmatprep.mubr.f32.mxu0 %v3233
        %v3235 = vand.u32 %v252, 4294901760
        %v3236 = vsub.f32 %v252, %v3235
        %3237 = vmatmul.mubr.f32.gmra.mrb[0].mxu0 %v3236
        %v3238 = vpop.f32.mrb[0].mxu0
        %v3239 = vadd.f32 %v2957, %v3238
        %v3240 = vpop.f32.mrb[0].mxu0
        %v3241 = vand.u32 %v259, 4294901760
        %v3242 = vsub.f32 %v259, %v3241
        %3243 = vmatprep.mubr.f32.mxu0 %v3242
        %v3244 = vand.u32 %v258, 4294901760
        %v3245 = vsub.f32 %v258, %v3244
        %3246 = vmatmul.mubr.f32.gmra.mrb[0].mxu0 %v3245
        %v3247 = vpop.f32.mrb[0].mxu0
        %v3248 = vadd.f32 %v2964, %v3247
        %v3249 = vpop.f32.mrb[0].mxu0
        %v3250 = vand.u32 %v265, 4294901760
        %v3251 = vsub.f32 %v265, %v3250
        %3252 = vmatprep.mubr.f32.mxu0 %v3251
        %v3253 = vand.u32 %v264, 4294901760
        %v3254 = vsub.f32 %v264, %v3253
        %3255 = vmatmul.mubr.f32.gmra.mrb[0].mxu0 %v3254
        %v3256 = vpop.f32.mrb[0].mxu0
        %v3257 = vadd.f32 %v2971, %v3256
        %v3258 = vpop.f32.mrb[0].mxu0
        %v3259 = vand.u32 %v271, 4294901760
        %v3260 = vsub.f32 %v271, %v3259
        %3261 = vmatprep.mubr.f32.mxu0 %v3260
        %v3262 = vand.u32 %v270, 4294901760
        %v3263 = vsub.f32 %v270, %v3262
        %3264 = vmatmul.mubr.f32.gmra.mrb[0].mxu0 %v3263
        %v3265 = vpop.f32.mrb[0].mxu0
        %v3266 = vadd.f32 %v2978, %v3265
        %v3267 = vpop.f32.mrb[0].mxu0
        %v3268 = vand.u32 %v277, 4294901760
        %v3269 = vsub.f32 %v277, %v3268
        %3270 = vmatprep.mubr.f32.mxu0 %v3269
        %v3271 = vand.u32 %v276, 4294901760
        %v3272 = vsub.f32 %v276, %v3271
        %3273 = vmatmul.mubr.f32.gmra.mrb[0].mxu0 %v3272
        %v3274 = vpop.f32.mrb[0].mxu0
        %v3275 = vadd.f32 %v2985, %v3274
        %v3276 = vpop.f32.mrb[0].mxu0
        %v3277 = vand.u32 %v283, 4294901760
        %v3278 = vsub.f32 %v283, %v3277
        %3279 = vmatprep.mubr.f32.mxu0 %v3278
        %v3280 = vand.u32 %v282, 4294901760
        %v3281 = vsub.f32 %v282, %v3280
        %3282 = vmatmul.mubr.f32.gmra.mrb[0].mxu0 %v3281
        %v3283 = vpop.f32.mrb[0].mxu0
        %v3284 = vadd.f32 %v2992, %v3283
        %v3285 = vpop.f32.mrb[0].mxu0
        %v3286 = vand.u32 %v289, 4294901760
        %v3287 = vsub.f32 %v289, %v3286
        %3288 = vmatprep.mubr.f32.mxu0 %v3287
        %v3289 = vand.u32 %v288, 4294901760
        %v3290 = vsub.f32 %v288, %v3289
        %3291 = vmatmul.mubr.f32.gmra.mrb[0].mxu0 %v3290
        %v3292 = vpop.f32.mrb[0].mxu0
        %v3293 = vadd.f32 %v2999, %v3292
        %v3294 = vpop.f32.mrb[0].mxu0
        %v3295 = vand.u32 %v295, 4294901760
        %v3296 = vsub.f32 %v295, %v3295
        %3297 = vmatprep.mubr.f32.mxu0 %v3296
        %v3298 = vand.u32 %v294, 4294901760
        %v3299 = vsub.f32 %v294, %v3298
        %3300 = vmatmul.mubr.f32.gmra.mrb[0].mxu0 %v3299
        %v3301 = vpop.f32.mrb[0].mxu0
        %v3302 = vadd.f32 %v3006, %v3301
        %v3303 = vpop.f32.mrb[0].mxu0
        %v3304 = vand.u32 %v301, 4294901760
        %v3305 = vsub.f32 %v301, %v3304
        %3306 = vmatprep.mubr.f32.mxu0 %v3305
        %v3307 = vand.u32 %v300, 4294901760
        %v3308 = vsub.f32 %v300, %v3307
        %3309 = vmatmul.mubr.f32.gmra.mrb[0].mxu0 %v3308
        %v3310 = vpop.f32.mrb[0].mxu0
        %v3311 = vadd.f32 %v3013, %v3310
        %v3312 = vpop.f32.mrb[0].mxu0
        %v3313 = vand.u32 %v307, 4294901760
        %v3314 = vsub.f32 %v307, %v3313
        %3315 = vmatprep.mubr.f32.mxu0 %v3314
        %v3316 = vand.u32 %v306, 4294901760
        %v3317 = vsub.f32 %v306, %v3316
        %3318 = vmatmul.mubr.f32.gmra.mrb[0].mxu0 %v3317
        %v3319 = vpop.f32.mrb[0].mxu0
        %v3320 = vadd.f32 %v3020, %v3319
        %v3321 = vpop.f32.mrb[0].mxu0
        %3322 = vdwg.mxu0
        %3323 = vmatprep.subr.mxu0 0.0
        %v3324 = vand.u32 %v342, 4294901760
        %3325 = vmatpush1.msra.mxu0 %v3324
        %3326 = vmatprep.subr.mxu0 0.0
        %v3327 = vand.u32 %v343, 4294901760
        %3328 = vmatpush1.msra.mxu0 %v3327
        %3329 = vmatprep.subr.mxu0 0.0
        %v3330 = vand.u32 %v344, 4294901760
        %3331 = vmatpush1.msra.mxu0 %v3330
        %3332 = vmatprep.subr.mxu0 0.0
        %v3333 = vand.u32 %v345, 4294901760
        %3334 = vmatpush1.msra.mxu0 %v3333
        %3335 = vmatprep.subr.mxu0 0.0
        %v3336 = vand.u32 %v346, 4294901760
        %3337 = vmatpush1.msra.mxu0 %v3336
        %3338 = vmatprep.subr.mxu0 0.0
        %v3339 = vand.u32 %v347, 4294901760
        %3340 = vmatpush1.msra.mxu0 %v3339
        %3341 = vmatprep.subr.mxu0 0.0
        %v3342 = vand.u32 %v348, 4294901760
        %3343 = vmatpush1.msra.mxu0 %v3342
        %3344 = vmatprep.subr.mxu0 0.0
        %v3345 = vand.u32 %v349, 4294901760
        %3346 = vmatpush1.msra.mxu0 %v3345
        %3347 = vmatprep.subr.mxu0 0.0
        %v3348 = vand.u32 %v350, 4294901760
        %3349 = vmatpush1.msra.mxu0 %v3348
        %3350 = vmatprep.subr.mxu0 0.0
        %v3351 = vand.u32 %v351, 4294901760
        %3352 = vmatpush1.msra.mxu0 %v3351
        %3353 = vmatprep.subr.mxu0 0.0
        %v3354 = vand.u32 %v352, 4294901760
        %3355 = vmatpush1.msra.mxu0 %v3354
        %3356 = vmatprep.subr.mxu0 0.0
        %v3357 = vand.u32 %v353, 4294901760
        %3358 = vmatpush1.msra.mxu0 %v3357
        %3359 = vmatprep.subr.mxu0 0.0
        %v3360 = vand.u32 %v354, 4294901760
        %3361 = vmatpush1.msra.mxu0 %v3360
        %3362 = vmatprep.subr.mxu0 0.0
        %v3363 = vand.u32 %v355, 4294901760
        %3364 = vmatpush1.msra.mxu0 %v3363
        %3365 = vmatprep.subr.mxu0 0.0
        %v3366 = vand.u32 %v356, 4294901760
        %3367 = vmatpush1.msra.mxu0 %v3366
        %3368 = vmatprep.subr.mxu0 0.0
        %v3369 = vand.u32 %v357, 4294901760
        %3370 = vmatpush1.msra.mxu0 %v3369
        %3371 = vmatprep.subr.mxu0 0.0
        %v3372 = vand.u32 %v358, 4294901760
        %3373 = vmatpush1.msra.mxu0 %v3372
        %3374 = vmatprep.subr.mxu0 0.0
        %v3375 = vand.u32 %v359, 4294901760
        %3376 = vmatpush1.msra.mxu0 %v3375
        %3377 = vmatprep.subr.mxu0 0.0
        %v3378 = vand.u32 %v360, 4294901760
        %3379 = vmatpush1.msra.mxu0 %v3378
        %3380 = vmatprep.subr.mxu0 0.0
        %v3381 = vand.u32 %v361, 4294901760
        %3382 = vmatpush1.msra.mxu0 %v3381
        %3383 = vmatprep.subr.mxu0 0.0
        %v3384 = vand.u32 %v362, 4294901760
        %3385 = vmatpush1.msra.mxu0 %v3384
        %3386 = vmatprep.subr.mxu0 0.0
        %v3387 = vand.u32 %v363, 4294901760
        %3388 = vmatpush1.msra.mxu0 %v3387
        %3389 = vmatprep.subr.mxu0 0.0
        %v3390 = vand.u32 %v364, 4294901760
        %3391 = vmatpush1.msra.mxu0 %v3390
        %3392 = vmatprep.subr.mxu0 0.0
        %v3393 = vand.u32 %v365, 4294901760
        %3394 = vmatpush1.msra.mxu0 %v3393
        %3395 = vmatprep.subr.mxu0 0.0
        %v3396 = vand.u32 %v366, 4294901760
        %3397 = vmatpush1.msra.mxu0 %v3396
        %3398 = vmatprep.subr.mxu0 0.0
        %v3399 = vand.u32 %v367, 4294901760
        %3400 = vmatpush1.msra.mxu0 %v3399
        %3401 = vmatprep.subr.mxu0 0.0
        %v3402 = vand.u32 %v368, 4294901760
        %3403 = vmatpush1.msra.mxu0 %v3402
        %3404 = vmatprep.subr.mxu0 0.0
        %v3405 = vand.u32 %v369, 4294901760
        %3406 = vmatpush1.msra.mxu0 %v3405
        %3407 = vmatprep.subr.mxu0 0.0
        %v3408 = vand.u32 %v370, 4294901760
        %3409 = vmatpush1.msra.mxu0 %v3408
        %3410 = vmatprep.subr.mxu0 0.0
        %v3411 = vand.u32 %v371, 4294901760
        %3412 = vmatpush1.msra.mxu0 %v3411
        %3413 = vmatprep.subr.mxu0 0.0
        %v3414 = vand.u32 %v372, 4294901760
        %3415 = vmatpush1.msra.mxu0 %v3414
        %3416 = vmatprep.subr.mxu0 0.0
        %v3417 = vand.u32 %v373, 4294901760
        %3418 = vmatpush1.msra.mxu0 %v3417
        %v3419 = vand.u32 %v199, 4294901760
        %v3420 = vsub.f32 %v199, %v3419
        %v3421 = vand.u32 %v3420, 4294901760
        %3422 = vmatprep.mubr.f32.mxu0 %v3421
        %v3423 = vand.u32 %v198, 4294901760
        %v3424 = vsub.f32 %v198, %v3423
        %v3425 = vand.u32 %v3424, 4294901760
        %3426 = vmatmul.mubr.f32.gmra.mrb[0].mxu0 %v3425
        %v3427 = vpop.f32.mrb[0].mxu0
        %v3428 = vadd.f32 %v3158, %v3427
        %v3429 = vpop.f32.mrb[0].mxu0
        %v3430 = vand.u32 %v205, 4294901760
        %v3431 = vsub.f32 %v205, %v3430
        %v3432 = vand.u32 %v3431, 4294901760
        %3433 = vmatprep.mubr.f32.mxu0 %v3432
        %v3434 = vand.u32 %v204, 4294901760
        %v3435 = vsub.f32 %v204, %v3434
        %v3436 = vand.u32 %v3435, 4294901760
        %3437 = vmatmul.mubr.f32.gmra.mrb[0].mxu0 %v3436
        %v3438 = vpop.f32.mrb[0].mxu0
        %v3439 = vadd.f32 %v3167, %v3438
        %v3440 = vpop.f32.mrb[0].mxu0
        %v3441 = vand.u32 %v211, 4294901760
        %v3442 = vsub.f32 %v211, %v3441
        %v3443 = vand.u32 %v3442, 4294901760
        %3444 = vmatprep.mubr.f32.mxu0 %v3443
        %v3445 = vand.u32 %v210, 4294901760
        %v3446 = vsub.f32 %v210, %v3445
        %v3447 = vand.u32 %v3446, 4294901760
        %3448 = vmatmul.mubr.f32.gmra.mrb[0].mxu0 %v3447
        %v3449 = vpop.f32.mrb[0].mxu0
        %v3450 = vadd.f32 %v3176, %v3449
        %v3451 = vpop.f32.mrb[0].mxu0
        %v3452 = vand.u32 %v217, 4294901760
        %v3453 = vsub.f32 %v217, %v3452
        %v3454 = vand.u32 %v3453, 4294901760
        %3455 = vmatprep.mubr.f32.mxu0 %v3454
        %v3456 = vand.u32 %v216, 4294901760
        %v3457 = vsub.f32 %v216, %v3456
        %v3458 = vand.u32 %v3457, 4294901760
        %3459 = vmatmul.mubr.f32.gmra.mrb[0].mxu0 %v3458
        %v3460 = vpop.f32.mrb[0].mxu0
        %v3461 = vadd.f32 %v3185, %v3460
        %v3462 = vpop.f32.mrb[0].mxu0
        %v3463 = vand.u32 %v223, 4294901760
        %v3464 = vsub.f32 %v223, %v3463
        %v3465 = vand.u32 %v3464, 4294901760
        %3466 = vmatprep.mubr.f32.mxu0 %v3465
        %v3467 = vand.u32 %v222, 4294901760
        %v3468 = vsub.f32 %v222, %v3467
        %v3469 = vand.u32 %v3468, 4294901760
        %3470 = vmatmul.mubr.f32.gmra.mrb[0].mxu0 %v3469
        %v3471 = vpop.f32.mrb[0].mxu0
        %v3472 = vadd.f32 %v3194, %v3471
        %v3473 = vpop.f32.mrb[0].mxu0
        %v3474 = vand.u32 %v229, 4294901760
        %v3475 = vsub.f32 %v229, %v3474
        %v3476 = vand.u32 %v3475, 4294901760
        %3477 = vmatprep.mubr.f32.mxu0 %v3476
        %v3478 = vand.u32 %v228, 4294901760
        %v3479 = vsub.f32 %v228, %v3478
        %v3480 = vand.u32 %v3479, 4294901760
        %3481 = vmatmul.mubr.f32.gmra.mrb[0].mxu0 %v3480
        %v3482 = vpop.f32.mrb[0].mxu0
        %v3483 = vadd.f32 %v3203, %v3482
        %v3484 = vpop.f32.mrb[0].mxu0
        %v3485 = vand.u32 %v235, 4294901760
        %v3486 = vsub.f32 %v235, %v3485
        %v3487 = vand.u32 %v3486, 4294901760
        %3488 = vmatprep.mubr.f32.mxu0 %v3487
        %v3489 = vand.u32 %v234, 4294901760
        %v3490 = vsub.f32 %v234, %v3489
        %v3491 = vand.u32 %v3490, 4294901760
        %3492 = vmatmul.mubr.f32.gmra.mrb[0].mxu0 %v3491
        %v3493 = vpop.f32.mrb[0].mxu0
        %v3494 = vadd.f32 %v3212, %v3493
        %v3495 = vpop.f32.mrb[0].mxu0
        %v3496 = vand.u32 %v241, 4294901760
        %v3497 = vsub.f32 %v241, %v3496
        %v3498 = vand.u32 %v3497, 4294901760
        %3499 = vmatprep.mubr.f32.mxu0 %v3498
        %v3500 = vand.u32 %v240, 4294901760
        %v3501 = vsub.f32 %v240, %v3500
        %v3502 = vand.u32 %v3501, 4294901760
        %3503 = vmatmul.mubr.f32.gmra.mrb[0].mxu0 %v3502
        %v3504 = vpop.f32.mrb[0].mxu0
        %v3505 = vadd.f32 %v3221, %v3504
        %v3506 = vpop.f32.mrb[0].mxu0
        %v3507 = vand.u32 %v247, 4294901760
        %v3508 = vsub.f32 %v247, %v3507
        %v3509 = vand.u32 %v3508, 4294901760
        %3510 = vmatprep.mubr.f32.mxu0 %v3509
        %v3511 = vand.u32 %v246, 4294901760
        %v3512 = vsub.f32 %v246, %v3511
        %v3513 = vand.u32 %v3512, 4294901760
        %3514 = vmatmul.mubr.f32.gmra.mrb[0].mxu0 %v3513
        %v3515 = vpop.f32.mrb[0].mxu0
        %v3516 = vadd.f32 %v3230, %v3515
        %v3517 = vpop.f32.mrb[0].mxu0
        %v3518 = vand.u32 %v253, 4294901760
        %v3519 = vsub.f32 %v253, %v3518
        %v3520 = vand.u32 %v3519, 4294901760
        %3521 = vmatprep.mubr.f32.mxu0 %v3520
        %v3522 = vand.u32 %v252, 4294901760
        %v3523 = vsub.f32 %v252, %v3522
        %v3524 = vand.u32 %v3523, 4294901760
        %3525 = vmatmul.mubr.f32.gmra.mrb[0].mxu0 %v3524
        %v3526 = vpop.f32.mrb[0].mxu0
        %v3527 = vadd.f32 %v3239, %v3526
        %v3528 = vpop.f32.mrb[0].mxu0
        %v3529 = vand.u32 %v259, 4294901760
        %v3530 = vsub.f32 %v259, %v3529
        %v3531 = vand.u32 %v3530, 4294901760
        %3532 = vmatprep.mubr.f32.mxu0 %v3531
        %v3533 = vand.u32 %v258, 4294901760
        %v3534 = vsub.f32 %v258, %v3533
        %v3535 = vand.u32 %v3534, 4294901760
        %3536 = vmatmul.mubr.f32.gmra.mrb[0].mxu0 %v3535
        %v3537 = vpop.f32.mrb[0].mxu0
        %v3538 = vadd.f32 %v3248, %v3537
        %v3539 = vpop.f32.mrb[0].mxu0
        %v3540 = vand.u32 %v265, 4294901760
        %v3541 = vsub.f32 %v265, %v3540
        %v3542 = vand.u32 %v3541, 4294901760
        %3543 = vmatprep.mubr.f32.mxu0 %v3542
        %v3544 = vand.u32 %v264, 4294901760
        %v3545 = vsub.f32 %v264, %v3544
        %v3546 = vand.u32 %v3545, 4294901760
        %3547 = vmatmul.mubr.f32.gmra.mrb[0].mxu0 %v3546
        %v3548 = vpop.f32.mrb[0].mxu0
        %v3549 = vadd.f32 %v3257, %v3548
        %v3550 = vpop.f32.mrb[0].mxu0
        %v3551 = vand.u32 %v271, 4294901760
        %v3552 = vsub.f32 %v271, %v3551
        %v3553 = vand.u32 %v3552, 4294901760
        %3554 = vmatprep.mubr.f32.mxu0 %v3553
        %v3555 = vand.u32 %v270, 4294901760
        %v3556 = vsub.f32 %v270, %v3555
        %v3557 = vand.u32 %v3556, 4294901760
        %3558 = vmatmul.mubr.f32.gmra.mrb[0].mxu0 %v3557
        %v3559 = vpop.f32.mrb[0].mxu0
        %v3560 = vadd.f32 %v3266, %v3559
        %v3561 = vpop.f32.mrb[0].mxu0
        %v3562 = vand.u32 %v277, 4294901760
        %v3563 = vsub.f32 %v277, %v3562
        %v3564 = vand.u32 %v3563, 4294901760
        %3565 = vmatprep.mubr.f32.mxu0 %v3564
        %v3566 = vand.u32 %v276, 4294901760
        %v3567 = vsub.f32 %v276, %v3566
        %v3568 = vand.u32 %v3567, 4294901760
        %3569 = vmatmul.mubr.f32.gmra.mrb[0].mxu0 %v3568
        %v3570 = vpop.f32.mrb[0].mxu0
        %v3571 = vadd.f32 %v3275, %v3570
        %v3572 = vpop.f32.mrb[0].mxu0
        %v3573 = vand.u32 %v283, 4294901760
        %v3574 = vsub.f32 %v283, %v3573
        %v3575 = vand.u32 %v3574, 4294901760
        %3576 = vmatprep.mubr.f32.mxu0 %v3575
        %v3577 = vand.u32 %v282, 4294901760
        %v3578 = vsub.f32 %v282, %v3577
        %v3579 = vand.u32 %v3578, 4294901760
        %3580 = vmatmul.mubr.f32.gmra.mrb[0].mxu0 %v3579
        %v3581 = vpop.f32.mrb[0].mxu0
        %v3582 = vadd.f32 %v3284, %v3581
        %v3583 = vpop.f32.mrb[0].mxu0
        %v3584 = vand.u32 %v289, 4294901760
        %v3585 = vsub.f32 %v289, %v3584
        %v3586 = vand.u32 %v3585, 4294901760
        %3587 = vmatprep.mubr.f32.mxu0 %v3586
        %v3588 = vand.u32 %v288, 4294901760
        %v3589 = vsub.f32 %v288, %v3588
        %v3590 = vand.u32 %v3589, 4294901760
        %3591 = vmatmul.mubr.f32.gmra.mrb[0].mxu0 %v3590
        %v3592 = vpop.f32.mrb[0].mxu0
        %v3593 = vadd.f32 %v3293, %v3592
        %v3594 = vpop.f32.mrb[0].mxu0
        %v3595 = vand.u32 %v295, 4294901760
        %v3596 = vsub.f32 %v295, %v3595
        %v3597 = vand.u32 %v3596, 4294901760
        %3598 = vmatprep.mubr.f32.mxu0 %v3597
        %v3599 = vand.u32 %v294, 4294901760
        %v3600 = vsub.f32 %v294, %v3599
        %v3601 = vand.u32 %v3600, 4294901760
        %3602 = vmatmul.mubr.f32.gmra.mrb[0].mxu0 %v3601
        %v3603 = vpop.f32.mrb[0].mxu0
        %v3604 = vadd.f32 %v3302, %v3603
        %v3605 = vpop.f32.mrb[0].mxu0
        %v3606 = vand.u32 %v301, 4294901760
        %v3607 = vsub.f32 %v301, %v3606
        %v3608 = vand.u32 %v3607, 4294901760
        %3609 = vmatprep.mubr.f32.mxu0 %v3608
        %v3610 = vand.u32 %v300, 4294901760
        %v3611 = vsub.f32 %v300, %v3610
        %v3612 = vand.u32 %v3611, 4294901760
        %3613 = vmatmul.mubr.f32.gmra.mrb[0].mxu0 %v3612
        %v3614 = vpop.f32.mrb[0].mxu0
        %v3615 = vadd.f32 %v3311, %v3614
        %v3616 = vpop.f32.mrb[0].mxu0
        %v3617 = vand.u32 %v307, 4294901760
        %v3618 = vsub.f32 %v307, %v3617
        %v3619 = vand.u32 %v3618, 4294901760
        %3620 = vmatprep.mubr.f32.mxu0 %v3619
        %v3621 = vand.u32 %v306, 4294901760
        %v3622 = vsub.f32 %v306, %v3621
        %v3623 = vand.u32 %v3622, 4294901760
        %3624 = vmatmul.mubr.f32.gmra.mrb[0].mxu0 %v3623
        %v3625 = vpop.f32.mrb[0].mxu0
        %v3626 = vadd.f32 %v3320, %v3625
        %v3627 = vpop.f32.mrb[0].mxu0
        %3628 = vdwg.mxu0
        %3629 = vmatprep.subr.mxu0 0.0
        %v3630 = vand.u32 %v342, 4294901760
        %v3631 = vsub.f32 %v342, %v3630
        %v3632 = vand.u32 %v3631, 4294901760
        %3633 = vmatpush1.msra.mxu0 %v3632
        %3634 = vmatprep.subr.mxu0 0.0
        %v3635 = vand.u32 %v343, 4294901760
        %v3636 = vsub.f32 %v343, %v3635
        %v3637 = vand.u32 %v3636, 4294901760
        %3638 = vmatpush1.msra.mxu0 %v3637
        %3639 = vmatprep.subr.mxu0 0.0
        %v3640 = vand.u32 %v344, 4294901760
        %v3641 = vsub.f32 %v344, %v3640
        %v3642 = vand.u32 %v3641, 4294901760
        %3643 = vmatpush1.msra.mxu0 %v3642
        %3644 = vmatprep.subr.mxu0 0.0
        %v3645 = vand.u32 %v345, 4294901760
        %v3646 = vsub.f32 %v345, %v3645
        %v3647 = vand.u32 %v3646, 4294901760
        %3648 = vmatpush1.msra.mxu0 %v3647
        %3649 = vmatprep.subr.mxu0 0.0
        %v3650 = vand.u32 %v346, 4294901760
        %v3651 = vsub.f32 %v346, %v3650
        %v3652 = vand.u32 %v3651, 4294901760
        %3653 = vmatpush1.msra.mxu0 %v3652
        %3654 = vmatprep.subr.mxu0 0.0
        %v3655 = vand.u32 %v347, 4294901760
        %v3656 = vsub.f32 %v347, %v3655
        %v3657 = vand.u32 %v3656, 4294901760
        %3658 = vmatpush1.msra.mxu0 %v3657
        %3659 = vmatprep.subr.mxu0 0.0
        %v3660 = vand.u32 %v348, 4294901760
        %v3661 = vsub.f32 %v348, %v3660
        %v3662 = vand.u32 %v3661, 4294901760
        %3663 = vmatpush1.msra.mxu0 %v3662
        %3664 = vmatprep.subr.mxu0 0.0
        %v3665 = vand.u32 %v349, 4294901760
        %v3666 = vsub.f32 %v349, %v3665
        %v3667 = vand.u32 %v3666, 4294901760
        %3668 = vmatpush1.msra.mxu0 %v3667
        %3669 = vmatprep.subr.mxu0 0.0
        %v3670 = vand.u32 %v350, 4294901760
        %v3671 = vsub.f32 %v350, %v3670
        %v3672 = vand.u32 %v3671, 4294901760
        %3673 = vmatpush1.msra.mxu0 %v3672
        %3674 = vmatprep.subr.mxu0 0.0
        %v3675 = vand.u32 %v351, 4294901760
        %v3676 = vsub.f32 %v351, %v3675
        %v3677 = vand.u32 %v3676, 4294901760
        %3678 = vmatpush1.msra.mxu0 %v3677
        %3679 = vmatprep.subr.mxu0 0.0
        %v3680 = vand.u32 %v352, 4294901760
        %v3681 = vsub.f32 %v352, %v3680
        %v3682 = vand.u32 %v3681, 4294901760
        %3683 = vmatpush1.msra.mxu0 %v3682
        %3684 = vmatprep.subr.mxu0 0.0
        %v3685 = vand.u32 %v353, 4294901760
        %v3686 = vsub.f32 %v353, %v3685
        %v3687 = vand.u32 %v3686, 4294901760
        %3688 = vmatpush1.msra.mxu0 %v3687
        %3689 = vmatprep.subr.mxu0 0.0
        %v3690 = vand.u32 %v354, 4294901760
        %v3691 = vsub.f32 %v354, %v3690
        %v3692 = vand.u32 %v3691, 4294901760
        %3693 = vmatpush1.msra.mxu0 %v3692
        %3694 = vmatprep.subr.mxu0 0.0
        %v3695 = vand.u32 %v355, 4294901760
        %v3696 = vsub.f32 %v355, %v3695
        %v3697 = vand.u32 %v3696, 4294901760
        %3698 = vmatpush1.msra.mxu0 %v3697
        %3699 = vmatprep.subr.mxu0 0.0
        %v3700 = vand.u32 %v356, 4294901760
        %v3701 = vsub.f32 %v356, %v3700
        %v3702 = vand.u32 %v3701, 4294901760
        %3703 = vmatpush1.msra.mxu0 %v3702
        %3704 = vmatprep.subr.mxu0 0.0
        %v3705 = vand.u32 %v357, 4294901760
        %v3706 = vsub.f32 %v357, %v3705
        %v3707 = vand.u32 %v3706, 4294901760
        %3708 = vmatpush1.msra.mxu0 %v3707
        %3709 = vmatprep.subr.mxu0 0.0
        %v3710 = vand.u32 %v358, 4294901760
        %v3711 = vsub.f32 %v358, %v3710
        %v3712 = vand.u32 %v3711, 4294901760
        %3713 = vmatpush1.msra.mxu0 %v3712
        %3714 = vmatprep.subr.mxu0 0.0
        %v3715 = vand.u32 %v359, 4294901760
        %v3716 = vsub.f32 %v359, %v3715
        %v3717 = vand.u32 %v3716, 4294901760
        %3718 = vmatpush1.msra.mxu0 %v3717
        %3719 = vmatprep.subr.mxu0 0.0
        %v3720 = vand.u32 %v360, 4294901760
        %v3721 = vsub.f32 %v360, %v3720
        %v3722 = vand.u32 %v3721, 4294901760
        %3723 = vmatpush1.msra.mxu0 %v3722
        %3724 = vmatprep.subr.mxu0 0.0
        %v3725 = vand.u32 %v361, 4294901760
        %v3726 = vsub.f32 %v361, %v3725
        %v3727 = vand.u32 %v3726, 4294901760
        %3728 = vmatpush1.msra.mxu0 %v3727
        %3729 = vmatprep.subr.mxu0 0.0
        %v3730 = vand.u32 %v362, 4294901760
        %v3731 = vsub.f32 %v362, %v3730
        %v3732 = vand.u32 %v3731, 4294901760
        %3733 = vmatpush1.msra.mxu0 %v3732
        %3734 = vmatprep.subr.mxu0 0.0
        %v3735 = vand.u32 %v363, 4294901760
        %v3736 = vsub.f32 %v363, %v3735
        %v3737 = vand.u32 %v3736, 4294901760
        %3738 = vmatpush1.msra.mxu0 %v3737
        %3739 = vmatprep.subr.mxu0 0.0
        %v3740 = vand.u32 %v364, 4294901760
        %v3741 = vsub.f32 %v364, %v3740
        %v3742 = vand.u32 %v3741, 4294901760
        %3743 = vmatpush1.msra.mxu0 %v3742
        %3744 = vmatprep.subr.mxu0 0.0
        %v3745 = vand.u32 %v365, 4294901760
        %v3746 = vsub.f32 %v365, %v3745
        %v3747 = vand.u32 %v3746, 4294901760
        %3748 = vmatpush1.msra.mxu0 %v3747
        %3749 = vmatprep.subr.mxu0 0.0
        %v3750 = vand.u32 %v366, 4294901760
        %v3751 = vsub.f32 %v366, %v3750
        %v3752 = vand.u32 %v3751, 4294901760
        %3753 = vmatpush1.msra.mxu0 %v3752
        %3754 = vmatprep.subr.mxu0 0.0
        %v3755 = vand.u32 %v367, 4294901760
        %v3756 = vsub.f32 %v367, %v3755
        %v3757 = vand.u32 %v3756, 4294901760
        %3758 = vmatpush1.msra.mxu0 %v3757
        %3759 = vmatprep.subr.mxu0 0.0
        %v3760 = vand.u32 %v368, 4294901760
        %v3761 = vsub.f32 %v368, %v3760
        %v3762 = vand.u32 %v3761, 4294901760
        %3763 = vmatpush1.msra.mxu0 %v3762
        %3764 = vmatprep.subr.mxu0 0.0
        %v3765 = vand.u32 %v369, 4294901760
        %v3766 = vsub.f32 %v369, %v3765
        %v3767 = vand.u32 %v3766, 4294901760
        %3768 = vmatpush1.msra.mxu0 %v3767
        %3769 = vmatprep.subr.mxu0 0.0
        %v3770 = vand.u32 %v370, 4294901760
        %v3771 = vsub.f32 %v370, %v3770
        %v3772 = vand.u32 %v3771, 4294901760
        %3773 = vmatpush1.msra.mxu0 %v3772
        %3774 = vmatprep.subr.mxu0 0.0
        %v3775 = vand.u32 %v371, 4294901760
        %v3776 = vsub.f32 %v371, %v3775
        %v3777 = vand.u32 %v3776, 4294901760
        %3778 = vmatpush1.msra.mxu0 %v3777
        %3779 = vmatprep.subr.mxu0 0.0
        %v3780 = vand.u32 %v372, 4294901760
        %v3781 = vsub.f32 %v372, %v3780
        %v3782 = vand.u32 %v3781, 4294901760
        %3783 = vmatpush1.msra.mxu0 %v3782
        %3784 = vmatprep.subr.mxu0 0.0
        %v3785 = vand.u32 %v373, 4294901760
        %v3786 = vsub.f32 %v373, %v3785
        %v3787 = vand.u32 %v3786, 4294901760
        %3788 = vmatpush1.msra.mxu0 %v3787
        %v3789 = vand.u32 %v199, 4294901760
        %3790 = vmatprep.mubr.f32.mxu0 %v3789
        %v3791 = vand.u32 %v198, 4294901760
        %3792 = vmatmul.mubr.f32.gmra.mrb[0].mxu0 %v3791
        %v3793 = vpop.f32.mrb[0].mxu0
        %v3794 = vadd.f32 %v3428, %v3793
        %v3795 = vpop.f32.mrb[0].mxu0
        %v3796 = vand.u32 %v205, 4294901760
        %3797 = vmatprep.mubr.f32.mxu0 %v3796
        %v3798 = vand.u32 %v204, 4294901760
        %3799 = vmatmul.mubr.f32.gmra.mrb[0].mxu0 %v3798
        %v3800 = vpop.f32.mrb[0].mxu0
        %v3801 = vadd.f32 %v3439, %v3800
        %v3802 = vpop.f32.mrb[0].mxu0
        %v3803 = vand.u32 %v211, 4294901760
        %3804 = vmatprep.mubr.f32.mxu0 %v3803
        %v3805 = vand.u32 %v210, 4294901760
        %3806 = vmatmul.mubr.f32.gmra.mrb[0].mxu0 %v3805
        %v3807 = vpop.f32.mrb[0].mxu0
        %v3808 = vadd.f32 %v3450, %v3807
        %v3809 = vpop.f32.mrb[0].mxu0
        %v3810 = vand.u32 %v217, 4294901760
        %3811 = vmatprep.mubr.f32.mxu0 %v3810
        %v3812 = vand.u32 %v216, 4294901760
        %3813 = vmatmul.mubr.f32.gmra.mrb[0].mxu0 %v3812
        %v3814 = vpop.f32.mrb[0].mxu0
        %v3815 = vadd.f32 %v3461, %v3814
        %v3816 = vpop.f32.mrb[0].mxu0
        %v3817 = vand.u32 %v223, 4294901760
        %3818 = vmatprep.mubr.f32.mxu0 %v3817
        %v3819 = vand.u32 %v222, 4294901760
        %3820 = vmatmul.mubr.f32.gmra.mrb[0].mxu0 %v3819
        %v3821 = vpop.f32.mrb[0].mxu0
        %v3822 = vadd.f32 %v3472, %v3821
        %v3823 = vpop.f32.mrb[0].mxu0
        %v3824 = vand.u32 %v229, 4294901760
        %3825 = vmatprep.mubr.f32.mxu0 %v3824
        %v3826 = vand.u32 %v228, 4294901760
        %3827 = vmatmul.mubr.f32.gmra.mrb[0].mxu0 %v3826
        %v3828 = vpop.f32.mrb[0].mxu0
        %v3829 = vadd.f32 %v3483, %v3828
        %v3830 = vpop.f32.mrb[0].mxu0
        %v3831 = vand.u32 %v235, 4294901760
        %3832 = vmatprep.mubr.f32.mxu0 %v3831
        %v3833 = vand.u32 %v234, 4294901760
        %3834 = vmatmul.mubr.f32.gmra.mrb[0].mxu0 %v3833
        %v3835 = vpop.f32.mrb[0].mxu0
        %v3836 = vadd.f32 %v3494, %v3835
        %v3837 = vpop.f32.mrb[0].mxu0
        %v3838 = vand.u32 %v241, 4294901760
        %3839 = vmatprep.mubr.f32.mxu0 %v3838
        %v3840 = vand.u32 %v240, 4294901760
        %3841 = vmatmul.mubr.f32.gmra.mrb[0].mxu0 %v3840
        %v3842 = vpop.f32.mrb[0].mxu0
        %v3843 = vadd.f32 %v3505, %v3842
        %v3844 = vpop.f32.mrb[0].mxu0
        %v3845 = vand.u32 %v247, 4294901760
        %3846 = vmatprep.mubr.f32.mxu0 %v3845
        %v3847 = vand.u32 %v246, 4294901760
        %3848 = vmatmul.mubr.f32.gmra.mrb[0].mxu0 %v3847
        %v3849 = vpop.f32.mrb[0].mxu0
        %v3850 = vadd.f32 %v3516, %v3849
        %v3851 = vpop.f32.mrb[0].mxu0
        %v3852 = vand.u32 %v253, 4294901760
        %3853 = vmatprep.mubr.f32.mxu0 %v3852
        %v3854 = vand.u32 %v252, 4294901760
        %3855 = vmatmul.mubr.f32.gmra.mrb[0].mxu0 %v3854
        %v3856 = vpop.f32.mrb[0].mxu0
        %v3857 = vadd.f32 %v3527, %v3856
        %v3858 = vpop.f32.mrb[0].mxu0
        %v3859 = vand.u32 %v259, 4294901760
        %3860 = vmatprep.mubr.f32.mxu0 %v3859
        %v3861 = vand.u32 %v258, 4294901760
        %3862 = vmatmul.mubr.f32.gmra.mrb[0].mxu0 %v3861
        %v3863 = vpop.f32.mrb[0].mxu0
        %v3864 = vadd.f32 %v3538, %v3863
        %v3865 = vpop.f32.mrb[0].mxu0
        %v3866 = vand.u32 %v265, 4294901760
        %3867 = vmatprep.mubr.f32.mxu0 %v3866
        %v3868 = vand.u32 %v264, 4294901760
        %3869 = vmatmul.mubr.f32.gmra.mrb[0].mxu0 %v3868
        %v3870 = vpop.f32.mrb[0].mxu0
        %v3871 = vadd.f32 %v3549, %v3870
        %v3872 = vpop.f32.mrb[0].mxu0
        %v3873 = vand.u32 %v271, 4294901760
        %3874 = vmatprep.mubr.f32.mxu0 %v3873
        %v3875 = vand.u32 %v270, 4294901760
        %3876 = vmatmul.mubr.f32.gmra.mrb[0].mxu0 %v3875
        %v3877 = vpop.f32.mrb[0].mxu0
        %v3878 = vadd.f32 %v3560, %v3877
        %v3879 = vpop.f32.mrb[0].mxu0
        %v3880 = vand.u32 %v277, 4294901760
        %3881 = vmatprep.mubr.f32.mxu0 %v3880
        %v3882 = vand.u32 %v276, 4294901760
        %3883 = vmatmul.mubr.f32.gmra.mrb[0].mxu0 %v3882
        %v3884 = vpop.f32.mrb[0].mxu0
        %v3885 = vadd.f32 %v3571, %v3884
        %v3886 = vpop.f32.mrb[0].mxu0
        %v3887 = vand.u32 %v283, 4294901760
        %3888 = vmatprep.mubr.f32.mxu0 %v3887
        %v3889 = vand.u32 %v282, 4294901760
        %3890 = vmatmul.mubr.f32.gmra.mrb[0].mxu0 %v3889
        %v3891 = vpop.f32.mrb[0].mxu0
        %v3892 = vadd.f32 %v3582, %v3891
        %v3893 = vpop.f32.mrb[0].mxu0
        %v3894 = vand.u32 %v289, 4294901760
        %3895 = vmatprep.mubr.f32.mxu0 %v3894
        %v3896 = vand.u32 %v288, 4294901760
        %3897 = vmatmul.mubr.f32.gmra.mrb[0].mxu0 %v3896
        %v3898 = vpop.f32.mrb[0].mxu0
        %v3899 = vadd.f32 %v3593, %v3898
        %v3900 = vpop.f32.mrb[0].mxu0
        %v3901 = vand.u32 %v295, 4294901760
        %3902 = vmatprep.mubr.f32.mxu0 %v3901
        %v3903 = vand.u32 %v294, 4294901760
        %3904 = vmatmul.mubr.f32.gmra.mrb[0].mxu0 %v3903
        %v3905 = vpop.f32.mrb[0].mxu0
        %v3906 = vadd.f32 %v3604, %v3905
        %v3907 = vpop.f32.mrb[0].mxu0
        %v3908 = vand.u32 %v301, 4294901760
        %3909 = vmatprep.mubr.f32.mxu0 %v3908
        %v3910 = vand.u32 %v300, 4294901760
        %3911 = vmatmul.mubr.f32.gmra.mrb[0].mxu0 %v3910
        %v3912 = vpop.f32.mrb[0].mxu0
        %v3913 = vadd.f32 %v3615, %v3912
        %v3914 = vpop.f32.mrb[0].mxu0
        %v3915 = vand.u32 %v307, 4294901760
        %3916 = vmatprep.mubr.f32.mxu0 %v3915
        %v3917 = vand.u32 %v306, 4294901760
        %3918 = vmatmul.mubr.f32.gmra.mrb[0].mxu0 %v3917
        %v3919 = vpop.f32.mrb[0].mxu0
        %v3920 = vadd.f32 %v3626, %v3919
        %v3921 = vpop.f32.mrb[0].mxu0
        %3922 = vdwg.mxu0
        %3923 = vmatprep.subr.mxu0 0.0
        %v3924 = vand.u32 %v342, 4294901760
        %3925 = vmatpush1.msra.mxu0 %v3924
        %3926 = vmatprep.subr.mxu0 0.0
        %v3927 = vand.u32 %v343, 4294901760
        %3928 = vmatpush1.msra.mxu0 %v3927
        %3929 = vmatprep.subr.mxu0 0.0
        %v3930 = vand.u32 %v344, 4294901760
        %3931 = vmatpush1.msra.mxu0 %v3930
        %3932 = vmatprep.subr.mxu0 0.0
        %v3933 = vand.u32 %v345, 4294901760
        %3934 = vmatpush1.msra.mxu0 %v3933
        %3935 = vmatprep.subr.mxu0 0.0
        %v3936 = vand.u32 %v346, 4294901760
        %3937 = vmatpush1.msra.mxu0 %v3936
        %3938 = vmatprep.subr.mxu0 0.0
        %v3939 = vand.u32 %v347, 4294901760
        %3940 = vmatpush1.msra.mxu0 %v3939
        %3941 = vmatprep.subr.mxu0 0.0
        %v3942 = vand.u32 %v348, 4294901760
        %3943 = vmatpush1.msra.mxu0 %v3942
        %3944 = vmatprep.subr.mxu0 0.0
        %v3945 = vand.u32 %v349, 4294901760
        %3946 = vmatpush1.msra.mxu0 %v3945
        %3947 = vmatprep.subr.mxu0 0.0
        %v3948 = vand.u32 %v350, 4294901760
        %3949 = vmatpush1.msra.mxu0 %v3948
        %3950 = vmatprep.subr.mxu0 0.0
        %v3951 = vand.u32 %v351, 4294901760
        %3952 = vmatpush1.msra.mxu0 %v3951
        %3953 = vmatprep.subr.mxu0 0.0
        %v3954 = vand.u32 %v352, 4294901760
        %3955 = vmatpush1.msra.mxu0 %v3954
        %3956 = vmatprep.subr.mxu0 0.0
        %v3957 = vand.u32 %v353, 4294901760
        %3958 = vmatpush1.msra.mxu0 %v3957
        %3959 = vmatprep.subr.mxu0 0.0
        %v3960 = vand.u32 %v354, 4294901760
        %3961 = vmatpush1.msra.mxu0 %v3960
        %3962 = vmatprep.subr.mxu0 0.0
        %v3963 = vand.u32 %v355, 4294901760
        %3964 = vmatpush1.msra.mxu0 %v3963
        %3965 = vmatprep.subr.mxu0 0.0
        %v3966 = vand.u32 %v356, 4294901760
        %3967 = vmatpush1.msra.mxu0 %v3966
        %3968 = vmatprep.subr.mxu0 0.0
        %v3969 = vand.u32 %v357, 4294901760
        %3970 = vmatpush1.msra.mxu0 %v3969
        %3971 = vmatprep.subr.mxu0 0.0
        %v3972 = vand.u32 %v358, 4294901760
        %3973 = vmatpush1.msra.mxu0 %v3972
        %3974 = vmatprep.subr.mxu0 0.0
        %v3975 = vand.u32 %v359, 4294901760
        %3976 = vmatpush1.msra.mxu0 %v3975
        %3977 = vmatprep.subr.mxu0 0.0
        %v3978 = vand.u32 %v360, 4294901760
        %3979 = vmatpush1.msra.mxu0 %v3978
        %3980 = vmatprep.subr.mxu0 0.0
        %v3981 = vand.u32 %v361, 4294901760
        %3982 = vmatpush1.msra.mxu0 %v3981
        %3983 = vmatprep.subr.mxu0 0.0
        %v3984 = vand.u32 %v362, 4294901760
        %3985 = vmatpush1.msra.mxu0 %v3984
        %3986 = vmatprep.subr.mxu0 0.0
        %v3987 = vand.u32 %v363, 4294901760
        %3988 = vmatpush1.msra.mxu0 %v3987
        %3989 = vmatprep.subr.mxu0 0.0
        %v3990 = vand.u32 %v364, 4294901760
        %3991 = vmatpush1.msra.mxu0 %v3990
        %3992 = vmatprep.subr.mxu0 0.0
        %v3993 = vand.u32 %v365, 4294901760
        %3994 = vmatpush1.msra.mxu0 %v3993
        %3995 = vmatprep.subr.mxu0 0.0
        %v3996 = vand.u32 %v366, 4294901760
        %3997 = vmatpush1.msra.mxu0 %v3996
        %3998 = vmatprep.subr.mxu0 0.0
        %v3999 = vand.u32 %v367, 4294901760
        %4000 = vmatpush1.msra.mxu0 %v3999
        %4001 = vmatprep.subr.mxu0 0.0
        %v4002 = vand.u32 %v368, 4294901760
        %4003 = vmatpush1.msra.mxu0 %v4002
        %4004 = vmatprep.subr.mxu0 0.0
        %v4005 = vand.u32 %v369, 4294901760
        %4006 = vmatpush1.msra.mxu0 %v4005
        %4007 = vmatprep.subr.mxu0 0.0
        %v4008 = vand.u32 %v370, 4294901760
        %4009 = vmatpush1.msra.mxu0 %v4008
        %4010 = vmatprep.subr.mxu0 0.0
        %v4011 = vand.u32 %v371, 4294901760
        %4012 = vmatpush1.msra.mxu0 %v4011
        %4013 = vmatprep.subr.mxu0 0.0
        %v4014 = vand.u32 %v372, 4294901760
        %4015 = vmatpush1.msra.mxu0 %v4014
        %4016 = vmatprep.subr.mxu0 0.0
        %v4017 = vand.u32 %v373, 4294901760
        %4018 = vmatpush1.msra.mxu0 %v4017
        %v4019 = vand.u32 %v199, 4294901760
        %4020 = vmatprep.mubr.f32.mxu0 %v4019
        %v4021 = vand.u32 %v198, 4294901760
        %4022 = vmatmul.mubr.f32.gmra.mrb[0].mxu0 %v4021
        %v4023 = vpop.f32.mrb[0].mxu0
        %v4024 = vadd.f32 %v3794, %v4023
        %v4025 = vpop.f32.mrb[0].mxu0
        %v4026 = vand.u32 %v205, 4294901760
        %4027 = vmatprep.mubr.f32.mxu0 %v4026
        %v4028 = vand.u32 %v204, 4294901760
        %4029 = vmatmul.mubr.f32.gmra.mrb[0].mxu0 %v4028
        %v4030 = vpop.f32.mrb[0].mxu0
        %v4031 = vadd.f32 %v3801, %v4030
        %v4032 = vpop.f32.mrb[0].mxu0
        %v4033 = vand.u32 %v211, 4294901760
        %4034 = vmatprep.mubr.f32.mxu0 %v4033
        %v4035 = vand.u32 %v210, 4294901760
        %4036 = vmatmul.mubr.f32.gmra.mrb[0].mxu0 %v4035
        %v4037 = vpop.f32.mrb[0].mxu0
        %v4038 = vadd.f32 %v3808, %v4037
        %v4039 = vpop.f32.mrb[0].mxu0
        %v4040 = vand.u32 %v217, 4294901760
        %4041 = vmatprep.mubr.f32.mxu0 %v4040
        %v4042 = vand.u32 %v216, 4294901760
        %4043 = vmatmul.mubr.f32.gmra.mrb[0].mxu0 %v4042
        %v4044 = vpop.f32.mrb[0].mxu0
        %v4045 = vadd.f32 %v3815, %v4044
        %v4046 = vpop.f32.mrb[0].mxu0
        %v4047 = vand.u32 %v223, 4294901760
        %4048 = vmatprep.mubr.f32.mxu0 %v4047
        %v4049 = vand.u32 %v222, 4294901760
        %4050 = vmatmul.mubr.f32.gmra.mrb[0].mxu0 %v4049
        %v4051 = vpop.f32.mrb[0].mxu0
        %v4052 = vadd.f32 %v3822, %v4051
        %v4053 = vpop.f32.mrb[0].mxu0
        %v4054 = vand.u32 %v229, 4294901760
        %4055 = vmatprep.mubr.f32.mxu0 %v4054
        %v4056 = vand.u32 %v228, 4294901760
        %4057 = vmatmul.mubr.f32.gmra.mrb[0].mxu0 %v4056
        %v4058 = vpop.f32.mrb[0].mxu0
        %v4059 = vadd.f32 %v3829, %v4058
        %v4060 = vpop.f32.mrb[0].mxu0
        %v4061 = vand.u32 %v235, 4294901760
        %4062 = vmatprep.mubr.f32.mxu0 %v4061
        %v4063 = vand.u32 %v234, 4294901760
        %4064 = vmatmul.mubr.f32.gmra.mrb[0].mxu0 %v4063
        %v4065 = vpop.f32.mrb[0].mxu0
        %v4066 = vadd.f32 %v3836, %v4065
        %v4067 = vpop.f32.mrb[0].mxu0
        %v4068 = vand.u32 %v241, 4294901760
        %4069 = vmatprep.mubr.f32.mxu0 %v4068
        %v4070 = vand.u32 %v240, 4294901760
        %4071 = vmatmul.mubr.f32.gmra.mrb[0].mxu0 %v4070
        %v4072 = vpop.f32.mrb[0].mxu0
        %v4073 = vadd.f32 %v3843, %v4072
        %v4074 = vpop.f32.mrb[0].mxu0
        %v4075 = vand.u32 %v247, 4294901760
        %4076 = vmatprep.mubr.f32.mxu0 %v4075
        %v4077 = vand.u32 %v246, 4294901760
        %4078 = vmatmul.mubr.f32.gmra.mrb[0].mxu0 %v4077
        %v4079 = vpop.f32.mrb[0].mxu0
        %v4080 = vadd.f32 %v3850, %v4079
        %v4081 = vpop.f32.mrb[0].mxu0
        %v4082 = vand.u32 %v253, 4294901760
        %4083 = vmatprep.mubr.f32.mxu0 %v4082
        %v4084 = vand.u32 %v252, 4294901760
        %4085 = vmatmul.mubr.f32.gmra.mrb[0].mxu0 %v4084
        %v4086 = vpop.f32.mrb[0].mxu0
        %v4087 = vadd.f32 %v3857, %v4086
        %v4088 = vpop.f32.mrb[0].mxu0
        %v4089 = vand.u32 %v259, 4294901760
        %4090 = vmatprep.mubr.f32.mxu0 %v4089
        %v4091 = vand.u32 %v258, 4294901760
        %4092 = vmatmul.mubr.f32.gmra.mrb[0].mxu0 %v4091
        %v4093 = vpop.f32.mrb[0].mxu0
        %v4094 = vadd.f32 %v3864, %v4093
        %v4095 = vpop.f32.mrb[0].mxu0
        %v4096 = vand.u32 %v265, 4294901760
        %4097 = vmatprep.mubr.f32.mxu0 %v4096
        %v4098 = vand.u32 %v264, 4294901760
        %4099 = vmatmul.mubr.f32.gmra.mrb[0].mxu0 %v4098
        %v4100 = vpop.f32.mrb[0].mxu0
        %v4101 = vadd.f32 %v3871, %v4100
        %v4102 = vpop.f32.mrb[0].mxu0
        %v4103 = vand.u32 %v271, 4294901760
        %4104 = vmatprep.mubr.f32.mxu0 %v4103
        %v4105 = vand.u32 %v270, 4294901760
        %4106 = vmatmul.mubr.f32.gmra.mrb[0].mxu0 %v4105
        %v4107 = vpop.f32.mrb[0].mxu0
        %v4108 = vadd.f32 %v3878, %v4107
        %v4109 = vpop.f32.mrb[0].mxu0
        %v4110 = vand.u32 %v277, 4294901760
        %4111 = vmatprep.mubr.f32.mxu0 %v4110
        %v4112 = vand.u32 %v276, 4294901760
        %4113 = vmatmul.mubr.f32.gmra.mrb[0].mxu0 %v4112
        %v4114 = vpop.f32.mrb[0].mxu0
        %v4115 = vadd.f32 %v3885, %v4114
        %v4116 = vpop.f32.mrb[0].mxu0
        %v4117 = vand.u32 %v283, 4294901760
        %4118 = vmatprep.mubr.f32.mxu0 %v4117
        %v4119 = vand.u32 %v282, 4294901760
        %4120 = vmatmul.mubr.f32.gmra.mrb[0].mxu0 %v4119
        %v4121 = vpop.f32.mrb[0].mxu0
        %v4122 = vadd.f32 %v3892, %v4121
        %v4123 = vpop.f32.mrb[0].mxu0
        %v4124 = vand.u32 %v289, 4294901760
        %4125 = vmatprep.mubr.f32.mxu0 %v4124
        %v4126 = vand.u32 %v288, 4294901760
        %4127 = vmatmul.mubr.f32.gmra.mrb[0].mxu0 %v4126
        %v4128 = vpop.f32.mrb[0].mxu0
        %v4129 = vadd.f32 %v3899, %v4128
        %v4130 = vpop.f32.mrb[0].mxu0
        %v4131 = vand.u32 %v295, 4294901760
        %4132 = vmatprep.mubr.f32.mxu0 %v4131
        %v4133 = vand.u32 %v294, 4294901760
        %4134 = vmatmul.mubr.f32.gmra.mrb[0].mxu0 %v4133
        %v4135 = vpop.f32.mrb[0].mxu0
        %v4136 = vadd.f32 %v3906, %v4135
        %v4137 = vpop.f32.mrb[0].mxu0
        %v4138 = vand.u32 %v301, 4294901760
        %4139 = vmatprep.mubr.f32.mxu0 %v4138
        %v4140 = vand.u32 %v300, 4294901760
        %4141 = vmatmul.mubr.f32.gmra.mrb[0].mxu0 %v4140
        %v4142 = vpop.f32.mrb[0].mxu0
        %v4143 = vadd.f32 %v3913, %v4142
        %v4144 = vpop.f32.mrb[0].mxu0
        %v4145 = vand.u32 %v307, 4294901760
        %4146 = vmatprep.mubr.f32.mxu0 %v4145
        %v4147 = vand.u32 %v306, 4294901760
        %4148 = vmatmul.mubr.f32.gmra.mrb[0].mxu0 %v4147
        %v4149 = vpop.f32.mrb[0].mxu0
        %v4150 = vadd.f32 %v3920, %v4149
        %v4151 = vpop.f32.mrb[0].mxu0
        %4152 = vdwg.mxu0
        %4153 = vmatprep.subr.mxu0 0.0
        %v4154 = vand.u32 %v374, 4294901760
        %4155 = vmatpush1.msra.mxu0 %v4154
        %4156 = vmatprep.subr.mxu0 0.0
        %v4157 = vand.u32 %v375, 4294901760
        %4158 = vmatpush1.msra.mxu0 %v4157
        %4159 = vmatprep.subr.mxu0 0.0
        %v4160 = vand.u32 %v376, 4294901760
        %4161 = vmatpush1.msra.mxu0 %v4160
        %4162 = vmatprep.subr.mxu0 0.0
        %v4163 = vand.u32 %v377, 4294901760
        %4164 = vmatpush1.msra.mxu0 %v4163
        %4165 = vmatprep.subr.mxu0 0.0
        %v4166 = vand.u32 %v378, 4294901760
        %4167 = vmatpush1.msra.mxu0 %v4166
        %4168 = vmatprep.subr.mxu0 0.0
        %v4169 = vand.u32 %v379, 4294901760
        %4170 = vmatpush1.msra.mxu0 %v4169
        %4171 = vmatprep.subr.mxu0 0.0
        %v4172 = vand.u32 %v380, 4294901760
        %4173 = vmatpush1.msra.mxu0 %v4172
        %4174 = vmatprep.subr.mxu0 0.0
        %v4175 = vand.u32 %v381, 4294901760
        %4176 = vmatpush1.msra.mxu0 %v4175
        %4177 = vmatprep.subr.mxu0 0.0
        %v4178 = vand.u32 %v382, 4294901760
        %4179 = vmatpush1.msra.mxu0 %v4178
        %4180 = vmatprep.subr.mxu0 0.0
        %v4181 = vand.u32 %v383, 4294901760
        %4182 = vmatpush1.msra.mxu0 %v4181
        %4183 = vmatprep.subr.mxu0 0.0
        %v4184 = vand.u32 %v384, 4294901760
        %4185 = vmatpush1.msra.mxu0 %v4184
        %4186 = vmatprep.subr.mxu0 0.0
        %v4187 = vand.u32 %v385, 4294901760
        %4188 = vmatpush1.msra.mxu0 %v4187
        %4189 = vmatprep.subr.mxu0 0.0
        %v4190 = vand.u32 %v386, 4294901760
        %4191 = vmatpush1.msra.mxu0 %v4190
        %4192 = vmatprep.subr.mxu0 0.0
        %v4193 = vand.u32 %v387, 4294901760
        %4194 = vmatpush1.msra.mxu0 %v4193
        %4195 = vmatprep.subr.mxu0 0.0
        %v4196 = vand.u32 %v388, 4294901760
        %4197 = vmatpush1.msra.mxu0 %v4196
        %4198 = vmatprep.subr.mxu0 0.0
        %v4199 = vand.u32 %v389, 4294901760
        %4200 = vmatpush1.msra.mxu0 %v4199
        %4201 = vmatprep.subr.mxu0 0.0
        %v4202 = vand.u32 %v390, 4294901760
        %4203 = vmatpush1.msra.mxu0 %v4202
        %4204 = vmatprep.subr.mxu0 0.0
        %v4205 = vand.u32 %v391, 4294901760
        %4206 = vmatpush1.msra.mxu0 %v4205
        %4207 = vmatprep.subr.mxu0 0.0
        %v4208 = vand.u32 %v392, 4294901760
        %4209 = vmatpush1.msra.mxu0 %v4208
        %4210 = vmatprep.subr.mxu0 0.0
        %v4211 = vand.u32 %v393, 4294901760
        %4212 = vmatpush1.msra.mxu0 %v4211
        %4213 = vmatprep.subr.mxu0 0.0
        %v4214 = vand.u32 %v394, 4294901760
        %4215 = vmatpush1.msra.mxu0 %v4214
        %4216 = vmatprep.subr.mxu0 0.0
        %v4217 = vand.u32 %v395, 4294901760
        %4218 = vmatpush1.msra.mxu0 %v4217
        %4219 = vmatprep.subr.mxu0 0.0
        %v4220 = vand.u32 %v396, 4294901760
        %4221 = vmatpush1.msra.mxu0 %v4220
        %4222 = vmatprep.subr.mxu0 0.0
        %v4223 = vand.u32 %v397, 4294901760
        %4224 = vmatpush1.msra.mxu0 %v4223
        %4225 = vmatprep.subr.mxu0 0.0
        %v4226 = vand.u32 %v398, 4294901760
        %4227 = vmatpush1.msra.mxu0 %v4226
        %4228 = vmatprep.subr.mxu0 0.0
        %v4229 = vand.u32 %v399, 4294901760
        %4230 = vmatpush1.msra.mxu0 %v4229
        %4231 = vmatprep.subr.mxu0 0.0
        %v4232 = vand.u32 %v400, 4294901760
        %4233 = vmatpush1.msra.mxu0 %v4232
        %4234 = vmatprep.subr.mxu0 0.0
        %v4235 = vand.u32 %v401, 4294901760
        %4236 = vmatpush1.msra.mxu0 %v4235
        %4237 = vmatprep.subr.mxu0 0.0
        %v4238 = vand.u32 %v402, 4294901760
        %4239 = vmatpush1.msra.mxu0 %v4238
        %4240 = vmatprep.subr.mxu0 0.0
        %v4241 = vand.u32 %v403, 4294901760
        %4242 = vmatpush1.msra.mxu0 %v4241
        %4243 = vmatprep.subr.mxu0 0.0
        %v4244 = vand.u32 %v404, 4294901760
        %4245 = vmatpush1.msra.mxu0 %v4244
        %4246 = vmatprep.subr.mxu0 0.0
        %v4247 = vand.u32 %v405, 4294901760
        %4248 = vmatpush1.msra.mxu0 %v4247
        %v4249 = vand.u32 %v201, 4294901760
        %v4250 = vsub.f32 %v201, %v4249
        %v4251 = vand.u32 %v4250, 4294901760
        %v4252 = vsub.f32 %v4250, %v4251
        %v4253 = vand.u32 %v4252, 4294901760
        %4254 = vmatprep.mubr.f32.mxu0 %v4253
        %v4255 = vand.u32 %v200, 4294901760
        %v4256 = vsub.f32 %v200, %v4255
        %v4257 = vand.u32 %v4256, 4294901760
        %v4258 = vsub.f32 %v4256, %v4257
        %v4259 = vand.u32 %v4258, 4294901760
        %4260 = vmatmul.mubr.f32.gmra.mrb[0].mxu0 %v4259
        %v4261 = vpop.f32.mrb[0].mxu0
        %v4262 = vadd.f32 %v4024, %v4261
        %v4263 = vpop.f32.mrb[0].mxu0
        %v4264 = vand.u32 %v207, 4294901760
        %v4265 = vsub.f32 %v207, %v4264
        %v4266 = vand.u32 %v4265, 4294901760
        %v4267 = vsub.f32 %v4265, %v4266
        %v4268 = vand.u32 %v4267, 4294901760
        %4269 = vmatprep.mubr.f32.mxu0 %v4268
        %v4270 = vand.u32 %v206, 4294901760
        %v4271 = vsub.f32 %v206, %v4270
        %v4272 = vand.u32 %v4271, 4294901760
        %v4273 = vsub.f32 %v4271, %v4272
        %v4274 = vand.u32 %v4273, 4294901760
        %4275 = vmatmul.mubr.f32.gmra.mrb[0].mxu0 %v4274
        %v4276 = vpop.f32.mrb[0].mxu0
        %v4277 = vadd.f32 %v4031, %v4276
        %v4278 = vpop.f32.mrb[0].mxu0
        %v4279 = vand.u32 %v213, 4294901760
        %v4280 = vsub.f32 %v213, %v4279
        %v4281 = vand.u32 %v4280, 4294901760
        %v4282 = vsub.f32 %v4280, %v4281
        %v4283 = vand.u32 %v4282, 4294901760
        %4284 = vmatprep.mubr.f32.mxu0 %v4283
        %v4285 = vand.u32 %v212, 4294901760
        %v4286 = vsub.f32 %v212, %v4285
        %v4287 = vand.u32 %v4286, 4294901760
        %v4288 = vsub.f32 %v4286, %v4287
        %v4289 = vand.u32 %v4288, 4294901760
        %4290 = vmatmul.mubr.f32.gmra.mrb[0].mxu0 %v4289
        %v4291 = vpop.f32.mrb[0].mxu0
        %v4292 = vadd.f32 %v4038, %v4291
        %v4293 = vpop.f32.mrb[0].mxu0
        %v4294 = vand.u32 %v219, 4294901760
        %v4295 = vsub.f32 %v219, %v4294
        %v4296 = vand.u32 %v4295, 4294901760
        %v4297 = vsub.f32 %v4295, %v4296
        %v4298 = vand.u32 %v4297, 4294901760
        %4299 = vmatprep.mubr.f32.mxu0 %v4298
        %v4300 = vand.u32 %v218, 4294901760
        %v4301 = vsub.f32 %v218, %v4300
        %v4302 = vand.u32 %v4301, 4294901760
        %v4303 = vsub.f32 %v4301, %v4302
        %v4304 = vand.u32 %v4303, 4294901760
        %4305 = vmatmul.mubr.f32.gmra.mrb[0].mxu0 %v4304
        %v4306 = vpop.f32.mrb[0].mxu0
        %v4307 = vadd.f32 %v4045, %v4306
        %v4308 = vpop.f32.mrb[0].mxu0
        %v4309 = vand.u32 %v225, 4294901760
        %v4310 = vsub.f32 %v225, %v4309
        %v4311 = vand.u32 %v4310, 4294901760
        %v4312 = vsub.f32 %v4310, %v4311
        %v4313 = vand.u32 %v4312, 4294901760
        %4314 = vmatprep.mubr.f32.mxu0 %v4313
        %v4315 = vand.u32 %v224, 4294901760
        %v4316 = vsub.f32 %v224, %v4315
        %v4317 = vand.u32 %v4316, 4294901760
        %v4318 = vsub.f32 %v4316, %v4317
        %v4319 = vand.u32 %v4318, 4294901760
        %4320 = vmatmul.mubr.f32.gmra.mrb[0].mxu0 %v4319
        %v4321 = vpop.f32.mrb[0].mxu0
        %v4322 = vadd.f32 %v4052, %v4321
        %v4323 = vpop.f32.mrb[0].mxu0
        %v4324 = vand.u32 %v231, 4294901760
        %v4325 = vsub.f32 %v231, %v4324
        %v4326 = vand.u32 %v4325, 4294901760
        %v4327 = vsub.f32 %v4325, %v4326
        %v4328 = vand.u32 %v4327, 4294901760
        %4329 = vmatprep.mubr.f32.mxu0 %v4328
        %v4330 = vand.u32 %v230, 4294901760
        %v4331 = vsub.f32 %v230, %v4330
        %v4332 = vand.u32 %v4331, 4294901760
        %v4333 = vsub.f32 %v4331, %v4332
        %v4334 = vand.u32 %v4333, 4294901760
        %4335 = vmatmul.mubr.f32.gmra.mrb[0].mxu0 %v4334
        %v4336 = vpop.f32.mrb[0].mxu0
        %v4337 = vadd.f32 %v4059, %v4336
        %v4338 = vpop.f32.mrb[0].mxu0
        %v4339 = vand.u32 %v237, 4294901760
        %v4340 = vsub.f32 %v237, %v4339
        %v4341 = vand.u32 %v4340, 4294901760
        %v4342 = vsub.f32 %v4340, %v4341
        %v4343 = vand.u32 %v4342, 4294901760
        %4344 = vmatprep.mubr.f32.mxu0 %v4343
        %v4345 = vand.u32 %v236, 4294901760
        %v4346 = vsub.f32 %v236, %v4345
        %v4347 = vand.u32 %v4346, 4294901760
        %v4348 = vsub.f32 %v4346, %v4347
        %v4349 = vand.u32 %v4348, 4294901760
        %4350 = vmatmul.mubr.f32.gmra.mrb[0].mxu0 %v4349
        %v4351 = vpop.f32.mrb[0].mxu0
        %v4352 = vadd.f32 %v4066, %v4351
        %v4353 = vpop.f32.mrb[0].mxu0
        %v4354 = vand.u32 %v243, 4294901760
        %v4355 = vsub.f32 %v243, %v4354
        %v4356 = vand.u32 %v4355, 4294901760
        %v4357 = vsub.f32 %v4355, %v4356
        %v4358 = vand.u32 %v4357, 4294901760
        %4359 = vmatprep.mubr.f32.mxu0 %v4358
        %v4360 = vand.u32 %v242, 4294901760
        %v4361 = vsub.f32 %v242, %v4360
        %v4362 = vand.u32 %v4361, 4294901760
        %v4363 = vsub.f32 %v4361, %v4362
        %v4364 = vand.u32 %v4363, 4294901760
        %4365 = vmatmul.mubr.f32.gmra.mrb[0].mxu0 %v4364
        %v4366 = vpop.f32.mrb[0].mxu0
        %v4367 = vadd.f32 %v4073, %v4366
        %v4368 = vpop.f32.mrb[0].mxu0
        %v4369 = vand.u32 %v249, 4294901760
        %v4370 = vsub.f32 %v249, %v4369
        %v4371 = vand.u32 %v4370, 4294901760
        %v4372 = vsub.f32 %v4370, %v4371
        %v4373 = vand.u32 %v4372, 4294901760
        %4374 = vmatprep.mubr.f32.mxu0 %v4373
        %v4375 = vand.u32 %v248, 4294901760
        %v4376 = vsub.f32 %v248, %v4375
        %v4377 = vand.u32 %v4376, 4294901760
        %v4378 = vsub.f32 %v4376, %v4377
        %v4379 = vand.u32 %v4378, 4294901760
        %4380 = vmatmul.mubr.f32.gmra.mrb[0].mxu0 %v4379
        %v4381 = vpop.f32.mrb[0].mxu0
        %v4382 = vadd.f32 %v4080, %v4381
        %v4383 = vpop.f32.mrb[0].mxu0
        %v4384 = vand.u32 %v255, 4294901760
        %v4385 = vsub.f32 %v255, %v4384
        %v4386 = vand.u32 %v4385, 4294901760
        %v4387 = vsub.f32 %v4385, %v4386
        %v4388 = vand.u32 %v4387, 4294901760
        %4389 = vmatprep.mubr.f32.mxu0 %v4388
        %v4390 = vand.u32 %v254, 4294901760
        %v4391 = vsub.f32 %v254, %v4390
        %v4392 = vand.u32 %v4391, 4294901760
        %v4393 = vsub.f32 %v4391, %v4392
        %v4394 = vand.u32 %v4393, 4294901760
        %4395 = vmatmul.mubr.f32.gmra.mrb[0].mxu0 %v4394
        %v4396 = vpop.f32.mrb[0].mxu0
        %v4397 = vadd.f32 %v4087, %v4396
        %v4398 = vpop.f32.mrb[0].mxu0
        %v4399 = vand.u32 %v261, 4294901760
        %v4400 = vsub.f32 %v261, %v4399
        %v4401 = vand.u32 %v4400, 4294901760
        %v4402 = vsub.f32 %v4400, %v4401
        %v4403 = vand.u32 %v4402, 4294901760
        %4404 = vmatprep.mubr.f32.mxu0 %v4403
        %v4405 = vand.u32 %v260, 4294901760
        %v4406 = vsub.f32 %v260, %v4405
        %v4407 = vand.u32 %v4406, 4294901760
        %v4408 = vsub.f32 %v4406, %v4407
        %v4409 = vand.u32 %v4408, 4294901760
        %4410 = vmatmul.mubr.f32.gmra.mrb[0].mxu0 %v4409
        %v4411 = vpop.f32.mrb[0].mxu0
        %v4412 = vadd.f32 %v4094, %v4411
        %v4413 = vpop.f32.mrb[0].mxu0
        %v4414 = vand.u32 %v267, 4294901760
        %v4415 = vsub.f32 %v267, %v4414
        %v4416 = vand.u32 %v4415, 4294901760
        %v4417 = vsub.f32 %v4415, %v4416
        %v4418 = vand.u32 %v4417, 4294901760
        %4419 = vmatprep.mubr.f32.mxu0 %v4418
        %v4420 = vand.u32 %v266, 4294901760
        %v4421 = vsub.f32 %v266, %v4420
        %v4422 = vand.u32 %v4421, 4294901760
        %v4423 = vsub.f32 %v4421, %v4422
        %v4424 = vand.u32 %v4423, 4294901760
        %4425 = vmatmul.mubr.f32.gmra.mrb[0].mxu0 %v4424
        %v4426 = vpop.f32.mrb[0].mxu0
        %v4427 = vadd.f32 %v4101, %v4426
        %v4428 = vpop.f32.mrb[0].mxu0
        %v4429 = vand.u32 %v273, 4294901760
        %v4430 = vsub.f32 %v273, %v4429
        %v4431 = vand.u32 %v4430, 4294901760
        %v4432 = vsub.f32 %v4430, %v4431
        %v4433 = vand.u32 %v4432, 4294901760
        %4434 = vmatprep.mubr.f32.mxu0 %v4433
        %v4435 = vand.u32 %v272, 4294901760
        %v4436 = vsub.f32 %v272, %v4435
        %v4437 = vand.u32 %v4436, 4294901760
        %v4438 = vsub.f32 %v4436, %v4437
        %v4439 = vand.u32 %v4438, 4294901760
        %4440 = vmatmul.mubr.f32.gmra.mrb[0].mxu0 %v4439
        %v4441 = vpop.f32.mrb[0].mxu0
        %v4442 = vadd.f32 %v4108, %v4441
        %v4443 = vpop.f32.mrb[0].mxu0
        %v4444 = vand.u32 %v279, 4294901760
        %v4445 = vsub.f32 %v279, %v4444
        %v4446 = vand.u32 %v4445, 4294901760
        %v4447 = vsub.f32 %v4445, %v4446
        %v4448 = vand.u32 %v4447, 4294901760
        %4449 = vmatprep.mubr.f32.mxu0 %v4448
        %v4450 = vand.u32 %v278, 4294901760
        %v4451 = vsub.f32 %v278, %v4450
        %v4452 = vand.u32 %v4451, 4294901760
        %v4453 = vsub.f32 %v4451, %v4452
        %v4454 = vand.u32 %v4453, 4294901760
        %4455 = vmatmul.mubr.f32.gmra.mrb[0].mxu0 %v4454
        %v4456 = vpop.f32.mrb[0].mxu0
        %v4457 = vadd.f32 %v4115, %v4456
        %v4458 = vpop.f32.mrb[0].mxu0
        %v4459 = vand.u32 %v285, 4294901760
        %v4460 = vsub.f32 %v285, %v4459
        %v4461 = vand.u32 %v4460, 4294901760
        %v4462 = vsub.f32 %v4460, %v4461
        %v4463 = vand.u32 %v4462, 4294901760
        %4464 = vmatprep.mubr.f32.mxu0 %v4463
        %v4465 = vand.u32 %v284, 4294901760
        %v4466 = vsub.f32 %v284, %v4465
        %v4467 = vand.u32 %v4466, 4294901760
        %v4468 = vsub.f32 %v4466, %v4467
        %v4469 = vand.u32 %v4468, 4294901760
        %4470 = vmatmul.mubr.f32.gmra.mrb[0].mxu0 %v4469
        %v4471 = vpop.f32.mrb[0].mxu0
        %v4472 = vadd.f32 %v4122, %v4471
        %v4473 = vpop.f32.mrb[0].mxu0
        %v4474 = vand.u32 %v291, 4294901760
        %v4475 = vsub.f32 %v291, %v4474
        %v4476 = vand.u32 %v4475, 4294901760
        %v4477 = vsub.f32 %v4475, %v4476
        %v4478 = vand.u32 %v4477, 4294901760
        %4479 = vmatprep.mubr.f32.mxu0 %v4478
        %v4480 = vand.u32 %v290, 4294901760
        %v4481 = vsub.f32 %v290, %v4480
        %v4482 = vand.u32 %v4481, 4294901760
        %v4483 = vsub.f32 %v4481, %v4482
        %v4484 = vand.u32 %v4483, 4294901760
        %4485 = vmatmul.mubr.f32.gmra.mrb[0].mxu0 %v4484
        %v4486 = vpop.f32.mrb[0].mxu0
        %v4487 = vadd.f32 %v4129, %v4486
        %v4488 = vpop.f32.mrb[0].mxu0
        %v4489 = vand.u32 %v297, 4294901760
        %v4490 = vsub.f32 %v297, %v4489
        %v4491 = vand.u32 %v4490, 4294901760
        %v4492 = vsub.f32 %v4490, %v4491
        %v4493 = vand.u32 %v4492, 4294901760
        %4494 = vmatprep.mubr.f32.mxu0 %v4493
        %v4495 = vand.u32 %v296, 4294901760
        %v4496 = vsub.f32 %v296, %v4495
        %v4497 = vand.u32 %v4496, 4294901760
        %v4498 = vsub.f32 %v4496, %v4497
        %v4499 = vand.u32 %v4498, 4294901760
        %4500 = vmatmul.mubr.f32.gmra.mrb[0].mxu0 %v4499
        %v4501 = vpop.f32.mrb[0].mxu0
        %v4502 = vadd.f32 %v4136, %v4501
        %v4503 = vpop.f32.mrb[0].mxu0
        %v4504 = vand.u32 %v303, 4294901760
        %v4505 = vsub.f32 %v303, %v4504
        %v4506 = vand.u32 %v4505, 4294901760
        %v4507 = vsub.f32 %v4505, %v4506
        %v4508 = vand.u32 %v4507, 4294901760
        %4509 = vmatprep.mubr.f32.mxu0 %v4508
        %v4510 = vand.u32 %v302, 4294901760
        %v4511 = vsub.f32 %v302, %v4510
        %v4512 = vand.u32 %v4511, 4294901760
        %v4513 = vsub.f32 %v4511, %v4512
        %v4514 = vand.u32 %v4513, 4294901760
        %4515 = vmatmul.mubr.f32.gmra.mrb[0].mxu0 %v4514
        %v4516 = vpop.f32.mrb[0].mxu0
        %v4517 = vadd.f32 %v4143, %v4516
        %v4518 = vpop.f32.mrb[0].mxu0
        %v4519 = vand.u32 %v309, 4294901760
        %v4520 = vsub.f32 %v309, %v4519
        %v4521 = vand.u32 %v4520, 4294901760
        %v4522 = vsub.f32 %v4520, %v4521
        %v4523 = vand.u32 %v4522, 4294901760
        %4524 = vmatprep.mubr.f32.mxu0 %v4523
        %v4525 = vand.u32 %v308, 4294901760
        %v4526 = vsub.f32 %v308, %v4525
        %v4527 = vand.u32 %v4526, 4294901760
        %v4528 = vsub.f32 %v4526, %v4527
        %v4529 = vand.u32 %v4528, 4294901760
        %4530 = vmatmul.mubr.f32.gmra.mrb[0].mxu0 %v4529
        %v4531 = vpop.f32.mrb[0].mxu0
        %v4532 = vadd.f32 %v4150, %v4531
        %v4533 = vpop.f32.mrb[0].mxu0
        %4534 = vdwg.mxu0
        %4535 = vmatprep.subr.mxu0 0.0
        %v4536 = vand.u32 %v374, 4294901760
        %v4537 = vsub.f32 %v374, %v4536
        %v4538 = vand.u32 %v4537, 4294901760
        %v4539 = vsub.f32 %v4537, %v4538
        %v4540 = vand.u32 %v4539, 4294901760
        %4541 = vmatpush1.msra.mxu0 %v4540
        %4542 = vmatprep.subr.mxu0 0.0
        %v4543 = vand.u32 %v375, 4294901760
        %v4544 = vsub.f32 %v375, %v4543
        %v4545 = vand.u32 %v4544, 4294901760
        %v4546 = vsub.f32 %v4544, %v4545
        %v4547 = vand.u32 %v4546, 4294901760
        %4548 = vmatpush1.msra.mxu0 %v4547
        %4549 = vmatprep.subr.mxu0 0.0
        %v4550 = vand.u32 %v376, 4294901760
        %v4551 = vsub.f32 %v376, %v4550
        %v4552 = vand.u32 %v4551, 4294901760
        %v4553 = vsub.f32 %v4551, %v4552
        %v4554 = vand.u32 %v4553, 4294901760
        %4555 = vmatpush1.msra.mxu0 %v4554
        %4556 = vmatprep.subr.mxu0 0.0
        %v4557 = vand.u32 %v377, 4294901760
        %v4558 = vsub.f32 %v377, %v4557
        %v4559 = vand.u32 %v4558, 4294901760
        %v4560 = vsub.f32 %v4558, %v4559
        %v4561 = vand.u32 %v4560, 4294901760
        %4562 = vmatpush1.msra.mxu0 %v4561
        %4563 = vmatprep.subr.mxu0 0.0
        %v4564 = vand.u32 %v378, 4294901760
        %v4565 = vsub.f32 %v378, %v4564
        %v4566 = vand.u32 %v4565, 4294901760
        %v4567 = vsub.f32 %v4565, %v4566
        %v4568 = vand.u32 %v4567, 4294901760
        %4569 = vmatpush1.msra.mxu0 %v4568
        %4570 = vmatprep.subr.mxu0 0.0
        %v4571 = vand.u32 %v379, 4294901760
        %v4572 = vsub.f32 %v379, %v4571
        %v4573 = vand.u32 %v4572, 4294901760
        %v4574 = vsub.f32 %v4572, %v4573
        %v4575 = vand.u32 %v4574, 4294901760
        %4576 = vmatpush1.msra.mxu0 %v4575
        %4577 = vmatprep.subr.mxu0 0.0
        %v4578 = vand.u32 %v380, 4294901760
        %v4579 = vsub.f32 %v380, %v4578
        %v4580 = vand.u32 %v4579, 4294901760
        %v4581 = vsub.f32 %v4579, %v4580
        %v4582 = vand.u32 %v4581, 4294901760
        %4583 = vmatpush1.msra.mxu0 %v4582
        %4584 = vmatprep.subr.mxu0 0.0
        %v4585 = vand.u32 %v381, 4294901760
        %v4586 = vsub.f32 %v381, %v4585
        %v4587 = vand.u32 %v4586, 4294901760
        %v4588 = vsub.f32 %v4586, %v4587
        %v4589 = vand.u32 %v4588, 4294901760
        %4590 = vmatpush1.msra.mxu0 %v4589
        %4591 = vmatprep.subr.mxu0 0.0
        %v4592 = vand.u32 %v382, 4294901760
        %v4593 = vsub.f32 %v382, %v4592
        %v4594 = vand.u32 %v4593, 4294901760
        %v4595 = vsub.f32 %v4593, %v4594
        %v4596 = vand.u32 %v4595, 4294901760
        %4597 = vmatpush1.msra.mxu0 %v4596
        %4598 = vmatprep.subr.mxu0 0.0
        %v4599 = vand.u32 %v383, 4294901760
        %v4600 = vsub.f32 %v383, %v4599
        %v4601 = vand.u32 %v4600, 4294901760
        %v4602 = vsub.f32 %v4600, %v4601
        %v4603 = vand.u32 %v4602, 4294901760
        %4604 = vmatpush1.msra.mxu0 %v4603
        %4605 = vmatprep.subr.mxu0 0.0
        %v4606 = vand.u32 %v384, 4294901760
        %v4607 = vsub.f32 %v384, %v4606
        %v4608 = vand.u32 %v4607, 4294901760
        %v4609 = vsub.f32 %v4607, %v4608
        %v4610 = vand.u32 %v4609, 4294901760
        %4611 = vmatpush1.msra.mxu0 %v4610
        %4612 = vmatprep.subr.mxu0 0.0
        %v4613 = vand.u32 %v385, 4294901760
        %v4614 = vsub.f32 %v385, %v4613
        %v4615 = vand.u32 %v4614, 4294901760
        %v4616 = vsub.f32 %v4614, %v4615
        %v4617 = vand.u32 %v4616, 4294901760
        %4618 = vmatpush1.msra.mxu0 %v4617
        %4619 = vmatprep.subr.mxu0 0.0
        %v4620 = vand.u32 %v386, 4294901760
        %v4621 = vsub.f32 %v386, %v4620
        %v4622 = vand.u32 %v4621, 4294901760
        %v4623 = vsub.f32 %v4621, %v4622
        %v4624 = vand.u32 %v4623, 4294901760
        %4625 = vmatpush1.msra.mxu0 %v4624
        %4626 = vmatprep.subr.mxu0 0.0
        %v4627 = vand.u32 %v387, 4294901760
        %v4628 = vsub.f32 %v387, %v4627
        %v4629 = vand.u32 %v4628, 4294901760
        %v4630 = vsub.f32 %v4628, %v4629
        %v4631 = vand.u32 %v4630, 4294901760
        %4632 = vmatpush1.msra.mxu0 %v4631
        %4633 = vmatprep.subr.mxu0 0.0
        %v4634 = vand.u32 %v388, 4294901760
        %v4635 = vsub.f32 %v388, %v4634
        %v4636 = vand.u32 %v4635, 4294901760
        %v4637 = vsub.f32 %v4635, %v4636
        %v4638 = vand.u32 %v4637, 4294901760
        %4639 = vmatpush1.msra.mxu0 %v4638
        %4640 = vmatprep.subr.mxu0 0.0
        %v4641 = vand.u32 %v389, 4294901760
        %v4642 = vsub.f32 %v389, %v4641
        %v4643 = vand.u32 %v4642, 4294901760
        %v4644 = vsub.f32 %v4642, %v4643
        %v4645 = vand.u32 %v4644, 4294901760
        %4646 = vmatpush1.msra.mxu0 %v4645
        %4647 = vmatprep.subr.mxu0 0.0
        %v4648 = vand.u32 %v390, 4294901760
        %v4649 = vsub.f32 %v390, %v4648
        %v4650 = vand.u32 %v4649, 4294901760
        %v4651 = vsub.f32 %v4649, %v4650
        %v4652 = vand.u32 %v4651, 4294901760
        %4653 = vmatpush1.msra.mxu0 %v4652
        %4654 = vmatprep.subr.mxu0 0.0
        %v4655 = vand.u32 %v391, 4294901760
        %v4656 = vsub.f32 %v391, %v4655
        %v4657 = vand.u32 %v4656, 4294901760
        %v4658 = vsub.f32 %v4656, %v4657
        %v4659 = vand.u32 %v4658, 4294901760
        %4660 = vmatpush1.msra.mxu0 %v4659
        %4661 = vmatprep.subr.mxu0 0.0
        %v4662 = vand.u32 %v392, 4294901760
        %v4663 = vsub.f32 %v392, %v4662
        %v4664 = vand.u32 %v4663, 4294901760
        %v4665 = vsub.f32 %v4663, %v4664
        %v4666 = vand.u32 %v4665, 4294901760
        %4667 = vmatpush1.msra.mxu0 %v4666
        %4668 = vmatprep.subr.mxu0 0.0
        %v4669 = vand.u32 %v393, 4294901760
        %v4670 = vsub.f32 %v393, %v4669
        %v4671 = vand.u32 %v4670, 4294901760
        %v4672 = vsub.f32 %v4670, %v4671
        %v4673 = vand.u32 %v4672, 4294901760
        %4674 = vmatpush1.msra.mxu0 %v4673
        %4675 = vmatprep.subr.mxu0 0.0
        %v4676 = vand.u32 %v394, 4294901760
        %v4677 = vsub.f32 %v394, %v4676
        %v4678 = vand.u32 %v4677, 4294901760
        %v4679 = vsub.f32 %v4677, %v4678
        %v4680 = vand.u32 %v4679, 4294901760
        %4681 = vmatpush1.msra.mxu0 %v4680
        %4682 = vmatprep.subr.mxu0 0.0
        %v4683 = vand.u32 %v395, 4294901760
        %v4684 = vsub.f32 %v395, %v4683
        %v4685 = vand.u32 %v4684, 4294901760
        %v4686 = vsub.f32 %v4684, %v4685
        %v4687 = vand.u32 %v4686, 4294901760
        %4688 = vmatpush1.msra.mxu0 %v4687
        %4689 = vmatprep.subr.mxu0 0.0
        %v4690 = vand.u32 %v396, 4294901760
        %v4691 = vsub.f32 %v396, %v4690
        %v4692 = vand.u32 %v4691, 4294901760
        %v4693 = vsub.f32 %v4691, %v4692
        %v4694 = vand.u32 %v4693, 4294901760
        %4695 = vmatpush1.msra.mxu0 %v4694
        %4696 = vmatprep.subr.mxu0 0.0
        %v4697 = vand.u32 %v397, 4294901760
        %v4698 = vsub.f32 %v397, %v4697
        %v4699 = vand.u32 %v4698, 4294901760
        %v4700 = vsub.f32 %v4698, %v4699
        %v4701 = vand.u32 %v4700, 4294901760
        %4702 = vmatpush1.msra.mxu0 %v4701
        %4703 = vmatprep.subr.mxu0 0.0
        %v4704 = vand.u32 %v398, 4294901760
        %v4705 = vsub.f32 %v398, %v4704
        %v4706 = vand.u32 %v4705, 4294901760
        %v4707 = vsub.f32 %v4705, %v4706
        %v4708 = vand.u32 %v4707, 4294901760
        %4709 = vmatpush1.msra.mxu0 %v4708
        %4710 = vmatprep.subr.mxu0 0.0
        %v4711 = vand.u32 %v399, 4294901760
        %v4712 = vsub.f32 %v399, %v4711
        %v4713 = vand.u32 %v4712, 4294901760
        %v4714 = vsub.f32 %v4712, %v4713
        %v4715 = vand.u32 %v4714, 4294901760
        %4716 = vmatpush1.msra.mxu0 %v4715
        %4717 = vmatprep.subr.mxu0 0.0
        %v4718 = vand.u32 %v400, 4294901760
        %v4719 = vsub.f32 %v400, %v4718
        %v4720 = vand.u32 %v4719, 4294901760
        %v4721 = vsub.f32 %v4719, %v4720
        %v4722 = vand.u32 %v4721, 4294901760
        %4723 = vmatpush1.msra.mxu0 %v4722
        %4724 = vmatprep.subr.mxu0 0.0
        %v4725 = vand.u32 %v401, 4294901760
        %v4726 = vsub.f32 %v401, %v4725
        %v4727 = vand.u32 %v4726, 4294901760
        %v4728 = vsub.f32 %v4726, %v4727
        %v4729 = vand.u32 %v4728, 4294901760
        %4730 = vmatpush1.msra.mxu0 %v4729
        %4731 = vmatprep.subr.mxu0 0.0
        %v4732 = vand.u32 %v402, 4294901760
        %v4733 = vsub.f32 %v402, %v4732
        %v4734 = vand.u32 %v4733, 4294901760
        %v4735 = vsub.f32 %v4733, %v4734
        %v4736 = vand.u32 %v4735, 4294901760
        %4737 = vmatpush1.msra.mxu0 %v4736
        %4738 = vmatprep.subr.mxu0 0.0
        %v4739 = vand.u32 %v403, 4294901760
        %v4740 = vsub.f32 %v403, %v4739
        %v4741 = vand.u32 %v4740, 4294901760
        %v4742 = vsub.f32 %v4740, %v4741
        %v4743 = vand.u32 %v4742, 4294901760
        %4744 = vmatpush1.msra.mxu0 %v4743
        %4745 = vmatprep.subr.mxu0 0.0
        %v4746 = vand.u32 %v404, 4294901760
        %v4747 = vsub.f32 %v404, %v4746
        %v4748 = vand.u32 %v4747, 4294901760
        %v4749 = vsub.f32 %v4747, %v4748
        %v4750 = vand.u32 %v4749, 4294901760
        %4751 = vmatpush1.msra.mxu0 %v4750
        %4752 = vmatprep.subr.mxu0 0.0
        %v4753 = vand.u32 %v405, 4294901760
        %v4754 = vsub.f32 %v405, %v4753
        %v4755 = vand.u32 %v4754, 4294901760
        %v4756 = vsub.f32 %v4754, %v4755
        %v4757 = vand.u32 %v4756, 4294901760
        %4758 = vmatpush1.msra.mxu0 %v4757
        %v4759 = vand.u32 %v201, 4294901760
        %4760 = vmatprep.mubr.f32.mxu0 %v4759
        %v4761 = vand.u32 %v200, 4294901760
        %4762 = vmatmul.mubr.f32.gmra.mrb[0].mxu0 %v4761
        %v4763 = vpop.f32.mrb[0].mxu0
        %v4764 = vadd.f32 %v4262, %v4763
        %v4765 = vpop.f32.mrb[0].mxu0
        %v4766 = vand.u32 %v207, 4294901760
        %4767 = vmatprep.mubr.f32.mxu0 %v4766
        %v4768 = vand.u32 %v206, 4294901760
        %4769 = vmatmul.mubr.f32.gmra.mrb[0].mxu0 %v4768
        %v4770 = vpop.f32.mrb[0].mxu0
        %v4771 = vadd.f32 %v4277, %v4770
        %v4772 = vpop.f32.mrb[0].mxu0
        %v4773 = vand.u32 %v213, 4294901760
        %4774 = vmatprep.mubr.f32.mxu0 %v4773
        %v4775 = vand.u32 %v212, 4294901760
        %4776 = vmatmul.mubr.f32.gmra.mrb[0].mxu0 %v4775
        %v4777 = vpop.f32.mrb[0].mxu0
        %v4778 = vadd.f32 %v4292, %v4777
        %v4779 = vpop.f32.mrb[0].mxu0
        %v4780 = vand.u32 %v219, 4294901760
        %4781 = vmatprep.mubr.f32.mxu0 %v4780
        %v4782 = vand.u32 %v218, 4294901760
        %4783 = vmatmul.mubr.f32.gmra.mrb[0].mxu0 %v4782
        %v4784 = vpop.f32.mrb[0].mxu0
        %v4785 = vadd.f32 %v4307, %v4784
        %v4786 = vpop.f32.mrb[0].mxu0
        %v4787 = vand.u32 %v225, 4294901760
        %4788 = vmatprep.mubr.f32.mxu0 %v4787
        %v4789 = vand.u32 %v224, 4294901760
        %4790 = vmatmul.mubr.f32.gmra.mrb[0].mxu0 %v4789
        %v4791 = vpop.f32.mrb[0].mxu0
        %v4792 = vadd.f32 %v4322, %v4791
        %v4793 = vpop.f32.mrb[0].mxu0
        %v4794 = vand.u32 %v231, 4294901760
        %4795 = vmatprep.mubr.f32.mxu0 %v4794
        %v4796 = vand.u32 %v230, 4294901760
        %4797 = vmatmul.mubr.f32.gmra.mrb[0].mxu0 %v4796
        %v4798 = vpop.f32.mrb[0].mxu0
        %v4799 = vadd.f32 %v4337, %v4798
        %v4800 = vpop.f32.mrb[0].mxu0
        %v4801 = vand.u32 %v237, 4294901760
        %4802 = vmatprep.mubr.f32.mxu0 %v4801
        %v4803 = vand.u32 %v236, 4294901760
        %4804 = vmatmul.mubr.f32.gmra.mrb[0].mxu0 %v4803
        %v4805 = vpop.f32.mrb[0].mxu0
        %v4806 = vadd.f32 %v4352, %v4805
        %v4807 = vpop.f32.mrb[0].mxu0
        %v4808 = vand.u32 %v243, 4294901760
        %4809 = vmatprep.mubr.f32.mxu0 %v4808
        %v4810 = vand.u32 %v242, 4294901760
        %4811 = vmatmul.mubr.f32.gmra.mrb[0].mxu0 %v4810
        %v4812 = vpop.f32.mrb[0].mxu0
        %v4813 = vadd.f32 %v4367, %v4812
        %v4814 = vpop.f32.mrb[0].mxu0
        %v4815 = vand.u32 %v249, 4294901760
        %4816 = vmatprep.mubr.f32.mxu0 %v4815
        %v4817 = vand.u32 %v248, 4294901760
        %4818 = vmatmul.mubr.f32.gmra.mrb[0].mxu0 %v4817
        %v4819 = vpop.f32.mrb[0].mxu0
        %v4820 = vadd.f32 %v4382, %v4819
        %v4821 = vpop.f32.mrb[0].mxu0
        %v4822 = vand.u32 %v255, 4294901760
        %4823 = vmatprep.mubr.f32.mxu0 %v4822
        %v4824 = vand.u32 %v254, 4294901760
        %4825 = vmatmul.mubr.f32.gmra.mrb[0].mxu0 %v4824
        %v4826 = vpop.f32.mrb[0].mxu0
        %v4827 = vadd.f32 %v4397, %v4826
        %v4828 = vpop.f32.mrb[0].mxu0
        %v4829 = vand.u32 %v261, 4294901760
        %4830 = vmatprep.mubr.f32.mxu0 %v4829
        %v4831 = vand.u32 %v260, 4294901760
        %4832 = vmatmul.mubr.f32.gmra.mrb[0].mxu0 %v4831
        %v4833 = vpop.f32.mrb[0].mxu0
        %v4834 = vadd.f32 %v4412, %v4833
        %v4835 = vpop.f32.mrb[0].mxu0
        %v4836 = vand.u32 %v267, 4294901760
        %4837 = vmatprep.mubr.f32.mxu0 %v4836
        %v4838 = vand.u32 %v266, 4294901760
        %4839 = vmatmul.mubr.f32.gmra.mrb[0].mxu0 %v4838
        %v4840 = vpop.f32.mrb[0].mxu0
        %v4841 = vadd.f32 %v4427, %v4840
        %v4842 = vpop.f32.mrb[0].mxu0
        %v4843 = vand.u32 %v273, 4294901760
        %4844 = vmatprep.mubr.f32.mxu0 %v4843
        %v4845 = vand.u32 %v272, 4294901760
        %4846 = vmatmul.mubr.f32.gmra.mrb[0].mxu0 %v4845
        %v4847 = vpop.f32.mrb[0].mxu0
        %v4848 = vadd.f32 %v4442, %v4847
        %v4849 = vpop.f32.mrb[0].mxu0
        %v4850 = vand.u32 %v279, 4294901760
        %4851 = vmatprep.mubr.f32.mxu0 %v4850
        %v4852 = vand.u32 %v278, 4294901760
        %4853 = vmatmul.mubr.f32.gmra.mrb[0].mxu0 %v4852
        %v4854 = vpop.f32.mrb[0].mxu0
        %v4855 = vadd.f32 %v4457, %v4854
        %v4856 = vpop.f32.mrb[0].mxu0
        %v4857 = vand.u32 %v285, 4294901760
        %4858 = vmatprep.mubr.f32.mxu0 %v4857
        %v4859 = vand.u32 %v284, 4294901760
        %4860 = vmatmul.mubr.f32.gmra.mrb[0].mxu0 %v4859
        %v4861 = vpop.f32.mrb[0].mxu0
        %v4862 = vadd.f32 %v4472, %v4861
        %v4863 = vpop.f32.mrb[0].mxu0
        %v4864 = vand.u32 %v291, 4294901760
        %4865 = vmatprep.mubr.f32.mxu0 %v4864
        %v4866 = vand.u32 %v290, 4294901760
        %4867 = vmatmul.mubr.f32.gmra.mrb[0].mxu0 %v4866
        %v4868 = vpop.f32.mrb[0].mxu0
        %v4869 = vadd.f32 %v4487, %v4868
        %v4870 = vpop.f32.mrb[0].mxu0
        %v4871 = vand.u32 %v297, 4294901760
        %4872 = vmatprep.mubr.f32.mxu0 %v4871
        %v4873 = vand.u32 %v296, 4294901760
        %4874 = vmatmul.mubr.f32.gmra.mrb[0].mxu0 %v4873
        %v4875 = vpop.f32.mrb[0].mxu0
        %v4876 = vadd.f32 %v4502, %v4875
        %v4877 = vpop.f32.mrb[0].mxu0
        %v4878 = vand.u32 %v303, 4294901760
        %4879 = vmatprep.mubr.f32.mxu0 %v4878
        %v4880 = vand.u32 %v302, 4294901760
        %4881 = vmatmul.mubr.f32.gmra.mrb[0].mxu0 %v4880
        %v4882 = vpop.f32.mrb[0].mxu0
        %v4883 = vadd.f32 %v4517, %v4882
        %v4884 = vpop.f32.mrb[0].mxu0
        %v4885 = vand.u32 %v309, 4294901760
        %4886 = vmatprep.mubr.f32.mxu0 %v4885
        %v4887 = vand.u32 %v308, 4294901760
        %4888 = vmatmul.mubr.f32.gmra.mrb[0].mxu0 %v4887
        %v4889 = vpop.f32.mrb[0].mxu0
        %v4890 = vadd.f32 %v4532, %v4889
        %v4891 = vpop.f32.mrb[0].mxu0
        %4892 = vdwg.mxu0
        %4893 = vmatprep.subr.mxu0 0.0
        %v4894 = vand.u32 %v374, 4294901760
        %v4895 = vsub.f32 %v374, %v4894
        %4896 = vmatpush1.msra.mxu0 %v4895
        %4897 = vmatprep.subr.mxu0 0.0
        %v4898 = vand.u32 %v375, 4294901760
        %v4899 = vsub.f32 %v375, %v4898
        %4900 = vmatpush1.msra.mxu0 %v4899
        %4901 = vmatprep.subr.mxu0 0.0
        %v4902 = vand.u32 %v376, 4294901760
        %v4903 = vsub.f32 %v376, %v4902
        %4904 = vmatpush1.msra.mxu0 %v4903
        %4905 = vmatprep.subr.mxu0 0.0
        %v4906 = vand.u32 %v377, 4294901760
        %v4907 = vsub.f32 %v377, %v4906
        %4908 = vmatpush1.msra.mxu0 %v4907
        %4909 = vmatprep.subr.mxu0 0.0
        %v4910 = vand.u32 %v378, 4294901760
        %v4911 = vsub.f32 %v378, %v4910
        %4912 = vmatpush1.msra.mxu0 %v4911
        %4913 = vmatprep.subr.mxu0 0.0
        %v4914 = vand.u32 %v379, 4294901760
        %v4915 = vsub.f32 %v379, %v4914
        %4916 = vmatpush1.msra.mxu0 %v4915
        %4917 = vmatprep.subr.mxu0 0.0
        %v4918 = vand.u32 %v380, 4294901760
        %v4919 = vsub.f32 %v380, %v4918
        %4920 = vmatpush1.msra.mxu0 %v4919
        %4921 = vmatprep.subr.mxu0 0.0
        %v4922 = vand.u32 %v381, 4294901760
        %v4923 = vsub.f32 %v381, %v4922
        %4924 = vmatpush1.msra.mxu0 %v4923
        %4925 = vmatprep.subr.mxu0 0.0
        %v4926 = vand.u32 %v382, 4294901760
        %v4927 = vsub.f32 %v382, %v4926
        %4928 = vmatpush1.msra.mxu0 %v4927
        %4929 = vmatprep.subr.mxu0 0.0
        %v4930 = vand.u32 %v383, 4294901760
        %v4931 = vsub.f32 %v383, %v4930
        %4932 = vmatpush1.msra.mxu0 %v4931
        %4933 = vmatprep.subr.mxu0 0.0
        %v4934 = vand.u32 %v384, 4294901760
        %v4935 = vsub.f32 %v384, %v4934
        %4936 = vmatpush1.msra.mxu0 %v4935
        %4937 = vmatprep.subr.mxu0 0.0
        %v4938 = vand.u32 %v385, 4294901760
        %v4939 = vsub.f32 %v385, %v4938
        %4940 = vmatpush1.msra.mxu0 %v4939
        %4941 = vmatprep.subr.mxu0 0.0
        %v4942 = vand.u32 %v386, 4294901760
        %v4943 = vsub.f32 %v386, %v4942
        %4944 = vmatpush1.msra.mxu0 %v4943
        %4945 = vmatprep.subr.mxu0 0.0
        %v4946 = vand.u32 %v387, 4294901760
        %v4947 = vsub.f32 %v387, %v4946
        %4948 = vmatpush1.msra.mxu0 %v4947
        %4949 = vmatprep.subr.mxu0 0.0
        %v4950 = vand.u32 %v388, 4294901760
        %v4951 = vsub.f32 %v388, %v4950
        %4952 = vmatpush1.msra.mxu0 %v4951
        %4953 = vmatprep.subr.mxu0 0.0
        %v4954 = vand.u32 %v389, 4294901760
        %v4955 = vsub.f32 %v389, %v4954
        %4956 = vmatpush1.msra.mxu0 %v4955
        %4957 = vmatprep.subr.mxu0 0.0
        %v4958 = vand.u32 %v390, 4294901760
        %v4959 = vsub.f32 %v390, %v4958
        %4960 = vmatpush1.msra.mxu0 %v4959
        %4961 = vmatprep.subr.mxu0 0.0
        %v4962 = vand.u32 %v391, 4294901760
        %v4963 = vsub.f32 %v391, %v4962
        %4964 = vmatpush1.msra.mxu0 %v4963
        %4965 = vmatprep.subr.mxu0 0.0
        %v4966 = vand.u32 %v392, 4294901760
        %v4967 = vsub.f32 %v392, %v4966
        %4968 = vmatpush1.msra.mxu0 %v4967
        %4969 = vmatprep.subr.mxu0 0.0
        %v4970 = vand.u32 %v393, 4294901760
        %v4971 = vsub.f32 %v393, %v4970
        %4972 = vmatpush1.msra.mxu0 %v4971
        %4973 = vmatprep.subr.mxu0 0.0
        %v4974 = vand.u32 %v394, 4294901760
        %v4975 = vsub.f32 %v394, %v4974
        %4976 = vmatpush1.msra.mxu0 %v4975
        %4977 = vmatprep.subr.mxu0 0.0
        %v4978 = vand.u32 %v395, 4294901760
        %v4979 = vsub.f32 %v395, %v4978
        %4980 = vmatpush1.msra.mxu0 %v4979
        %4981 = vmatprep.subr.mxu0 0.0
        %v4982 = vand.u32 %v396, 4294901760
        %v4983 = vsub.f32 %v396, %v4982
        %4984 = vmatpush1.msra.mxu0 %v4983
        %4985 = vmatprep.subr.mxu0 0.0
        %v4986 = vand.u32 %v397, 4294901760
        %v4987 = vsub.f32 %v397, %v4986
        %4988 = vmatpush1.msra.mxu0 %v4987
        %4989 = vmatprep.subr.mxu0 0.0
        %v4990 = vand.u32 %v398, 4294901760
        %v4991 = vsub.f32 %v398, %v4990
        %4992 = vmatpush1.msra.mxu0 %v4991
        %4993 = vmatprep.subr.mxu0 0.0
        %v4994 = vand.u32 %v399, 4294901760
        %v4995 = vsub.f32 %v399, %v4994
        %4996 = vmatpush1.msra.mxu0 %v4995
        %4997 = vmatprep.subr.mxu0 0.0
        %v4998 = vand.u32 %v400, 4294901760
        %v4999 = vsub.f32 %v400, %v4998
        %5000 = vmatpush1.msra.mxu0 %v4999
        %5001 = vmatprep.subr.mxu0 0.0
        %v5002 = vand.u32 %v401, 4294901760
        %v5003 = vsub.f32 %v401, %v5002
        %5004 = vmatpush1.msra.mxu0 %v5003
        %5005 = vmatprep.subr.mxu0 0.0
        %v5006 = vand.u32 %v402, 4294901760
        %v5007 = vsub.f32 %v402, %v5006
        %5008 = vmatpush1.msra.mxu0 %v5007
        %5009 = vmatprep.subr.mxu0 0.0
        %v5010 = vand.u32 %v403, 4294901760
        %v5011 = vsub.f32 %v403, %v5010
        %5012 = vmatpush1.msra.mxu0 %v5011
        %5013 = vmatprep.subr.mxu0 0.0
        %v5014 = vand.u32 %v404, 4294901760
        %v5015 = vsub.f32 %v404, %v5014
        %5016 = vmatpush1.msra.mxu0 %v5015
        %5017 = vmatprep.subr.mxu0 0.0
        %v5018 = vand.u32 %v405, 4294901760
        %v5019 = vsub.f32 %v405, %v5018
        %5020 = vmatpush1.msra.mxu0 %v5019
        %v5021 = vand.u32 %v201, 4294901760
        %v5022 = vsub.f32 %v201, %v5021
        %5023 = vmatprep.mubr.f32.mxu0 %v5022
        %v5024 = vand.u32 %v200, 4294901760
        %v5025 = vsub.f32 %v200, %v5024
        %5026 = vmatmul.mubr.f32.gmra.mrb[0].mxu0 %v5025
        %v5027 = vpop.f32.mrb[0].mxu0
        %v5028 = vadd.f32 %v4764, %v5027
        %v5029 = vpop.f32.mrb[0].mxu0
        %v5030 = vand.u32 %v207, 4294901760
        %v5031 = vsub.f32 %v207, %v5030
        %5032 = vmatprep.mubr.f32.mxu0 %v5031
        %v5033 = vand.u32 %v206, 4294901760
        %v5034 = vsub.f32 %v206, %v5033
        %5035 = vmatmul.mubr.f32.gmra.mrb[0].mxu0 %v5034
        %v5036 = vpop.f32.mrb[0].mxu0
        %v5037 = vadd.f32 %v4771, %v5036
        %v5038 = vpop.f32.mrb[0].mxu0
        %v5039 = vand.u32 %v213, 4294901760
        %v5040 = vsub.f32 %v213, %v5039
        %5041 = vmatprep.mubr.f32.mxu0 %v5040
        %v5042 = vand.u32 %v212, 4294901760
        %v5043 = vsub.f32 %v212, %v5042
        %5044 = vmatmul.mubr.f32.gmra.mrb[0].mxu0 %v5043
        %v5045 = vpop.f32.mrb[0].mxu0
        %v5046 = vadd.f32 %v4778, %v5045
        %v5047 = vpop.f32.mrb[0].mxu0
        %v5048 = vand.u32 %v219, 4294901760
        %v5049 = vsub.f32 %v219, %v5048
        %5050 = vmatprep.mubr.f32.mxu0 %v5049
        %v5051 = vand.u32 %v218, 4294901760
        %v5052 = vsub.f32 %v218, %v5051
        %5053 = vmatmul.mubr.f32.gmra.mrb[0].mxu0 %v5052
        %v5054 = vpop.f32.mrb[0].mxu0
        %v5055 = vadd.f32 %v4785, %v5054
        %v5056 = vpop.f32.mrb[0].mxu0
        %v5057 = vand.u32 %v225, 4294901760
        %v5058 = vsub.f32 %v225, %v5057
        %5059 = vmatprep.mubr.f32.mxu0 %v5058
        %v5060 = vand.u32 %v224, 4294901760
        %v5061 = vsub.f32 %v224, %v5060
        %5062 = vmatmul.mubr.f32.gmra.mrb[0].mxu0 %v5061
        %v5063 = vpop.f32.mrb[0].mxu0
        %v5064 = vadd.f32 %v4792, %v5063
        %v5065 = vpop.f32.mrb[0].mxu0
        %v5066 = vand.u32 %v231, 4294901760
        %v5067 = vsub.f32 %v231, %v5066
        %5068 = vmatprep.mubr.f32.mxu0 %v5067
        %v5069 = vand.u32 %v230, 4294901760
        %v5070 = vsub.f32 %v230, %v5069
        %5071 = vmatmul.mubr.f32.gmra.mrb[0].mxu0 %v5070
        %v5072 = vpop.f32.mrb[0].mxu0
        %v5073 = vadd.f32 %v4799, %v5072
        %v5074 = vpop.f32.mrb[0].mxu0
        %v5075 = vand.u32 %v237, 4294901760
        %v5076 = vsub.f32 %v237, %v5075
        %5077 = vmatprep.mubr.f32.mxu0 %v5076
        %v5078 = vand.u32 %v236, 4294901760
        %v5079 = vsub.f32 %v236, %v5078
        %5080 = vmatmul.mubr.f32.gmra.mrb[0].mxu0 %v5079
        %v5081 = vpop.f32.mrb[0].mxu0
        %v5082 = vadd.f32 %v4806, %v5081
        %v5083 = vpop.f32.mrb[0].mxu0
        %v5084 = vand.u32 %v243, 4294901760
        %v5085 = vsub.f32 %v243, %v5084
        %5086 = vmatprep.mubr.f32.mxu0 %v5085
        %v5087 = vand.u32 %v242, 4294901760
        %v5088 = vsub.f32 %v242, %v5087
        %5089 = vmatmul.mubr.f32.gmra.mrb[0].mxu0 %v5088
        %v5090 = vpop.f32.mrb[0].mxu0
        %v5091 = vadd.f32 %v4813, %v5090
        %v5092 = vpop.f32.mrb[0].mxu0
        %v5093 = vand.u32 %v249, 4294901760
        %v5094 = vsub.f32 %v249, %v5093
        %5095 = vmatprep.mubr.f32.mxu0 %v5094
        %v5096 = vand.u32 %v248, 4294901760
        %v5097 = vsub.f32 %v248, %v5096
        %5098 = vmatmul.mubr.f32.gmra.mrb[0].mxu0 %v5097
        %v5099 = vpop.f32.mrb[0].mxu0
        %v5100 = vadd.f32 %v4820, %v5099
        %v5101 = vpop.f32.mrb[0].mxu0
        %v5102 = vand.u32 %v255, 4294901760
        %v5103 = vsub.f32 %v255, %v5102
        %5104 = vmatprep.mubr.f32.mxu0 %v5103
        %v5105 = vand.u32 %v254, 4294901760
        %v5106 = vsub.f32 %v254, %v5105
        %5107 = vmatmul.mubr.f32.gmra.mrb[0].mxu0 %v5106
        %v5108 = vpop.f32.mrb[0].mxu0
        %v5109 = vadd.f32 %v4827, %v5108
        %v5110 = vpop.f32.mrb[0].mxu0
        %v5111 = vand.u32 %v261, 4294901760
        %v5112 = vsub.f32 %v261, %v5111
        %5113 = vmatprep.mubr.f32.mxu0 %v5112
        %v5114 = vand.u32 %v260, 4294901760
        %v5115 = vsub.f32 %v260, %v5114
        %5116 = vmatmul.mubr.f32.gmra.mrb[0].mxu0 %v5115
        %v5117 = vpop.f32.mrb[0].mxu0
        %v5118 = vadd.f32 %v4834, %v5117
        %v5119 = vpop.f32.mrb[0].mxu0
        %v5120 = vand.u32 %v267, 4294901760
        %v5121 = vsub.f32 %v267, %v5120
        %5122 = vmatprep.mubr.f32.mxu0 %v5121
        %v5123 = vand.u32 %v266, 4294901760
        %v5124 = vsub.f32 %v266, %v5123
        %5125 = vmatmul.mubr.f32.gmra.mrb[0].mxu0 %v5124
        %v5126 = vpop.f32.mrb[0].mxu0
        %v5127 = vadd.f32 %v4841, %v5126
        %v5128 = vpop.f32.mrb[0].mxu0
        %v5129 = vand.u32 %v273, 4294901760
        %v5130 = vsub.f32 %v273, %v5129
        %5131 = vmatprep.mubr.f32.mxu0 %v5130
        %v5132 = vand.u32 %v272, 4294901760
        %v5133 = vsub.f32 %v272, %v5132
        %5134 = vmatmul.mubr.f32.gmra.mrb[0].mxu0 %v5133
        %v5135 = vpop.f32.mrb[0].mxu0
        %v5136 = vadd.f32 %v4848, %v5135
        %v5137 = vpop.f32.mrb[0].mxu0
        %v5138 = vand.u32 %v279, 4294901760
        %v5139 = vsub.f32 %v279, %v5138
        %5140 = vmatprep.mubr.f32.mxu0 %v5139
        %v5141 = vand.u32 %v278, 4294901760
        %v5142 = vsub.f32 %v278, %v5141
        %5143 = vmatmul.mubr.f32.gmra.mrb[0].mxu0 %v5142
        %v5144 = vpop.f32.mrb[0].mxu0
        %v5145 = vadd.f32 %v4855, %v5144
        %v5146 = vpop.f32.mrb[0].mxu0
        %v5147 = vand.u32 %v285, 4294901760
        %v5148 = vsub.f32 %v285, %v5147
        %5149 = vmatprep.mubr.f32.mxu0 %v5148
        %v5150 = vand.u32 %v284, 4294901760
        %v5151 = vsub.f32 %v284, %v5150
        %5152 = vmatmul.mubr.f32.gmra.mrb[0].mxu0 %v5151
        %v5153 = vpop.f32.mrb[0].mxu0
        %v5154 = vadd.f32 %v4862, %v5153
        %v5155 = vpop.f32.mrb[0].mxu0
        %v5156 = vand.u32 %v291, 4294901760
        %v5157 = vsub.f32 %v291, %v5156
        %5158 = vmatprep.mubr.f32.mxu0 %v5157
        %v5159 = vand.u32 %v290, 4294901760
        %v5160 = vsub.f32 %v290, %v5159
        %5161 = vmatmul.mubr.f32.gmra.mrb[0].mxu0 %v5160
        %v5162 = vpop.f32.mrb[0].mxu0
        %v5163 = vadd.f32 %v4869, %v5162
        %v5164 = vpop.f32.mrb[0].mxu0
        %v5165 = vand.u32 %v297, 4294901760
        %v5166 = vsub.f32 %v297, %v5165
        %5167 = vmatprep.mubr.f32.mxu0 %v5166
        %v5168 = vand.u32 %v296, 4294901760
        %v5169 = vsub.f32 %v296, %v5168
        %5170 = vmatmul.mubr.f32.gmra.mrb[0].mxu0 %v5169
        %v5171 = vpop.f32.mrb[0].mxu0
        %v5172 = vadd.f32 %v4876, %v5171
        %v5173 = vpop.f32.mrb[0].mxu0
        %v5174 = vand.u32 %v303, 4294901760
        %v5175 = vsub.f32 %v303, %v5174
        %5176 = vmatprep.mubr.f32.mxu0 %v5175
        %v5177 = vand.u32 %v302, 4294901760
        %v5178 = vsub.f32 %v302, %v5177
        %5179 = vmatmul.mubr.f32.gmra.mrb[0].mxu0 %v5178
        %v5180 = vpop.f32.mrb[0].mxu0
        %v5181 = vadd.f32 %v4883, %v5180
        %v5182 = vpop.f32.mrb[0].mxu0
        %v5183 = vand.u32 %v309, 4294901760
        %v5184 = vsub.f32 %v309, %v5183
        %5185 = vmatprep.mubr.f32.mxu0 %v5184
        %v5186 = vand.u32 %v308, 4294901760
        %v5187 = vsub.f32 %v308, %v5186
        %5188 = vmatmul.mubr.f32.gmra.mrb[0].mxu0 %v5187
        %v5189 = vpop.f32.mrb[0].mxu0
        %v5190 = vadd.f32 %v4890, %v5189
        %v5191 = vpop.f32.mrb[0].mxu0
        %5192 = vdwg.mxu0
        %5193 = vmatprep.subr.mxu0 0.0
        %v5194 = vand.u32 %v374, 4294901760
        %5195 = vmatpush1.msra.mxu0 %v5194
        %5196 = vmatprep.subr.mxu0 0.0
        %v5197 = vand.u32 %v375, 4294901760
        %5198 = vmatpush1.msra.mxu0 %v5197
        %5199 = vmatprep.subr.mxu0 0.0
        %v5200 = vand.u32 %v376, 4294901760
        %5201 = vmatpush1.msra.mxu0 %v5200
        %5202 = vmatprep.subr.mxu0 0.0
        %v5203 = vand.u32 %v377, 4294901760
        %5204 = vmatpush1.msra.mxu0 %v5203
        %5205 = vmatprep.subr.mxu0 0.0
        %v5206 = vand.u32 %v378, 4294901760
        %5207 = vmatpush1.msra.mxu0 %v5206
        %5208 = vmatprep.subr.mxu0 0.0
        %v5209 = vand.u32 %v379, 4294901760
        %5210 = vmatpush1.msra.mxu0 %v5209
        %5211 = vmatprep.subr.mxu0 0.0
        %v5212 = vand.u32 %v380, 4294901760
        %5213 = vmatpush1.msra.mxu0 %v5212
        %5214 = vmatprep.subr.mxu0 0.0
        %v5215 = vand.u32 %v381, 4294901760
        %5216 = vmatpush1.msra.mxu0 %v5215
        %5217 = vmatprep.subr.mxu0 0.0
        %v5218 = vand.u32 %v382, 4294901760
        %5219 = vmatpush1.msra.mxu0 %v5218
        %5220 = vmatprep.subr.mxu0 0.0
        %v5221 = vand.u32 %v383, 4294901760
        %5222 = vmatpush1.msra.mxu0 %v5221
        %5223 = vmatprep.subr.mxu0 0.0
        %v5224 = vand.u32 %v384, 4294901760
        %5225 = vmatpush1.msra.mxu0 %v5224
        %5226 = vmatprep.subr.mxu0 0.0
        %v5227 = vand.u32 %v385, 4294901760
        %5228 = vmatpush1.msra.mxu0 %v5227
        %5229 = vmatprep.subr.mxu0 0.0
        %v5230 = vand.u32 %v386, 4294901760
        %5231 = vmatpush1.msra.mxu0 %v5230
        %5232 = vmatprep.subr.mxu0 0.0
        %v5233 = vand.u32 %v387, 4294901760
        %5234 = vmatpush1.msra.mxu0 %v5233
        %5235 = vmatprep.subr.mxu0 0.0
        %v5236 = vand.u32 %v388, 4294901760
        %5237 = vmatpush1.msra.mxu0 %v5236
        %5238 = vmatprep.subr.mxu0 0.0
        %v5239 = vand.u32 %v389, 4294901760
        %5240 = vmatpush1.msra.mxu0 %v5239
        %5241 = vmatprep.subr.mxu0 0.0
        %v5242 = vand.u32 %v390, 4294901760
        %5243 = vmatpush1.msra.mxu0 %v5242
        %5244 = vmatprep.subr.mxu0 0.0
        %v5245 = vand.u32 %v391, 4294901760
        %5246 = vmatpush1.msra.mxu0 %v5245
        %5247 = vmatprep.subr.mxu0 0.0
        %v5248 = vand.u32 %v392, 4294901760
        %5249 = vmatpush1.msra.mxu0 %v5248
        %5250 = vmatprep.subr.mxu0 0.0
        %v5251 = vand.u32 %v393, 4294901760
        %5252 = vmatpush1.msra.mxu0 %v5251
        %5253 = vmatprep.subr.mxu0 0.0
        %v5254 = vand.u32 %v394, 4294901760
        %5255 = vmatpush1.msra.mxu0 %v5254
        %5256 = vmatprep.subr.mxu0 0.0
        %v5257 = vand.u32 %v395, 4294901760
        %5258 = vmatpush1.msra.mxu0 %v5257
        %5259 = vmatprep.subr.mxu0 0.0
        %v5260 = vand.u32 %v396, 4294901760
        %5261 = vmatpush1.msra.mxu0 %v5260
        %5262 = vmatprep.subr.mxu0 0.0
        %v5263 = vand.u32 %v397, 4294901760
        %5264 = vmatpush1.msra.mxu0 %v5263
        %5265 = vmatprep.subr.mxu0 0.0
        %v5266 = vand.u32 %v398, 4294901760
        %5267 = vmatpush1.msra.mxu0 %v5266
        %5268 = vmatprep.subr.mxu0 0.0
        %v5269 = vand.u32 %v399, 4294901760
        %5270 = vmatpush1.msra.mxu0 %v5269
        %5271 = vmatprep.subr.mxu0 0.0
        %v5272 = vand.u32 %v400, 4294901760
        %5273 = vmatpush1.msra.mxu0 %v5272
        %5274 = vmatprep.subr.mxu0 0.0
        %v5275 = vand.u32 %v401, 4294901760
        %5276 = vmatpush1.msra.mxu0 %v5275
        %5277 = vmatprep.subr.mxu0 0.0
        %v5278 = vand.u32 %v402, 4294901760
        %5279 = vmatpush1.msra.mxu0 %v5278
        %5280 = vmatprep.subr.mxu0 0.0
        %v5281 = vand.u32 %v403, 4294901760
        %5282 = vmatpush1.msra.mxu0 %v5281
        %5283 = vmatprep.subr.mxu0 0.0
        %v5284 = vand.u32 %v404, 4294901760
        %5285 = vmatpush1.msra.mxu0 %v5284
        %5286 = vmatprep.subr.mxu0 0.0
        %v5287 = vand.u32 %v405, 4294901760
        %5288 = vmatpush1.msra.mxu0 %v5287
        %v5289 = vand.u32 %v201, 4294901760
        %v5290 = vsub.f32 %v201, %v5289
        %v5291 = vand.u32 %v5290, 4294901760
        %5292 = vmatprep.mubr.f32.mxu0 %v5291
        %v5293 = vand.u32 %v200, 4294901760
        %v5294 = vsub.f32 %v200, %v5293
        %v5295 = vand.u32 %v5294, 4294901760
        %5296 = vmatmul.mubr.f32.gmra.mrb[0].mxu0 %v5295
        %v5297 = vpop.f32.mrb[0].mxu0
        %v5298 = vadd.f32 %v5028, %v5297
        %v5299 = vpop.f32.mrb[0].mxu0
        %v5300 = vand.u32 %v207, 4294901760
        %v5301 = vsub.f32 %v207, %v5300
        %v5302 = vand.u32 %v5301, 4294901760
        %5303 = vmatprep.mubr.f32.mxu0 %v5302
        %v5304 = vand.u32 %v206, 4294901760
        %v5305 = vsub.f32 %v206, %v5304
        %v5306 = vand.u32 %v5305, 4294901760
        %5307 = vmatmul.mubr.f32.gmra.mrb[0].mxu0 %v5306
        %v5308 = vpop.f32.mrb[0].mxu0
        %v5309 = vadd.f32 %v5037, %v5308
        %v5310 = vpop.f32.mrb[0].mxu0
        %v5311 = vand.u32 %v213, 4294901760
        %v5312 = vsub.f32 %v213, %v5311
        %v5313 = vand.u32 %v5312, 4294901760
        %5314 = vmatprep.mubr.f32.mxu0 %v5313
        %v5315 = vand.u32 %v212, 4294901760
        %v5316 = vsub.f32 %v212, %v5315
        %v5317 = vand.u32 %v5316, 4294901760
        %5318 = vmatmul.mubr.f32.gmra.mrb[0].mxu0 %v5317
        %v5319 = vpop.f32.mrb[0].mxu0
        %v5320 = vadd.f32 %v5046, %v5319
        %v5321 = vpop.f32.mrb[0].mxu0
        %v5322 = vand.u32 %v219, 4294901760
        %v5323 = vsub.f32 %v219, %v5322
        %v5324 = vand.u32 %v5323, 4294901760
        %5325 = vmatprep.mubr.f32.mxu0 %v5324
        %v5326 = vand.u32 %v218, 4294901760
        %v5327 = vsub.f32 %v218, %v5326
        %v5328 = vand.u32 %v5327, 4294901760
        %5329 = vmatmul.mubr.f32.gmra.mrb[0].mxu0 %v5328
        %v5330 = vpop.f32.mrb[0].mxu0
        %v5331 = vadd.f32 %v5055, %v5330
        %v5332 = vpop.f32.mrb[0].mxu0
        %v5333 = vand.u32 %v225, 4294901760
        %v5334 = vsub.f32 %v225, %v5333
        %v5335 = vand.u32 %v5334, 4294901760
        %5336 = vmatprep.mubr.f32.mxu0 %v5335
        %v5337 = vand.u32 %v224, 4294901760
        %v5338 = vsub.f32 %v224, %v5337
        %v5339 = vand.u32 %v5338, 4294901760
        %5340 = vmatmul.mubr.f32.gmra.mrb[0].mxu0 %v5339
        %v5341 = vpop.f32.mrb[0].mxu0
        %v5342 = vadd.f32 %v5064, %v5341
        %v5343 = vpop.f32.mrb[0].mxu0
        %v5344 = vand.u32 %v231, 4294901760
        %v5345 = vsub.f32 %v231, %v5344
        %v5346 = vand.u32 %v5345, 4294901760
        %5347 = vmatprep.mubr.f32.mxu0 %v5346
        %v5348 = vand.u32 %v230, 4294901760
        %v5349 = vsub.f32 %v230, %v5348
        %v5350 = vand.u32 %v5349, 4294901760
        %5351 = vmatmul.mubr.f32.gmra.mrb[0].mxu0 %v5350
        %v5352 = vpop.f32.mrb[0].mxu0
        %v5353 = vadd.f32 %v5073, %v5352
        %v5354 = vpop.f32.mrb[0].mxu0
        %v5355 = vand.u32 %v237, 4294901760
        %v5356 = vsub.f32 %v237, %v5355
        %v5357 = vand.u32 %v5356, 4294901760
        %5358 = vmatprep.mubr.f32.mxu0 %v5357
        %v5359 = vand.u32 %v236, 4294901760
        %v5360 = vsub.f32 %v236, %v5359
        %v5361 = vand.u32 %v5360, 4294901760
        %5362 = vmatmul.mubr.f32.gmra.mrb[0].mxu0 %v5361
        %v5363 = vpop.f32.mrb[0].mxu0
        %v5364 = vadd.f32 %v5082, %v5363
        %v5365 = vpop.f32.mrb[0].mxu0
        %v5366 = vand.u32 %v243, 4294901760
        %v5367 = vsub.f32 %v243, %v5366
        %v5368 = vand.u32 %v5367, 4294901760
        %5369 = vmatprep.mubr.f32.mxu0 %v5368
        %v5370 = vand.u32 %v242, 4294901760
        %v5371 = vsub.f32 %v242, %v5370
        %v5372 = vand.u32 %v5371, 4294901760
        %5373 = vmatmul.mubr.f32.gmra.mrb[0].mxu0 %v5372
        %v5374 = vpop.f32.mrb[0].mxu0
        %v5375 = vadd.f32 %v5091, %v5374
        %v5376 = vpop.f32.mrb[0].mxu0
        %v5377 = vand.u32 %v249, 4294901760
        %v5378 = vsub.f32 %v249, %v5377
        %v5379 = vand.u32 %v5378, 4294901760
        %5380 = vmatprep.mubr.f32.mxu0 %v5379
        %v5381 = vand.u32 %v248, 4294901760
        %v5382 = vsub.f32 %v248, %v5381
        %v5383 = vand.u32 %v5382, 4294901760
        %5384 = vmatmul.mubr.f32.gmra.mrb[0].mxu0 %v5383
        %v5385 = vpop.f32.mrb[0].mxu0
        %v5386 = vadd.f32 %v5100, %v5385
        %v5387 = vpop.f32.mrb[0].mxu0
        %v5388 = vand.u32 %v255, 4294901760
        %v5389 = vsub.f32 %v255, %v5388
        %v5390 = vand.u32 %v5389, 4294901760
        %5391 = vmatprep.mubr.f32.mxu0 %v5390
        %v5392 = vand.u32 %v254, 4294901760
        %v5393 = vsub.f32 %v254, %v5392
        %v5394 = vand.u32 %v5393, 4294901760
        %5395 = vmatmul.mubr.f32.gmra.mrb[0].mxu0 %v5394
        %v5396 = vpop.f32.mrb[0].mxu0
        %v5397 = vadd.f32 %v5109, %v5396
        %v5398 = vpop.f32.mrb[0].mxu0
        %v5399 = vand.u32 %v261, 4294901760
        %v5400 = vsub.f32 %v261, %v5399
        %v5401 = vand.u32 %v5400, 4294901760
        %5402 = vmatprep.mubr.f32.mxu0 %v5401
        %v5403 = vand.u32 %v260, 4294901760
        %v5404 = vsub.f32 %v260, %v5403
        %v5405 = vand.u32 %v5404, 4294901760
        %5406 = vmatmul.mubr.f32.gmra.mrb[0].mxu0 %v5405
        %v5407 = vpop.f32.mrb[0].mxu0
        %v5408 = vadd.f32 %v5118, %v5407
        %v5409 = vpop.f32.mrb[0].mxu0
        %v5410 = vand.u32 %v267, 4294901760
        %v5411 = vsub.f32 %v267, %v5410
        %v5412 = vand.u32 %v5411, 4294901760
        %5413 = vmatprep.mubr.f32.mxu0 %v5412
        %v5414 = vand.u32 %v266, 4294901760
        %v5415 = vsub.f32 %v266, %v5414
        %v5416 = vand.u32 %v5415, 4294901760
        %5417 = vmatmul.mubr.f32.gmra.mrb[0].mxu0 %v5416
        %v5418 = vpop.f32.mrb[0].mxu0
        %v5419 = vadd.f32 %v5127, %v5418
        %v5420 = vpop.f32.mrb[0].mxu0
        %v5421 = vand.u32 %v273, 4294901760
        %v5422 = vsub.f32 %v273, %v5421
        %v5423 = vand.u32 %v5422, 4294901760
        %5424 = vmatprep.mubr.f32.mxu0 %v5423
        %v5425 = vand.u32 %v272, 4294901760
        %v5426 = vsub.f32 %v272, %v5425
        %v5427 = vand.u32 %v5426, 4294901760
        %5428 = vmatmul.mubr.f32.gmra.mrb[0].mxu0 %v5427
        %v5429 = vpop.f32.mrb[0].mxu0
        %v5430 = vadd.f32 %v5136, %v5429
        %v5431 = vpop.f32.mrb[0].mxu0
        %v5432 = vand.u32 %v279, 4294901760
        %v5433 = vsub.f32 %v279, %v5432
        %v5434 = vand.u32 %v5433, 4294901760
        %5435 = vmatprep.mubr.f32.mxu0 %v5434
        %v5436 = vand.u32 %v278, 4294901760
        %v5437 = vsub.f32 %v278, %v5436
        %v5438 = vand.u32 %v5437, 4294901760
        %5439 = vmatmul.mubr.f32.gmra.mrb[0].mxu0 %v5438
        %v5440 = vpop.f32.mrb[0].mxu0
        %v5441 = vadd.f32 %v5145, %v5440
        %v5442 = vpop.f32.mrb[0].mxu0
        %v5443 = vand.u32 %v285, 4294901760
        %v5444 = vsub.f32 %v285, %v5443
        %v5445 = vand.u32 %v5444, 4294901760
        %5446 = vmatprep.mubr.f32.mxu0 %v5445
        %v5447 = vand.u32 %v284, 4294901760
        %v5448 = vsub.f32 %v284, %v5447
        %v5449 = vand.u32 %v5448, 4294901760
        %5450 = vmatmul.mubr.f32.gmra.mrb[0].mxu0 %v5449
        %v5451 = vpop.f32.mrb[0].mxu0
        %v5452 = vadd.f32 %v5154, %v5451
        %v5453 = vpop.f32.mrb[0].mxu0
        %v5454 = vand.u32 %v291, 4294901760
        %v5455 = vsub.f32 %v291, %v5454
        %v5456 = vand.u32 %v5455, 4294901760
        %5457 = vmatprep.mubr.f32.mxu0 %v5456
        %v5458 = vand.u32 %v290, 4294901760
        %v5459 = vsub.f32 %v290, %v5458
        %v5460 = vand.u32 %v5459, 4294901760
        %5461 = vmatmul.mubr.f32.gmra.mrb[0].mxu0 %v5460
        %v5462 = vpop.f32.mrb[0].mxu0
        %v5463 = vadd.f32 %v5163, %v5462
        %v5464 = vpop.f32.mrb[0].mxu0
        %v5465 = vand.u32 %v297, 4294901760
        %v5466 = vsub.f32 %v297, %v5465
        %v5467 = vand.u32 %v5466, 4294901760
        %5468 = vmatprep.mubr.f32.mxu0 %v5467
        %v5469 = vand.u32 %v296, 4294901760
        %v5470 = vsub.f32 %v296, %v5469
        %v5471 = vand.u32 %v5470, 4294901760
        %5472 = vmatmul.mubr.f32.gmra.mrb[0].mxu0 %v5471
        %v5473 = vpop.f32.mrb[0].mxu0
        %v5474 = vadd.f32 %v5172, %v5473
        %v5475 = vpop.f32.mrb[0].mxu0
        %v5476 = vand.u32 %v303, 4294901760
        %v5477 = vsub.f32 %v303, %v5476
        %v5478 = vand.u32 %v5477, 4294901760
        %5479 = vmatprep.mubr.f32.mxu0 %v5478
        %v5480 = vand.u32 %v302, 4294901760
        %v5481 = vsub.f32 %v302, %v5480
        %v5482 = vand.u32 %v5481, 4294901760
        %5483 = vmatmul.mubr.f32.gmra.mrb[0].mxu0 %v5482
        %v5484 = vpop.f32.mrb[0].mxu0
        %v5485 = vadd.f32 %v5181, %v5484
        %v5486 = vpop.f32.mrb[0].mxu0
        %v5487 = vand.u32 %v309, 4294901760
        %v5488 = vsub.f32 %v309, %v5487
        %v5489 = vand.u32 %v5488, 4294901760
        %5490 = vmatprep.mubr.f32.mxu0 %v5489
        %v5491 = vand.u32 %v308, 4294901760
        %v5492 = vsub.f32 %v308, %v5491
        %v5493 = vand.u32 %v5492, 4294901760
        %5494 = vmatmul.mubr.f32.gmra.mrb[0].mxu0 %v5493
        %v5495 = vpop.f32.mrb[0].mxu0
        %v5496 = vadd.f32 %v5190, %v5495
        %v5497 = vpop.f32.mrb[0].mxu0
        %5498 = vdwg.mxu0
        %5499 = vmatprep.subr.mxu0 0.0
        %v5500 = vand.u32 %v374, 4294901760
        %v5501 = vsub.f32 %v374, %v5500
        %v5502 = vand.u32 %v5501, 4294901760
        %5503 = vmatpush1.msra.mxu0 %v5502
        %5504 = vmatprep.subr.mxu0 0.0
        %v5505 = vand.u32 %v375, 4294901760
        %v5506 = vsub.f32 %v375, %v5505
        %v5507 = vand.u32 %v5506, 4294901760
        %5508 = vmatpush1.msra.mxu0 %v5507
        %5509 = vmatprep.subr.mxu0 0.0
        %v5510 = vand.u32 %v376, 4294901760
        %v5511 = vsub.f32 %v376, %v5510
        %v5512 = vand.u32 %v5511, 4294901760
        %5513 = vmatpush1.msra.mxu0 %v5512
        %5514 = vmatprep.subr.mxu0 0.0
        %v5515 = vand.u32 %v377, 4294901760
        %v5516 = vsub.f32 %v377, %v5515
        %v5517 = vand.u32 %v5516, 4294901760
        %5518 = vmatpush1.msra.mxu0 %v5517
        %5519 = vmatprep.subr.mxu0 0.0
        %v5520 = vand.u32 %v378, 4294901760
        %v5521 = vsub.f32 %v378, %v5520
        %v5522 = vand.u32 %v5521, 4294901760
        %5523 = vmatpush1.msra.mxu0 %v5522
        %5524 = vmatprep.subr.mxu0 0.0
        %v5525 = vand.u32 %v379, 4294901760
        %v5526 = vsub.f32 %v379, %v5525
        %v5527 = vand.u32 %v5526, 4294901760
        %5528 = vmatpush1.msra.mxu0 %v5527
        %5529 = vmatprep.subr.mxu0 0.0
        %v5530 = vand.u32 %v380, 4294901760
        %v5531 = vsub.f32 %v380, %v5530
        %v5532 = vand.u32 %v5531, 4294901760
        %5533 = vmatpush1.msra.mxu0 %v5532
        %5534 = vmatprep.subr.mxu0 0.0
        %v5535 = vand.u32 %v381, 4294901760
        %v5536 = vsub.f32 %v381, %v5535
        %v5537 = vand.u32 %v5536, 4294901760
        %5538 = vmatpush1.msra.mxu0 %v5537
        %5539 = vmatprep.subr.mxu0 0.0
        %v5540 = vand.u32 %v382, 4294901760
        %v5541 = vsub.f32 %v382, %v5540
        %v5542 = vand.u32 %v5541, 4294901760
        %5543 = vmatpush1.msra.mxu0 %v5542
        %5544 = vmatprep.subr.mxu0 0.0
        %v5545 = vand.u32 %v383, 4294901760
        %v5546 = vsub.f32 %v383, %v5545
        %v5547 = vand.u32 %v5546, 4294901760
        %5548 = vmatpush1.msra.mxu0 %v5547
        %5549 = vmatprep.subr.mxu0 0.0
        %v5550 = vand.u32 %v384, 4294901760
        %v5551 = vsub.f32 %v384, %v5550
        %v5552 = vand.u32 %v5551, 4294901760
        %5553 = vmatpush1.msra.mxu0 %v5552
        %5554 = vmatprep.subr.mxu0 0.0
        %v5555 = vand.u32 %v385, 4294901760
        %v5556 = vsub.f32 %v385, %v5555
        %v5557 = vand.u32 %v5556, 4294901760
        %5558 = vmatpush1.msra.mxu0 %v5557
        %5559 = vmatprep.subr.mxu0 0.0
        %v5560 = vand.u32 %v386, 4294901760
        %v5561 = vsub.f32 %v386, %v5560
        %v5562 = vand.u32 %v5561, 4294901760
        %5563 = vmatpush1.msra.mxu0 %v5562
        %5564 = vmatprep.subr.mxu0 0.0
        %v5565 = vand.u32 %v387, 4294901760
        %v5566 = vsub.f32 %v387, %v5565
        %v5567 = vand.u32 %v5566, 4294901760
        %5568 = vmatpush1.msra.mxu0 %v5567
        %5569 = vmatprep.subr.mxu0 0.0
        %v5570 = vand.u32 %v388, 4294901760
        %v5571 = vsub.f32 %v388, %v5570
        %v5572 = vand.u32 %v5571, 4294901760
        %5573 = vmatpush1.msra.mxu0 %v5572
        %5574 = vmatprep.subr.mxu0 0.0
        %v5575 = vand.u32 %v389, 4294901760
        %v5576 = vsub.f32 %v389, %v5575
        %v5577 = vand.u32 %v5576, 4294901760
        %5578 = vmatpush1.msra.mxu0 %v5577
        %5579 = vmatprep.subr.mxu0 0.0
        %v5580 = vand.u32 %v390, 4294901760
        %v5581 = vsub.f32 %v390, %v5580
        %v5582 = vand.u32 %v5581, 4294901760
        %5583 = vmatpush1.msra.mxu0 %v5582
        %5584 = vmatprep.subr.mxu0 0.0
        %v5585 = vand.u32 %v391, 4294901760
        %v5586 = vsub.f32 %v391, %v5585
        %v5587 = vand.u32 %v5586, 4294901760
        %5588 = vmatpush1.msra.mxu0 %v5587
        %5589 = vmatprep.subr.mxu0 0.0
        %v5590 = vand.u32 %v392, 4294901760
        %v5591 = vsub.f32 %v392, %v5590
        %v5592 = vand.u32 %v5591, 4294901760
        %5593 = vmatpush1.msra.mxu0 %v5592
        %5594 = vmatprep.subr.mxu0 0.0
        %v5595 = vand.u32 %v393, 4294901760
        %v5596 = vsub.f32 %v393, %v5595
        %v5597 = vand.u32 %v5596, 4294901760
        %5598 = vmatpush1.msra.mxu0 %v5597
        %5599 = vmatprep.subr.mxu0 0.0
        %v5600 = vand.u32 %v394, 4294901760
        %v5601 = vsub.f32 %v394, %v5600
        %v5602 = vand.u32 %v5601, 4294901760
        %5603 = vmatpush1.msra.mxu0 %v5602
        %5604 = vmatprep.subr.mxu0 0.0
        %v5605 = vand.u32 %v395, 4294901760
        %v5606 = vsub.f32 %v395, %v5605
        %v5607 = vand.u32 %v5606, 4294901760
        %5608 = vmatpush1.msra.mxu0 %v5607
        %5609 = vmatprep.subr.mxu0 0.0
        %v5610 = vand.u32 %v396, 4294901760
        %v5611 = vsub.f32 %v396, %v5610
        %v5612 = vand.u32 %v5611, 4294901760
        %5613 = vmatpush1.msra.mxu0 %v5612
        %5614 = vmatprep.subr.mxu0 0.0
        %v5615 = vand.u32 %v397, 4294901760
        %v5616 = vsub.f32 %v397, %v5615
        %v5617 = vand.u32 %v5616, 4294901760
        %5618 = vmatpush1.msra.mxu0 %v5617
        %5619 = vmatprep.subr.mxu0 0.0
        %v5620 = vand.u32 %v398, 4294901760
        %v5621 = vsub.f32 %v398, %v5620
        %v5622 = vand.u32 %v5621, 4294901760
        %5623 = vmatpush1.msra.mxu0 %v5622
        %5624 = vmatprep.subr.mxu0 0.0
        %v5625 = vand.u32 %v399, 4294901760
        %v5626 = vsub.f32 %v399, %v5625
        %v5627 = vand.u32 %v5626, 4294901760
        %5628 = vmatpush1.msra.mxu0 %v5627
        %5629 = vmatprep.subr.mxu0 0.0
        %v5630 = vand.u32 %v400, 4294901760
        %v5631 = vsub.f32 %v400, %v5630
        %v5632 = vand.u32 %v5631, 4294901760
        %5633 = vmatpush1.msra.mxu0 %v5632
        %5634 = vmatprep.subr.mxu0 0.0
        %v5635 = vand.u32 %v401, 4294901760
        %v5636 = vsub.f32 %v401, %v5635
        %v5637 = vand.u32 %v5636, 4294901760
        %5638 = vmatpush1.msra.mxu0 %v5637
        %5639 = vmatprep.subr.mxu0 0.0
        %v5640 = vand.u32 %v402, 4294901760
        %v5641 = vsub.f32 %v402, %v5640
        %v5642 = vand.u32 %v5641, 4294901760
        %5643 = vmatpush1.msra.mxu0 %v5642
        %5644 = vmatprep.subr.mxu0 0.0
        %v5645 = vand.u32 %v403, 4294901760
        %v5646 = vsub.f32 %v403, %v5645
        %v5647 = vand.u32 %v5646, 4294901760
        %5648 = vmatpush1.msra.mxu0 %v5647
        %5649 = vmatprep.subr.mxu0 0.0
        %v5650 = vand.u32 %v404, 4294901760
        %v5651 = vsub.f32 %v404, %v5650
        %v5652 = vand.u32 %v5651, 4294901760
        %5653 = vmatpush1.msra.mxu0 %v5652
        %5654 = vmatprep.subr.mxu0 0.0
        %v5655 = vand.u32 %v405, 4294901760
        %v5656 = vsub.f32 %v405, %v5655
        %v5657 = vand.u32 %v5656, 4294901760
        %5658 = vmatpush1.msra.mxu0 %v5657
        %v5659 = vand.u32 %v201, 4294901760
        %5660 = vmatprep.mubr.f32.mxu0 %v5659
        %v5661 = vand.u32 %v200, 4294901760
        %5662 = vmatmul.mubr.f32.gmra.mrb[0].mxu0 %v5661
        %v5663 = vpop.f32.mrb[0].mxu0
        %v5664 = vadd.f32 %v5298, %v5663
        %v5665 = vpop.f32.mrb[0].mxu0
        %v5666 = vand.u32 %v207, 4294901760
        %5667 = vmatprep.mubr.f32.mxu0 %v5666
        %v5668 = vand.u32 %v206, 4294901760
        %5669 = vmatmul.mubr.f32.gmra.mrb[0].mxu0 %v5668
        %v5670 = vpop.f32.mrb[0].mxu0
        %v5671 = vadd.f32 %v5309, %v5670
        %v5672 = vpop.f32.mrb[0].mxu0
        %v5673 = vand.u32 %v213, 4294901760
        %5674 = vmatprep.mubr.f32.mxu0 %v5673
        %v5675 = vand.u32 %v212, 4294901760
        %5676 = vmatmul.mubr.f32.gmra.mrb[0].mxu0 %v5675
        %v5677 = vpop.f32.mrb[0].mxu0
        %v5678 = vadd.f32 %v5320, %v5677
        %v5679 = vpop.f32.mrb[0].mxu0
        %v5680 = vand.u32 %v219, 4294901760
        %5681 = vmatprep.mubr.f32.mxu0 %v5680
        %v5682 = vand.u32 %v218, 4294901760
        %5683 = vmatmul.mubr.f32.gmra.mrb[0].mxu0 %v5682
        %v5684 = vpop.f32.mrb[0].mxu0
        %v5685 = vadd.f32 %v5331, %v5684
        %v5686 = vpop.f32.mrb[0].mxu0
        %v5687 = vand.u32 %v225, 4294901760
        %5688 = vmatprep.mubr.f32.mxu0 %v5687
        %v5689 = vand.u32 %v224, 4294901760
        %5690 = vmatmul.mubr.f32.gmra.mrb[0].mxu0 %v5689
        %v5691 = vpop.f32.mrb[0].mxu0
        %v5692 = vadd.f32 %v5342, %v5691
        %v5693 = vpop.f32.mrb[0].mxu0
        %v5694 = vand.u32 %v231, 4294901760
        %5695 = vmatprep.mubr.f32.mxu0 %v5694
        %v5696 = vand.u32 %v230, 4294901760
        %5697 = vmatmul.mubr.f32.gmra.mrb[0].mxu0 %v5696
        %v5698 = vpop.f32.mrb[0].mxu0
        %v5699 = vadd.f32 %v5353, %v5698
        %v5700 = vpop.f32.mrb[0].mxu0
        %v5701 = vand.u32 %v237, 4294901760
        %5702 = vmatprep.mubr.f32.mxu0 %v5701
        %v5703 = vand.u32 %v236, 4294901760
        %5704 = vmatmul.mubr.f32.gmra.mrb[0].mxu0 %v5703
        %v5705 = vpop.f32.mrb[0].mxu0
        %v5706 = vadd.f32 %v5364, %v5705
        %v5707 = vpop.f32.mrb[0].mxu0
        %v5708 = vand.u32 %v243, 4294901760
        %5709 = vmatprep.mubr.f32.mxu0 %v5708
        %v5710 = vand.u32 %v242, 4294901760
        %5711 = vmatmul.mubr.f32.gmra.mrb[0].mxu0 %v5710
        %v5712 = vpop.f32.mrb[0].mxu0
        %v5713 = vadd.f32 %v5375, %v5712
        %v5714 = vpop.f32.mrb[0].mxu0
        %v5715 = vand.u32 %v249, 4294901760
        %5716 = vmatprep.mubr.f32.mxu0 %v5715
        %v5717 = vand.u32 %v248, 4294901760
        %5718 = vmatmul.mubr.f32.gmra.mrb[0].mxu0 %v5717
        %v5719 = vpop.f32.mrb[0].mxu0
        %v5720 = vadd.f32 %v5386, %v5719
        %v5721 = vpop.f32.mrb[0].mxu0
        %v5722 = vand.u32 %v255, 4294901760
        %5723 = vmatprep.mubr.f32.mxu0 %v5722
        %v5724 = vand.u32 %v254, 4294901760
        %5725 = vmatmul.mubr.f32.gmra.mrb[0].mxu0 %v5724
        %v5726 = vpop.f32.mrb[0].mxu0
        %v5727 = vadd.f32 %v5397, %v5726
        %v5728 = vpop.f32.mrb[0].mxu0
        %v5729 = vand.u32 %v261, 4294901760
        %5730 = vmatprep.mubr.f32.mxu0 %v5729
        %v5731 = vand.u32 %v260, 4294901760
        %5732 = vmatmul.mubr.f32.gmra.mrb[0].mxu0 %v5731
        %v5733 = vpop.f32.mrb[0].mxu0
        %v5734 = vadd.f32 %v5408, %v5733
        %v5735 = vpop.f32.mrb[0].mxu0
        %v5736 = vand.u32 %v267, 4294901760
        %5737 = vmatprep.mubr.f32.mxu0 %v5736
        %v5738 = vand.u32 %v266, 4294901760
        %5739 = vmatmul.mubr.f32.gmra.mrb[0].mxu0 %v5738
        %v5740 = vpop.f32.mrb[0].mxu0
        %v5741 = vadd.f32 %v5419, %v5740
        %v5742 = vpop.f32.mrb[0].mxu0
        %v5743 = vand.u32 %v273, 4294901760
        %5744 = vmatprep.mubr.f32.mxu0 %v5743
        %v5745 = vand.u32 %v272, 4294901760
        %5746 = vmatmul.mubr.f32.gmra.mrb[0].mxu0 %v5745
        %v5747 = vpop.f32.mrb[0].mxu0
        %v5748 = vadd.f32 %v5430, %v5747
        %v5749 = vpop.f32.mrb[0].mxu0
        %v5750 = vand.u32 %v279, 4294901760
        %5751 = vmatprep.mubr.f32.mxu0 %v5750
        %v5752 = vand.u32 %v278, 4294901760
        %5753 = vmatmul.mubr.f32.gmra.mrb[0].mxu0 %v5752
        %v5754 = vpop.f32.mrb[0].mxu0
        %v5755 = vadd.f32 %v5441, %v5754
        %v5756 = vpop.f32.mrb[0].mxu0
        %v5757 = vand.u32 %v285, 4294901760
        %5758 = vmatprep.mubr.f32.mxu0 %v5757
        %v5759 = vand.u32 %v284, 4294901760
        %5760 = vmatmul.mubr.f32.gmra.mrb[0].mxu0 %v5759
        %v5761 = vpop.f32.mrb[0].mxu0
        %v5762 = vadd.f32 %v5452, %v5761
        %v5763 = vpop.f32.mrb[0].mxu0
        %v5764 = vand.u32 %v291, 4294901760
        %5765 = vmatprep.mubr.f32.mxu0 %v5764
        %v5766 = vand.u32 %v290, 4294901760
        %5767 = vmatmul.mubr.f32.gmra.mrb[0].mxu0 %v5766
        %v5768 = vpop.f32.mrb[0].mxu0
        %v5769 = vadd.f32 %v5463, %v5768
        %v5770 = vpop.f32.mrb[0].mxu0
        %v5771 = vand.u32 %v297, 4294901760
        %5772 = vmatprep.mubr.f32.mxu0 %v5771
        %v5773 = vand.u32 %v296, 4294901760
        %5774 = vmatmul.mubr.f32.gmra.mrb[0].mxu0 %v5773
        %v5775 = vpop.f32.mrb[0].mxu0
        %v5776 = vadd.f32 %v5474, %v5775
        %v5777 = vpop.f32.mrb[0].mxu0
        %v5778 = vand.u32 %v303, 4294901760
        %5779 = vmatprep.mubr.f32.mxu0 %v5778
        %v5780 = vand.u32 %v302, 4294901760
        %5781 = vmatmul.mubr.f32.gmra.mrb[0].mxu0 %v5780
        %v5782 = vpop.f32.mrb[0].mxu0
        %v5783 = vadd.f32 %v5485, %v5782
        %v5784 = vpop.f32.mrb[0].mxu0
        %v5785 = vand.u32 %v309, 4294901760
        %5786 = vmatprep.mubr.f32.mxu0 %v5785
        %v5787 = vand.u32 %v308, 4294901760
        %5788 = vmatmul.mubr.f32.gmra.mrb[0].mxu0 %v5787
        %v5789 = vpop.f32.mrb[0].mxu0
        %v5790 = vadd.f32 %v5496, %v5789
        %v5791 = vpop.f32.mrb[0].mxu0
        %5792 = vdwg.mxu0
        %5793 = vmatprep.subr.mxu0 0.0
        %v5794 = vand.u32 %v374, 4294901760
        %5795 = vmatpush1.msra.mxu0 %v5794
        %5796 = vmatprep.subr.mxu0 0.0
        %v5797 = vand.u32 %v375, 4294901760
        %5798 = vmatpush1.msra.mxu0 %v5797
        %5799 = vmatprep.subr.mxu0 0.0
        %v5800 = vand.u32 %v376, 4294901760
        %5801 = vmatpush1.msra.mxu0 %v5800
        %5802 = vmatprep.subr.mxu0 0.0
        %v5803 = vand.u32 %v377, 4294901760
        %5804 = vmatpush1.msra.mxu0 %v5803
        %5805 = vmatprep.subr.mxu0 0.0
        %v5806 = vand.u32 %v378, 4294901760
        %5807 = vmatpush1.msra.mxu0 %v5806
        %5808 = vmatprep.subr.mxu0 0.0
        %v5809 = vand.u32 %v379, 4294901760
        %5810 = vmatpush1.msra.mxu0 %v5809
        %5811 = vmatprep.subr.mxu0 0.0
        %v5812 = vand.u32 %v380, 4294901760
        %5813 = vmatpush1.msra.mxu0 %v5812
        %5814 = vmatprep.subr.mxu0 0.0
        %v5815 = vand.u32 %v381, 4294901760
        %5816 = vmatpush1.msra.mxu0 %v5815
        %5817 = vmatprep.subr.mxu0 0.0
        %v5818 = vand.u32 %v382, 4294901760
        %5819 = vmatpush1.msra.mxu0 %v5818
        %5820 = vmatprep.subr.mxu0 0.0
        %v5821 = vand.u32 %v383, 4294901760
        %5822 = vmatpush1.msra.mxu0 %v5821
        %5823 = vmatprep.subr.mxu0 0.0
        %v5824 = vand.u32 %v384, 4294901760
        %5825 = vmatpush1.msra.mxu0 %v5824
        %5826 = vmatprep.subr.mxu0 0.0
        %v5827 = vand.u32 %v385, 4294901760
        %5828 = vmatpush1.msra.mxu0 %v5827
        %5829 = vmatprep.subr.mxu0 0.0
        %v5830 = vand.u32 %v386, 4294901760
        %5831 = vmatpush1.msra.mxu0 %v5830
        %5832 = vmatprep.subr.mxu0 0.0
        %v5833 = vand.u32 %v387, 4294901760
        %5834 = vmatpush1.msra.mxu0 %v5833
        %5835 = vmatprep.subr.mxu0 0.0
        %v5836 = vand.u32 %v388, 4294901760
        %5837 = vmatpush1.msra.mxu0 %v5836
        %5838 = vmatprep.subr.mxu0 0.0
        %v5839 = vand.u32 %v389, 4294901760
        %5840 = vmatpush1.msra.mxu0 %v5839
        %5841 = vmatprep.subr.mxu0 0.0
        %v5842 = vand.u32 %v390, 4294901760
        %5843 = vmatpush1.msra.mxu0 %v5842
        %5844 = vmatprep.subr.mxu0 0.0
        %v5845 = vand.u32 %v391, 4294901760
        %5846 = vmatpush1.msra.mxu0 %v5845
        %5847 = vmatprep.subr.mxu0 0.0
        %v5848 = vand.u32 %v392, 4294901760
        %5849 = vmatpush1.msra.mxu0 %v5848
        %5850 = vmatprep.subr.mxu0 0.0
        %v5851 = vand.u32 %v393, 4294901760
        %5852 = vmatpush1.msra.mxu0 %v5851
        %5853 = vmatprep.subr.mxu0 0.0
        %v5854 = vand.u32 %v394, 4294901760
        %5855 = vmatpush1.msra.mxu0 %v5854
        %5856 = vmatprep.subr.mxu0 0.0
        %v5857 = vand.u32 %v395, 4294901760
        %5858 = vmatpush1.msra.mxu0 %v5857
        %5859 = vmatprep.subr.mxu0 0.0
        %v5860 = vand.u32 %v396, 4294901760
        %5861 = vmatpush1.msra.mxu0 %v5860
        %5862 = vmatprep.subr.mxu0 0.0
        %v5863 = vand.u32 %v397, 4294901760
        %5864 = vmatpush1.msra.mxu0 %v5863
        %5865 = vmatprep.subr.mxu0 0.0
        %v5866 = vand.u32 %v398, 4294901760
        %5867 = vmatpush1.msra.mxu0 %v5866
        %5868 = vmatprep.subr.mxu0 0.0
        %v5869 = vand.u32 %v399, 4294901760
        %5870 = vmatpush1.msra.mxu0 %v5869
        %5871 = vmatprep.subr.mxu0 0.0
        %v5872 = vand.u32 %v400, 4294901760
        %5873 = vmatpush1.msra.mxu0 %v5872
        %5874 = vmatprep.subr.mxu0 0.0
        %v5875 = vand.u32 %v401, 4294901760
        %5876 = vmatpush1.msra.mxu0 %v5875
        %5877 = vmatprep.subr.mxu0 0.0
        %v5878 = vand.u32 %v402, 4294901760
        %5879 = vmatpush1.msra.mxu0 %v5878
        %5880 = vmatprep.subr.mxu0 0.0
        %v5881 = vand.u32 %v403, 4294901760
        %5882 = vmatpush1.msra.mxu0 %v5881
        %5883 = vmatprep.subr.mxu0 0.0
        %v5884 = vand.u32 %v404, 4294901760
        %5885 = vmatpush1.msra.mxu0 %v5884
        %5886 = vmatprep.subr.mxu0 0.0
        %v5887 = vand.u32 %v405, 4294901760
        %5888 = vmatpush1.msra.mxu0 %v5887
        %v5889 = vand.u32 %v201, 4294901760
        %5890 = vmatprep.mubr.f32.mxu0 %v5889
        %v5891 = vand.u32 %v200, 4294901760
        %5892 = vmatmul.mubr.f32.gmra.mrb[0].mxu0 %v5891
        %v5893 = vpop.f32.mrb[0].mxu0
        %v5894 = vadd.f32 %v5664, %v5893
        %v5895 = vpop.f32.mrb[0].mxu0
        %v5896 = vand.u32 %v207, 4294901760
        %5897 = vmatprep.mubr.f32.mxu0 %v5896
        %v5898 = vand.u32 %v206, 4294901760
        %5899 = vmatmul.mubr.f32.gmra.mrb[0].mxu0 %v5898
        %v5900 = vpop.f32.mrb[0].mxu0
        %v5901 = vadd.f32 %v5671, %v5900
        %v5902 = vpop.f32.mrb[0].mxu0
        %v5903 = vand.u32 %v213, 4294901760
        %5904 = vmatprep.mubr.f32.mxu0 %v5903
        %v5905 = vand.u32 %v212, 4294901760
        %5906 = vmatmul.mubr.f32.gmra.mrb[0].mxu0 %v5905
        %v5907 = vpop.f32.mrb[0].mxu0
        %v5908 = vadd.f32 %v5678, %v5907
        %v5909 = vpop.f32.mrb[0].mxu0
        %v5910 = vand.u32 %v219, 4294901760
        %5911 = vmatprep.mubr.f32.mxu0 %v5910
        %v5912 = vand.u32 %v218, 4294901760
        %5913 = vmatmul.mubr.f32.gmra.mrb[0].mxu0 %v5912
        %v5914 = vpop.f32.mrb[0].mxu0
        %v5915 = vadd.f32 %v5685, %v5914
        %v5916 = vpop.f32.mrb[0].mxu0
        %v5917 = vand.u32 %v225, 4294901760
        %5918 = vmatprep.mubr.f32.mxu0 %v5917
        %v5919 = vand.u32 %v224, 4294901760
        %5920 = vmatmul.mubr.f32.gmra.mrb[0].mxu0 %v5919
        %v5921 = vpop.f32.mrb[0].mxu0
        %v5922 = vadd.f32 %v5692, %v5921
        %v5923 = vpop.f32.mrb[0].mxu0
        %v5924 = vand.u32 %v231, 4294901760
        %5925 = vmatprep.mubr.f32.mxu0 %v5924
        %v5926 = vand.u32 %v230, 4294901760
        %5927 = vmatmul.mubr.f32.gmra.mrb[0].mxu0 %v5926
        %v5928 = vpop.f32.mrb[0].mxu0
        %v5929 = vadd.f32 %v5699, %v5928
        %v5930 = vpop.f32.mrb[0].mxu0
        %v5931 = vand.u32 %v237, 4294901760
        %5932 = vmatprep.mubr.f32.mxu0 %v5931
        %v5933 = vand.u32 %v236, 4294901760
        %5934 = vmatmul.mubr.f32.gmra.mrb[0].mxu0 %v5933
        %v5935 = vpop.f32.mrb[0].mxu0
        %v5936 = vadd.f32 %v5706, %v5935
        %v5937 = vpop.f32.mrb[0].mxu0
        %v5938 = vand.u32 %v243, 4294901760
        %5939 = vmatprep.mubr.f32.mxu0 %v5938
        %v5940 = vand.u32 %v242, 4294901760
        %5941 = vmatmul.mubr.f32.gmra.mrb[0].mxu0 %v5940
        %v5942 = vpop.f32.mrb[0].mxu0
        %v5943 = vadd.f32 %v5713, %v5942
        %v5944 = vpop.f32.mrb[0].mxu0
        %v5945 = vand.u32 %v249, 4294901760
        %5946 = vmatprep.mubr.f32.mxu0 %v5945
        %v5947 = vand.u32 %v248, 4294901760
        %5948 = vmatmul.mubr.f32.gmra.mrb[0].mxu0 %v5947
        %v5949 = vpop.f32.mrb[0].mxu0
        %v5950 = vadd.f32 %v5720, %v5949
        %v5951 = vpop.f32.mrb[0].mxu0
        %v5952 = vand.u32 %v255, 4294901760
        %5953 = vmatprep.mubr.f32.mxu0 %v5952
        %v5954 = vand.u32 %v254, 4294901760
        %5955 = vmatmul.mubr.f32.gmra.mrb[0].mxu0 %v5954
        %v5956 = vpop.f32.mrb[0].mxu0
        %v5957 = vadd.f32 %v5727, %v5956
        %v5958 = vpop.f32.mrb[0].mxu0
        %v5959 = vand.u32 %v261, 4294901760
        %5960 = vmatprep.mubr.f32.mxu0 %v5959
        %v5961 = vand.u32 %v260, 4294901760
        %5962 = vmatmul.mubr.f32.gmra.mrb[0].mxu0 %v5961
        %v5963 = vpop.f32.mrb[0].mxu0
        %v5964 = vadd.f32 %v5734, %v5963
        %v5965 = vpop.f32.mrb[0].mxu0
        %v5966 = vand.u32 %v267, 4294901760
        %5967 = vmatprep.mubr.f32.mxu0 %v5966
        %v5968 = vand.u32 %v266, 4294901760
        %5969 = vmatmul.mubr.f32.gmra.mrb[0].mxu0 %v5968
        %v5970 = vpop.f32.mrb[0].mxu0
        %v5971 = vadd.f32 %v5741, %v5970
        %v5972 = vpop.f32.mrb[0].mxu0
        %v5973 = vand.u32 %v273, 4294901760
        %5974 = vmatprep.mubr.f32.mxu0 %v5973
        %v5975 = vand.u32 %v272, 4294901760
        %5976 = vmatmul.mubr.f32.gmra.mrb[0].mxu0 %v5975
        %v5977 = vpop.f32.mrb[0].mxu0
        %v5978 = vadd.f32 %v5748, %v5977
        %v5979 = vpop.f32.mrb[0].mxu0
        %v5980 = vand.u32 %v279, 4294901760
        %5981 = vmatprep.mubr.f32.mxu0 %v5980
        %v5982 = vand.u32 %v278, 4294901760
        %5983 = vmatmul.mubr.f32.gmra.mrb[0].mxu0 %v5982
        %v5984 = vpop.f32.mrb[0].mxu0
        %v5985 = vadd.f32 %v5755, %v5984
        %v5986 = vpop.f32.mrb[0].mxu0
        %v5987 = vand.u32 %v285, 4294901760
        %5988 = vmatprep.mubr.f32.mxu0 %v5987
        %v5989 = vand.u32 %v284, 4294901760
        %5990 = vmatmul.mubr.f32.gmra.mrb[0].mxu0 %v5989
        %v5991 = vpop.f32.mrb[0].mxu0
        %v5992 = vadd.f32 %v5762, %v5991
        %v5993 = vpop.f32.mrb[0].mxu0
        %v5994 = vand.u32 %v291, 4294901760
        %5995 = vmatprep.mubr.f32.mxu0 %v5994
        %v5996 = vand.u32 %v290, 4294901760
        %5997 = vmatmul.mubr.f32.gmra.mrb[0].mxu0 %v5996
        %v5998 = vpop.f32.mrb[0].mxu0
        %v5999 = vadd.f32 %v5769, %v5998
        %v6000 = vpop.f32.mrb[0].mxu0
        %v6001 = vand.u32 %v297, 4294901760
        %6002 = vmatprep.mubr.f32.mxu0 %v6001
        %v6003 = vand.u32 %v296, 4294901760
        %6004 = vmatmul.mubr.f32.gmra.mrb[0].mxu0 %v6003
        %v6005 = vpop.f32.mrb[0].mxu0
        %v6006 = vadd.f32 %v5776, %v6005
        %v6007 = vpop.f32.mrb[0].mxu0
        %v6008 = vand.u32 %v303, 4294901760
        %6009 = vmatprep.mubr.f32.mxu0 %v6008
        %v6010 = vand.u32 %v302, 4294901760
        %6011 = vmatmul.mubr.f32.gmra.mrb[0].mxu0 %v6010
        %v6012 = vpop.f32.mrb[0].mxu0
        %v6013 = vadd.f32 %v5783, %v6012
        %v6014 = vpop.f32.mrb[0].mxu0
        %v6015 = vand.u32 %v309, 4294901760
        %6016 = vmatprep.mubr.f32.mxu0 %v6015
        %v6017 = vand.u32 %v308, 4294901760
        %6018 = vmatmul.mubr.f32.gmra.mrb[0].mxu0 %v6017
        %v6019 = vpop.f32.mrb[0].mxu0
        %v6020 = vadd.f32 %v5790, %v6019
        %v6021 = vpop.f32.mrb[0].mxu0
        %6022 = vdwg.mxu0
        %vm6023 = vcmask 7168
        %6024 = vst.msk [vmem:[%s194] sm:$0xff] %vm6023, %v5894
        %6025 = vst.msk [vmem:[%s194 + $0x8] sm:$0xff] %vm6023, %v5901
        %6026 = vst.msk [vmem:[%s194 + $0x10] sm:$0xff] %vm6023, %v5908
        %6027 = vst.msk [vmem:[%s194 + $0x18] sm:$0xff] %vm6023, %v5915
        %6028 = vst.msk [vmem:[%s194 + $0x20] sm:$0xff] %vm6023, %v5922
        %6029 = vst.msk [vmem:[%s194 + $0x28] sm:$0xff] %vm6023, %v5929
        %6030 = vst.msk [vmem:[%s194 + $0x30] sm:$0xff] %vm6023, %v5936
        %6031 = vst.msk [vmem:[%s194 + $0x38] sm:$0xff] %vm6023, %v5943
        %6032 = vst.msk [vmem:[%s194 + $0x40] sm:$0xff] %vm6023, %v5950
        %6033 = vst.msk [vmem:[%s194 + $0x48] sm:$0xff] %vm6023, %v5957
        %6034 = vst.msk [vmem:[%s194 + $0x50] sm:$0xff] %vm6023, %v5964
        %6035 = vst.msk [vmem:[%s194 + $0x58] sm:$0xff] %vm6023, %v5971
        %6036 = vst.msk [vmem:[%s194 + $0x60] sm:$0xff] %vm6023, %v5978
        %6037 = vst.msk [vmem:[%s194 + $0x68] sm:$0xff] %vm6023, %v5985
        %6038 = vst.msk [vmem:[%s194 + $0x70] sm:$0xff] %vm6023, %v5992
        %6039 = vst.msk [vmem:[%s194 + $0x78] sm:$0xff] %vm6023, %v5999
        %6040 = vst.msk [vmem:[%s194 + $0x80] sm:$0xff] %vm6023, %v6006
        %6041 = vst.msk [vmem:[%s194 + $0x88] sm:$0xff] %vm6023, %v6013
        %6042 = vst.msk [vmem:[%s194 + $0x90] sm:$0xff] %vm6023, %v6020
        %s6043 = smul.u32 19, %s19
        %p6044 = scmp.lt.s32.totalorder %s6043, 37
        %s6045 = scalar_select %p6044, %s6043, 37
        %s6046 = smul.addr %s6045, 8
        %s6047 = scalar_lea.vmem %s3, %s6046
        // Predicated region
        $region37: #{tpu_custom_call.1} parent=31 // pred_check
          %p6048 = pneg %p105
        $region38: #{tpu_custom_call.1} parent=31 // pred_check_branch
          %6050 = sbr.rel (%p6048) target = $region40
        $region39: #{tpu_custom_call.1} parent=31 // pred_region
          %s6051 = smul.u32 19, %s19
        $region40: #{tpu_custom_call.1} parent=31 // pred_fallthru
          _
      $region32: #{tpu_custom_call.1} parent=5 // pred_fallthru
        _
      %p6052 = scmp.le.s32.totalorder 2, %s14
      // Predicated region
      $region41: #{tpu_custom_call.1} parent=5 // pred_check
        %p6053 = pneg %p6052
      $region42: #{tpu_custom_call.1} parent=5 // pred_check_branch
        %6055 = sbr.rel (%p6053) target = $region44
      $region43: #{tpu_custom_call.1} parent=5 // pred_region
        %s6056 = ssub.s32 %s14, 2
        // Predicated region
        $region45: #{tpu_custom_call.1} parent=43 // pred_check
          %p6057 = pneg %p111
        $region46: #{tpu_custom_call.1} parent=43 // pred_check_branch
          %6059 = sbr.rel (%p6057) target = $region48
        $region47: #{tpu_custom_call.1} parent=43 // pred_region
          %s6060 = smul.u32 19, %s20
          %p6061 = scmp.lt.s32.totalorder %s6060, 37
          %s6062 = scalar_select %p6061, %s6060, 37
          %s6063 = smul.addr %s6062, 8
          %s6064 = scalar_lea.vmem %s3, %s6063
        $region48: #{tpu_custom_call.1} parent=43 // pred_fallthru
          _
      $region44: #{tpu_custom_call.1} parent=5 // pred_fallthru
        _
    $region6: #{tpu_custom_call.1} parent=1 // loop_footer
      %s18 = sadd.s32 1, %s14
    $region7: #{tpu_custom_call.1} parent=1 // loop_footer_branch
      %13 = sbr.rel target = $region3
    $region8: #{tpu_custom_call.1} parent=1 // loop_exit
      _
    %6065 = vsyncpa [#allocation4], 1
    %s6066 = scalar_lea.sflag [#allocation4], 1
    %6067 = vsyncpa %s6066, 1

</llo_original>
